<compile_context>
chip_gen: v5e
topology: v5e:2x2
jax: 0.10.0
libtpu: 0.0.40
codegen_flags: <defaults>
</compile_context>

<pallas_src>
import functools

import jax
import jax.numpy as jnp
import numpy as np
from jax import lax
from jax.experimental import pallas as pl
from jax.experimental.pallas import tpu as pltpu


# ----------------------------- Pallas kernel ---------------------------------

def _mm_bias_act_kernel(a_ref, b_ref, bias_ref, o_ref, *, act):
    acc = jnp.dot(a_ref[...], b_ref[...], preferred_element_type=jnp.float32)
    acc = acc + bias_ref[...]                       # (TM, N) + (1, N)
    if act == "relu":
        acc = jnp.maximum(acc, 0.0)
    elif act == "sigmoid":
        acc = jax.nn.sigmoid(acc)
    o_ref[...] = acc.astype(o_ref.dtype)


def matmul_bias_act(a, b, bias, act, tm_max=512):
    """out = act(a @ b + bias);  a:(M,K)  b:(K,N)  bias:(N,).

    bf16 MXU inputs, f32 accumulation.  Rows of A are tiled with a cdiv grid
    (no HBM padding; the ragged last block is masked by Pallas).  K and N stay
    as single full blocks: every layer here has K <= 576 and N <= 576, so each
    operand block is well under 1 MiB of VMEM on all TPU generations.
    """
    M, K = a.shape
    K2, N = b.shape
    assert K == K2
    a_bf = a.astype(jnp.bfloat16)
    b_bf = b.astype(jnp.bfloat16)
    bias2d = bias.reshape(1, N).astype(jnp.float32)

    tm = M if M <= tm_max else tm_max
    grid = (pl.cdiv(M, tm),)

    return pl.pallas_call(
        functools.partial(_mm_bias_act_kernel, act=act),
        out_shape=jax.ShapeDtypeStruct((M, N), jnp.float32),
        grid=grid,
        in_specs=[
            pl.BlockSpec((tm, K), lambda i: (i, 0)),
            pl.BlockSpec((K, N), lambda i: (0, 0)),
            pl.BlockSpec((1, N), lambda i: (0, 0)),
        ],
        out_specs=pl.BlockSpec((tm, N), lambda i: (i, 0)),
        compiler_params=pltpu.CompilerParams(
            dimension_semantics=("parallel",)),
    )(a_bf, b_bf, bias2d)


# ---------------- ConvTranspose2d via sub-pixel / phase decomposition ---------

def _pair(v):
    return (v, v) if isinstance(v, int) else tuple(v)


def conv_transpose_layer(x_nhwc, wt, bias, stride, output_padding, act):
    """ConvTranspose2d (padding=0) with PyTorch weight layout wt:(C_in,C_out,kH,kW).

    Phase decomposition: a stride-1 correlation with (kH//sH)*(kW//sW) taps over
    a lightly padded input produces s_h*s_w*C_out phase channels per output
    site; a pixel shuffle interleaves the phases.  No zero-dilation, no k*k
    im2col, no dead MXU lanes.
    """
    B, H, W, Cin = x_nhwc.shape
    _, Cout, kH, kW = wt.shape
    sh, sw = _pair(stride)
    oph, opw = _pair(output_padding)
    assert kH % sh == 0 and kW % sw == 0, "phase decomposition assumes k % s == 0"
    Mh, Mw = kH // sh, kW // sw

    Ho = (H - 1) * sh + kH + oph
    Wo = (W - 1) * sw + kW + opw
    Qh = -(-Ho // sh)          # output sites per h-phase
    Qw = -(-Wo // sw)          # output sites per w-phase

    # pad: (M-1) on the leading edge, (Q - H) on the trailing edge
    xp = jnp.pad(x_nhwc, ((0, 0), (Mh - 1, Qh - H), (Mw - 1, Qw - W), (0, 0)))

    # stride-1 im2col with only Mh*Mw taps (4 taps for every strided layer here)
    taps = []
    for uh in range(Mh):
        for uw in range(Mw):
            taps.append(lax.slice(xp, (0, uh, uw, 0), (B, uh + Qh, uw + Qw, Cin)))
    patches = jnp.stack(taps, axis=3).reshape(B * Qh * Qw, Mh * Mw * Cin)

    # weight matrix: row (uh, uw, ci) -> col (ph, pw, co), value
    #   wt[ci, co, ph + (Mh-1-uh)*sh, pw + (Mw-1-uw)*sw]
    w_r = wt.reshape(Cin, Cout, Mh, sh, Mw, sw)[:, :, ::-1, :, ::-1, :]
    w_mat = jnp.transpose(w_r, (2, 4, 0, 3, 5, 1)).reshape(
        Mh * Mw * Cin, sh * sw * Cout)
    bias_ph = jnp.tile(bias, (sh * sw,))

    y = matmul_bias_act(patches, w_mat, bias_ph, act)

    # pixel shuffle: (B,Qh,Qw,sh,sw,Cout) -> (B, Qh*sh, Qw*sw, Cout), then crop
    y = y.reshape(B, Qh, Qw, sh, sw, Cout)
    y = jnp.transpose(y, (0, 1, 3, 2, 4, 5)).reshape(B, Qh * sh, Qw * sw, Cout)
    return y[:, :Ho, :Wo, :]


# ------------------------------ Decoder model ---------------------------------

def init_decoder_params(key, feature_size, final_conv_size, num_input_channels):
    ks = jax.random.split(key, 5)

    def w(k, shape, fan_in):
        return jax.random.normal(k, shape, jnp.float32) / np.float32(np.sqrt(fan_in))

    return {
        "lin_w": w(ks[0], (feature_size, final_conv_size), feature_size),
        "lin_b": jnp.zeros((final_conv_size,), jnp.float32),
        "ct1_w": w(ks[1], (64, 128, 3, 3), 64 * 9),
        "ct1_b": jnp.zeros((128,), jnp.float32),
        "ct2_w": w(ks[2], (128, 64, 4, 4), 128 * 16),
        "ct2_b": jnp.zeros((64,), jnp.float32),
        "ct3_w": w(ks[3], (64, 32, 4, 4), 64 * 16),
        "ct3_b": jnp.zeros((32,), jnp.float32),
        "ct4_w": w(ks[4], (32, num_input_channels, 8, 8), 32 * 64),
        "ct4_b": jnp.zeros((num_input_channels,), jnp.float32),
    }


def decoder_forward(f, params, final_conv_shape):
    # TODO(synk): the five matmul kernels could be fused into a single
    #             VMEM-resident pallas_call (all activations <= ~0.4 MB); kept
    #             as one kernel per layer so the tiny im2col / pixel-shuffle
    #             glue stays in XLA and Mosaic lowering remains trivial.
    B = f.shape[0]
    # Linear + ReLU (Pallas matmul kernel)
    h = matmul_bias_act(f, params["lin_w"], params["lin_b"], act="relu")
    # Unflatten (same semantics as torch .view(-1, *final_conv_shape), NCHW)
    C0, H0, W0 = final_conv_shape
    x = h.reshape(B, C0, H0, W0)
    x = jnp.transpose(x, (0, 2, 3, 1))  # -> NHWC internal layout
    x = conv_transpose_layer(x, params["ct1_w"], params["ct1_b"], 1, 0, "relu")
    x = conv_transpose_layer(x, params["ct2_w"], params["ct2_b"], 2, 0, "relu")
    x = conv_transpose_layer(x, params["ct3_w"], params["ct3_b"], 2, 1, "relu")
    x = conv_transpose_layer(x, params["ct4_w"], params["ct4_b"], 4, (2, 0), "sigmoid")
    return jnp.transpose(x, (0, 3, 1, 2))  # -> NCHW, matches PyTorch output


# ------------------------ pure-JAX reference (for check) ----------------------

def _ref_conv_transpose(x_nchw, wt, bias, stride, output_padding):
    _, _, kH, kW = wt.shape
    sh, sw = _pair(stride)
    oph, opw = _pair(output_padding)
    w = jnp.transpose(wt[:, :, ::-1, ::-1], (1, 0, 2, 3))  # OIHW
    y = lax.conv_general_dilated(
        x_nchw, w, window_strides=(1, 1),
        padding=((kH - 1, kH - 1 + oph), (kW - 1, kW - 1 + opw)),
        lhs_dilation=(sh, sw),
        dimension_numbers=("NCHW", "OIHW", "NCHW"),
        precision=lax.Precision.HIGHEST)
    return y + bias[None, :, None, None]


def decoder_forward_ref(f, params, final_conv_shape):
    B = f.shape[0]
    h = jax.nn.relu(jnp.dot(f, params["lin_w"], precision=lax.Precision.HIGHEST)
                    + params["lin_b"])
    x = h.reshape(B, *final_conv_shape)
    x = jax.nn.relu(_ref_conv_transpose(x, params["ct1_w"], params["ct1_b"], 1, 0))
    x = jax.nn.relu(_ref_conv_transpose(x, params["ct2_w"], params["ct2_b"], 2, 0))
    x = jax.nn.relu(_ref_conv_transpose(x, params["ct3_w"], params["ct3_b"], 2, 1))
    x = jax.nn.sigmoid(_ref_conv_transpose(x, params["ct4_w"], params["ct4_b"], 4, (2, 0)))
    return x


# ----------------------------------- main --------------------------------------

if __name__ == "__main__":
    feature_size = 32
    final_conv_shape = (64, 3, 3)            # channel dim must be 64 (module hard-codes it)
    final_conv_size = 64 * 3 * 3
    num_input_channels = 1
    batch = 2

    key = jax.random.PRNGKey(0)
    kf, kp = jax.random.split(key)
    f = jax.random.normal(kf, (batch, feature_size), jnp.float32)
    params = init_decoder_params(kp, feature_size, final_conv_size, num_input_channels)

    fwd = jax.jit(decoder_forward, static_argnums=2)
    out = jax.block_until_ready(fwd(f, params, final_conv_shape))
    # shape trace: (2,64,3,3) -> (2,128,5,5) -> (2,64,12,12) -> (2,32,27,27) -> (2,1,114,112)
    assert out.shape == (batch, num_input_channels, 114, 112), out.shape

    ref = jax.block_until_ready(decoder_forward_ref(f, params, final_conv_shape))
    # bf16 MXU inputs / f32 accumulation vs. f32 HIGHEST reference
    np.testing.assert_allclose(np.asarray(out), np.asarray(ref), atol=5e-3, rtol=5e-3)

    print("KERNEL_OK")
</pallas_src>

<mosaic_0001>
module attributes {stable_mosaic.version = 11 : i64} {
  func.func @_mm_bias_act_kernel(%arg0: i32, %arg1: memref<2x32xbf16, #tpu.memory_space<vmem>>, %arg2: memref<32x576xbf16, #tpu.memory_space<vmem>>, %arg3: memref<1x576xf32, #tpu.memory_space<vmem>>, %arg4: memref<2x576xf32, #tpu.memory_space<vmem>>) attributes {dimension_semantics = [#tpu.dimension_semantics<parallel>], iteration_bounds = array<i64: 1>, scalar_prefetch = 0 : i64, scratch_operands = 0 : i64, tpu.core_type = #tpu.core_type<tc>, window_params = [{transform_indices = @transform_0, window_bounds = array<i64: 2, 32>}, {pipeline_mode = #tpu.pipeline_mode<synchronous>, transform_indices = @transform_1, window_bounds = array<i64: 32, 576>}, {pipeline_mode = #tpu.pipeline_mode<synchronous>, transform_indices = @transform_2, window_bounds = array<i64: 1, 576>}, {transform_indices = @transform_3, window_bounds = array<i64: 2, 576>}]} {
    %c0 = arith.constant 0 : index
    %c0_0 = arith.constant 0 : index
    %0 = vector.load %arg1[%c0, %c0_0] : memref<2x32xbf16, #tpu.memory_space<vmem>>, vector<2x32xbf16>
    %c0_1 = arith.constant 0 : index
    %c0_2 = arith.constant 0 : index
    %1 = vector.load %arg2[%c0_1, %c0_2] : memref<32x576xbf16, #tpu.memory_space<vmem>>, vector<32x576xbf16>
    %cst = arith.constant dense<0.000000e+00> : vector<2x576xf32>
    %2 = tpu.matmul %0, %1, %cst {dimension_numbers = #tpu.dot_dimension_numbers<[1], [0], [0], [1], [0, 0, 1, 1], [], []>} : vector<2x32xbf16>, vector<32x576xbf16>, vector<2x576xf32> -> vector<2x576xf32>
    %c0_3 = arith.constant 0 : index
    %c0_4 = arith.constant 0 : index
    %3 = vector.load %arg3[%c0_3, %c0_4] : memref<1x576xf32, #tpu.memory_space<vmem>>, vector<1x576xf32>
    %4 = vector.broadcast %3 : vector<1x576xf32> to vector<2x576xf32>
    %5 = arith.addf %2, %4 : vector<2x576xf32>
    %cst_5 = arith.constant 0.000000e+00 : f32
    %6 = vector.broadcast %cst_5 : f32 to vector<2x576xf32>
    %7 = arith.maximumf %5, %6 : vector<2x576xf32>
    %c0_6 = arith.constant 0 : index
    %c0_7 = arith.constant 0 : index
    %8 = vector.load %arg4[%c0_6, %c0_7] : memref<2x576xf32, #tpu.memory_space<vmem>>, vector<2x576xf32>
    tpu.vector_store %arg4[%c0_6, %c0_7], %7 {strides = array<i32>} : memref<2x576xf32, #tpu.memory_space<vmem>>, vector<2x576xf32>,
    return
  }
  func.func @transform_0(%arg0: i32) -> (i32, i32) {
    %c0_i32 = arith.constant 0 : i32
    %c0_i32_0 = arith.constant 0 : i32
    return %arg0, %c0_i32 : i32, i32
  }
  func.func @transform_1(%arg0: i32) -> (i32, i32) {
    %c0_i32 = arith.constant 0 : i32
    %c0_i32_0 = arith.constant 0 : i32
    %c0_i32_1 = arith.constant 0 : i32
    return %c0_i32, %c0_i32_0 : i32, i32
  }
  func.func @transform_2(%arg0: i32) -> (i32, i32) {
    %c0_i32 = arith.constant 0 : i32
    %c0_i32_0 = arith.constant 0 : i32
    %c0_i32_1 = arith.constant 0 : i32
    return %c0_i32, %c0_i32_0 : i32, i32
  }
  func.func @transform_3(%arg0: i32) -> (i32, i32) {
    %c0_i32 = arith.constant 0 : i32
    %c0_i32_0 = arith.constant 0 : i32
    return %arg0, %c0_i32 : i32, i32
  }
}

module attributes {stable_mosaic.version = 11 : i64} {
  func.func @_mm_bias_act_kernel(%arg0: i32, %arg1: memref<50x576xbf16, #tpu.memory_space<vmem>>, %arg2: memref<576x128xbf16, #tpu.memory_space<vmem>>, %arg3: memref<1x128xf32, #tpu.memory_space<vmem>>, %arg4: memref<50x128xf32, #tpu.memory_space<vmem>>) attributes {dimension_semantics = [#tpu.dimension_semantics<parallel>], iteration_bounds = array<i64: 1>, scalar_prefetch = 0 : i64, scratch_operands = 0 : i64, tpu.core_type = #tpu.core_type<tc>, window_params = [{transform_indices = @transform_0, window_bounds = array<i64: 50, 576>}, {pipeline_mode = #tpu.pipeline_mode<synchronous>, transform_indices = @transform_1, window_bounds = array<i64: 576, 128>}, {pipeline_mode = #tpu.pipeline_mode<synchronous>, transform_indices = @transform_2, window_bounds = array<i64: 1, 128>}, {transform_indices = @transform_3, window_bounds = array<i64: 50, 128>}]} {
    %c0 = arith.constant 0 : index
    %c0_0 = arith.constant 0 : index
    %0 = vector.load %arg1[%c0, %c0_0] : memref<50x576xbf16, #tpu.memory_space<vmem>>, vector<50x576xbf16>
    %c0_1 = arith.constant 0 : index
    %c0_2 = arith.constant 0 : index
    %1 = vector.load %arg2[%c0_1, %c0_2] : memref<576x128xbf16, #tpu.memory_space<vmem>>, vector<576x128xbf16>
    %cst = arith.constant dense<0.000000e+00> : vector<50x128xf32>
    %2 = tpu.matmul %0, %1, %cst {dimension_numbers = #tpu.dot_dimension_numbers<[1], [0], [0], [1], [0, 0, 1, 1], [], []>} : vector<50x576xbf16>, vector<576x128xbf16>, vector<50x128xf32> -> vector<50x128xf32>
    %c0_3 = arith.constant 0 : index
    %c0_4 = arith.constant 0 : index
    %3 = vector.load %arg3[%c0_3, %c0_4] : memref<1x128xf32, #tpu.memory_space<vmem>>, vector<1x128xf32>
    %4 = vector.broadcast %3 : vector<1x128xf32> to vector<50x128xf32>
    %5 = arith.addf %2, %4 : vector<50x128xf32>
    %cst_5 = arith.constant 0.000000e+00 : f32
    %6 = vector.broadcast %cst_5 : f32 to vector<50x128xf32>
    %7 = arith.maximumf %5, %6 : vector<50x128xf32>
    %c0_6 = arith.constant 0 : index
    %c0_7 = arith.constant 0 : index
    %8 = vector.load %arg4[%c0_6, %c0_7] : memref<50x128xf32, #tpu.memory_space<vmem>>, vector<50x128xf32>
    tpu.vector_store %arg4[%c0_6, %c0_7], %7 {strides = array<i32>} : memref<50x128xf32, #tpu.memory_space<vmem>>, vector<50x128xf32>,
    return
  }
  func.func @transform_0(%arg0: i32) -> (i32, i32) {
    %c0_i32 = arith.constant 0 : i32
    %c0_i32_0 = arith.constant 0 : i32
    return %arg0, %c0_i32 : i32, i32
  }
  func.func @transform_1(%arg0: i32) -> (i32, i32) {
    %c0_i32 = arith.constant 0 : i32
    %c0_i32_0 = arith.constant 0 : i32
    %c0_i32_1 = arith.constant 0 : i32
    return %c0_i32, %c0_i32_0 : i32, i32
  }
  func.func @transform_2(%arg0: i32) -> (i32, i32) {
    %c0_i32 = arith.constant 0 : i32
    %c0_i32_0 = arith.constant 0 : i32
    %c0_i32_1 = arith.constant 0 : i32
    return %c0_i32, %c0_i32_0 : i32, i32
  }
  func.func @transform_3(%arg0: i32) -> (i32, i32) {
    %c0_i32 = arith.constant 0 : i32
    %c0_i32_0 = arith.constant 0 : i32
    return %arg0, %c0_i32 : i32, i32
  }
}

module attributes {stable_mosaic.version = 11 : i64} {
  func.func @_mm_bias_act_kernel(%arg0: i32, %arg1: memref<72x512xbf16, #tpu.memory_space<vmem>>, %arg2: memref<512x256xbf16, #tpu.memory_space<vmem>>, %arg3: memref<1x256xf32, #tpu.memory_space<vmem>>, %arg4: memref<72x256xf32, #tpu.memory_space<vmem>>) attributes {dimension_semantics = [#tpu.dimension_semantics<parallel>], iteration_bounds = array<i64: 1>, scalar_prefetch = 0 : i64, scratch_operands = 0 : i64, tpu.core_type = #tpu.core_type<tc>, window_params = [{transform_indices = @transform_0, window_bounds = array<i64: 72, 512>}, {pipeline_mode = #tpu.pipeline_mode<synchronous>, transform_indices = @transform_1, window_bounds = array<i64: 512, 256>}, {pipeline_mode = #tpu.pipeline_mode<synchronous>, transform_indices = @transform_2, window_bounds = array<i64: 1, 256>}, {transform_indices = @transform_3, window_bounds = array<i64: 72, 256>}]} {
    %c0 = arith.constant 0 : index
    %c0_0 = arith.constant 0 : index
    %0 = vector.load %arg1[%c0, %c0_0] : memref<72x512xbf16, #tpu.memory_space<vmem>>, vector<72x512xbf16>
    %c0_1 = arith.constant 0 : index
    %c0_2 = arith.constant 0 : index
    %1 = vector.load %arg2[%c0_1, %c0_2] : memref<512x256xbf16, #tpu.memory_space<vmem>>, vector<512x256xbf16>
    %cst = arith.constant dense<0.000000e+00> : vector<72x256xf32>
    %2 = tpu.matmul %0, %1, %cst {dimension_numbers = #tpu.dot_dimension_numbers<[1], [0], [0], [1], [0, 0, 1, 1], [], []>} : vector<72x512xbf16>, vector<512x256xbf16>, vector<72x256xf32> -> vector<72x256xf32>
    %c0_3 = arith.constant 0 : index
    %c0_4 = arith.constant 0 : index
    %3 = vector.load %arg3[%c0_3, %c0_4] : memref<1x256xf32, #tpu.memory_space<vmem>>, vector<1x256xf32>
    %4 = vector.broadcast %3 : vector<1x256xf32> to vector<72x256xf32>
    %5 = arith.addf %2, %4 : vector<72x256xf32>
    %cst_5 = arith.constant 0.000000e+00 : f32
    %6 = vector.broadcast %cst_5 : f32 to vector<72x256xf32>
    %7 = arith.maximumf %5, %6 : vector<72x256xf32>
    %c0_6 = arith.constant 0 : index
    %c0_7 = arith.constant 0 : index
    %8 = vector.load %arg4[%c0_6, %c0_7] : memref<72x256xf32, #tpu.memory_space<vmem>>, vector<72x256xf32>
    tpu.vector_store %arg4[%c0_6, %c0_7], %7 {strides = array<i32>} : memref<72x256xf32, #tpu.memory_space<vmem>>, vector<72x256xf32>,
    return
  }
  func.func @transform_0(%arg0: i32) -> (i32, i32) {
    %c0_i32 = arith.constant 0 : i32
    %c0_i32_0 = arith.constant 0 : i32
    return %arg0, %c0_i32 : i32, i32
  }
  func.func @transform_1(%arg0: i32) -> (i32, i32) {
    %c0_i32 = arith.constant 0 : i32
    %c0_i32_0 = arith.constant 0 : i32
    %c0_i32_1 = arith.constant 0 : i32
    return %c0_i32, %c0_i32_0 : i32, i32
  }
  func.func @transform_2(%arg0: i32) -> (i32, i32) {
    %c0_i32 = arith.constant 0 : i32
    %c0_i32_0 = arith.constant 0 : i32
    %c0_i32_1 = arith.constant 0 : i32
    return %c0_i32, %c0_i32_0 : i32, i32
  }
  func.func @transform_3(%arg0: i32) -> (i32, i32) {
    %c0_i32 = arith.constant 0 : i32
    %c0_i32_0 = arith.constant 0 : i32
    return %arg0, %c0_i32 : i32, i32
  }
}

module attributes {stable_mosaic.version = 11 : i64} {
  func.func @_mm_bias_act_kernel(%arg0: i32, %arg1: memref<392x256xbf16, #tpu.memory_space<vmem>>, %arg2: memref<256x128xbf16, #tpu.memory_space<vmem>>, %arg3: memref<1x128xf32, #tpu.memory_space<vmem>>, %arg4: memref<392x128xf32, #tpu.memory_space<vmem>>) attributes {dimension_semantics = [#tpu.dimension_semantics<parallel>], iteration_bounds = array<i64: 1>, scalar_prefetch = 0 : i64, scratch_operands = 0 : i64, tpu.core_type = #tpu.core_type<tc>, window_params = [{transform_indices = @transform_0, window_bounds = array<i64: 392, 256>}, {pipeline_mode = #tpu.pipeline_mode<synchronous>, transform_indices = @transform_1, window_bounds = array<i64: 256, 128>}, {pipeline_mode = #tpu.pipeline_mode<synchronous>, transform_indices = @transform_2, window_bounds = array<i64: 1, 128>}, {transform_indices = @transform_3, window_bounds = array<i64: 392, 128>}]} {
    %c0 = arith.constant 0 : index
    %c0_0 = arith.constant 0 : index
    %0 = vector.load %arg1[%c0, %c0_0] : memref<392x256xbf16, #tpu.memory_space<vmem>>, vector<392x256xbf16>
    %c0_1 = arith.constant 0 : index
    %c0_2 = arith.constant 0 : index
    %1 = vector.load %arg2[%c0_1, %c0_2] : memref<256x128xbf16, #tpu.memory_space<vmem>>, vector<256x128xbf16>
    %cst = arith.constant dense<0.000000e+00> : vector<392x128xf32>
    %2 = tpu.matmul %0, %1, %cst {dimension_numbers = #tpu.dot_dimension_numbers<[1], [0], [0], [1], [0, 0, 1, 1], [], []>} : vector<392x256xbf16>, vector<256x128xbf16>, vector<392x128xf32> -> vector<392x128xf32>
    %c0_3 = arith.constant 0 : index
    %c0_4 = arith.constant 0 : index
    %3 = vector.load %arg3[%c0_3, %c0_4] : memref<1x128xf32, #tpu.memory_space<vmem>>, vector<1x128xf32>
    %4 = vector.broadcast %3 : vector<1x128xf32> to vector<392x128xf32>
    %5 = arith.addf %2, %4 : vector<392x128xf32>
    %cst_5 = arith.constant 0.000000e+00 : f32
    %6 = vector.broadcast %cst_5 : f32 to vector<392x128xf32>
    %7 = arith.maximumf %5, %6 : vector<392x128xf32>
    %c0_6 = arith.constant 0 : index
    %c0_7 = arith.constant 0 : index
    %8 = vector.load %arg4[%c0_6, %c0_7] : memref<392x128xf32, #tpu.memory_space<vmem>>, vector<392x128xf32>
    tpu.vector_store %arg4[%c0_6, %c0_7], %7 {strides = array<i32>} : memref<392x128xf32, #tpu.memory_space<vmem>>, vector<392x128xf32>,
    return
  }
  func.func @transform_0(%arg0: i32) -> (i32, i32) {
    %c0_i32 = arith.constant 0 : i32
    %c0_i32_0 = arith.constant 0 : i32
    return %arg0, %c0_i32 : i32, i32
  }
  func.func @transform_1(%arg0: i32) -> (i32, i32) {
    %c0_i32 = arith.constant 0 : i32
    %c0_i32_0 = arith.constant 0 : i32
    %c0_i32_1 = arith.constant 0 : i32
    return %c0_i32, %c0_i32_0 : i32, i32
  }
  func.func @transform_2(%arg0: i32) -> (i32, i32) {
    %c0_i32 = arith.constant 0 : i32
    %c0_i32_0 = arith.constant 0 : i32
    %c0_i32_1 = arith.constant 0 : i32
    return %c0_i32, %c0_i32_0 : i32, i32
  }
  func.func @transform_3(%arg0: i32) -> (i32, i32) {
    %c0_i32 = arith.constant 0 : i32
    %c0_i32_0 = arith.constant 0 : i32
    return %arg0, %c0_i32 : i32, i32
  }
}

module attributes {stable_mosaic.version = 11 : i64} {
  func.func @_mm_bias_act_kernel(%arg0: i32, %arg1: memref<512x128xbf16, #tpu.memory_space<vmem>>, %arg2: memref<128x16xbf16, #tpu.memory_space<vmem>>, %arg3: memref<1x16xf32, #tpu.memory_space<vmem>>, %arg4: memref<512x16xf32, #tpu.memory_space<vmem>>) attributes {dimension_semantics = [#tpu.dimension_semantics<parallel>], iteration_bounds = array<i64: 4>, scalar_prefetch = 0 : i64, scratch_operands = 0 : i64, tpu.core_type = #tpu.core_type<tc>, window_params = [{transform_indices = @transform_0, window_bounds = array<i64: 512, 128>}, {pipeline_mode = #tpu.pipeline_mode<synchronous>, transform_indices = @transform_1, window_bounds = array<i64: 128, 16>}, {pipeline_mode = #tpu.pipeline_mode<synchronous>, transform_indices = @transform_2, window_bounds = array<i64: 1, 16>}, {transform_indices = @transform_3, window_bounds = array<i64: 512, 16>}]} {
    %c0 = arith.constant 0 : index
    %c0_0 = arith.constant 0 : index
    %0 = vector.load %arg1[%c0, %c0_0] : memref<512x128xbf16, #tpu.memory_space<vmem>>, vector<512x128xbf16>
    %c0_1 = arith.constant 0 : index
    %c0_2 = arith.constant 0 : index
    %1 = vector.load %arg2[%c0_1, %c0_2] : memref<128x16xbf16, #tpu.memory_space<vmem>>, vector<128x16xbf16>
    %cst = arith.constant dense<0.000000e+00> : vector<512x16xf32>
    %2 = tpu.matmul %0, %1, %cst {dimension_numbers = #tpu.dot_dimension_numbers<[1], [0], [0], [1], [0, 0, 1, 1], [], []>} : vector<512x128xbf16>, vector<128x16xbf16>, vector<512x16xf32> -> vector<512x16xf32>
    %c0_3 = arith.constant 0 : index
    %c0_4 = arith.constant 0 : index
    %3 = vector.load %arg3[%c0_3, %c0_4] : memref<1x16xf32, #tpu.memory_space<vmem>>, vector<1x16xf32>
    %4 = vector.broadcast %3 : vector<1x16xf32> to vector<512x16xf32>
    %5 = arith.addf %2, %4 : vector<512x16xf32>
    %6 = arith.negf %5 : vector<512x16xf32>
    %7 = math.exp %6 : vector<512x16xf32>
    %cst_5 = arith.constant 1.000000e+00 : f32
    %8 = vector.broadcast %cst_5 : f32 to vector<512x16xf32>
    %9 = arith.addf %8, %7 : vector<512x16xf32>
    %10 = arith.divf %8, %9 : vector<512x16xf32>
    %c0_6 = arith.constant 0 : index
    %c0_7 = arith.constant 0 : index
    %11 = vector.load %arg4[%c0_6, %c0_7] : memref<512x16xf32, #tpu.memory_space<vmem>>, vector<512x16xf32>
    tpu.vector_store %arg4[%c0_6, %c0_7], %10 {strides = array<i32>} : memref<512x16xf32, #tpu.memory_space<vmem>>, vector<512x16xf32>,
    return
  }
  func.func @transform_0(%arg0: i32) -> (i32, i32) {
    %c0_i32 = arith.constant 0 : i32
    %c0_i32_0 = arith.constant 0 : i32
    return %arg0, %c0_i32 : i32, i32
  }
  func.func @transform_1(%arg0: i32) -> (i32, i32) {
    %c0_i32 = arith.constant 0 : i32
    %c0_i32_0 = arith.constant 0 : i32
    %c0_i32_1 = arith.constant 0 : i32
    return %c0_i32, %c0_i32_0 : i32, i32
  }
  func.func @transform_2(%arg0: i32) -> (i32, i32) {
    %c0_i32 = arith.constant 0 : i32
    %c0_i32_0 = arith.constant 0 : i32
    %c0_i32_1 = arith.constant 0 : i32
    return %c0_i32, %c0_i32_0 : i32, i32
  }
  func.func @transform_3(%arg0: i32) -> (i32, i32) {
    %c0_i32 = arith.constant 0 : i32
    %c0_i32_0 = arith.constant 0 : i32
    return %arg0, %c0_i32 : i32, i32
  }
}

</mosaic_0001>

<llo_original>
// kernel: decoder_forward.5
$region0: #{decoder_forward.5}
  #allocation0 [shape = 'u32[]', space=smem, size = 0x4, offset = 0x4, fixed_abs, tag = 'smem constant byte address 0x4 - core index']
  #allocation1 [shape = 'u32[72,128]{1,0:T(1,128)}', space=vmem, size = 0x9000, scoped, tag = 'internal scratch']
  %s0 = inlined_call_operand.vmem [shape: bf16[2,32], index: 0, kind: input, shape index: {}]
  %s1 = inlined_call_operand.vmem [shape: bf16[32,576], index: 1, kind: input, shape index: {}]
  %s2 = inlined_call_operand.vmem [shape: f32[1,576], index: 2, kind: input, shape index: {}]
  %s3 = inlined_call_operand.vmem [shape: f32[2,576], index: 3, kind: output, shape index: {}]
  %s4 = sld [smem:[#allocation0]]
  $region22: #{decoder_forward.5} parent=0
    _
  %s6 = ssub.s32 1, %s4
  %s7 = scalar_select 0, %s6, %s4
  // Predicated region
  $region2: #{decoder_forward.5} parent=0 // pred_check
    _
  $region3: #{decoder_forward.5} parent=0 // pred_check_branch
    %9 = sbr.rel (0) target = $region5
  $region4: #{decoder_forward.5} parent=0 // pred_region
    _
  $region5: #{decoder_forward.5} parent=0 // pred_fallthru
    _
  // Predicated region
  $region6: #{decoder_forward.5} parent=0 // pred_check
    _
  $region7: #{decoder_forward.5} parent=0 // pred_check_branch
    %11 = sbr.rel (0) target = $region9
  $region8: #{decoder_forward.5} parent=0 // pred_region
    _
  $region9: #{decoder_forward.5} parent=0 // pred_fallthru
    _
  // Predicated region
  $region10: #{decoder_forward.5} parent=0 // pred_check
    _
  $region11: #{decoder_forward.5} parent=0 // pred_check_branch
    %13 = sbr.rel (0) target = $region13
  $region12: #{decoder_forward.5} parent=0 // pred_region
    _
  $region13: #{decoder_forward.5} parent=0 // pred_fallthru
    _
  %v15 = vld [vmem:[%s0] sm:$0x1]
  %v16 = vld [vmem:[%s1] sm:$0xff]
  %v17 = vld [vmem:[%s1 + $0x8] sm:$0xff]
  %v18 = vld [vmem:[%s1 + $0x10] sm:$0xf]
  %v19 = vld [vmem:[%s1 + $0x14] sm:$0xff]
  %v20 = vld [vmem:[%s1 + $0x1c] sm:$0xff]
  %v21 = vld [vmem:[%s1 + $0x24] sm:$0xf]
  %v22 = vld [vmem:[%s1 + $0x28] sm:$0xff]
  %v23 = vld [vmem:[%s1 + $0x30] sm:$0xff]
  %v24 = vld [vmem:[%s1 + $0x38] sm:$0xf]
  %v25 = vld [vmem:[%s1 + $0x3c] sm:$0xff]
  %v26 = vld [vmem:[%s1 + $0x44] sm:$0xff]
  %v27 = vld [vmem:[%s1 + $0x4c] sm:$0xf]
  %v28 = vld [vmem:[%s2] sm:$0x1f]
  %v30 = vperm.slane %v28, 0
  %v31 = vperm.slane %v28, 1
  %v32 = vperm.slane %v28, 2
  %v33 = vperm.slane %v28, 3
  %v34 = vperm.slane %v28, 4
  %v52 = vunpack.c.l.b16 %v16
  %v53 = vunpack.c.h.b16 %v16
  %v54 = vunpack.c.l.b16 %v17
  %v55 = vunpack.c.h.b16 %v17
  %v56 = vunpack.c.l.b16 %v18
  %v57 = vunpack.c.l.b16 %v19
  %v58 = vunpack.c.h.b16 %v19
  %v59 = vunpack.c.l.b16 %v20
  %v60 = vunpack.c.h.b16 %v20
  %v61 = vunpack.c.l.b16 %v21
  %v62 = vunpack.c.l.b16 %v22
  %v63 = vunpack.c.h.b16 %v22
  %v64 = vunpack.c.l.b16 %v23
  %v65 = vunpack.c.h.b16 %v23
  %v66 = vunpack.c.l.b16 %v24
  %v67 = vunpack.c.l.b16 %v25
  %v68 = vunpack.c.h.b16 %v25
  %v69 = vunpack.c.l.b16 %v26
  %v70 = vunpack.c.h.b16 %v26
  %v71 = vunpack.c.l.b16 %v27
  %v72 = vpack.c.b16 %v57, %v52
  %v73 = vpack.c.b16 %v58, %v53
  %v74 = vpack.c.b16 %v59, %v54
  %v75 = vpack.c.b16 %v60, %v55
  %v76 = vpack.c.b16 %v61, %v56
  %v77 = vpack.c.b16 %v67, %v62
  %v78 = vpack.c.b16 %v68, %v63
  %v79 = vpack.c.b16 %v69, %v64
  %v80 = vpack.c.b16 %v70, %v65
  %v81 = vpack.c.b16 %v71, %v66
  %vm92 = vcmask 261120
  %v94 = vsel %vm92, %v15, 0
  %96 = vmatpush.bf16.msra.mxu0 0
  %97 = vmatpush.bf16.msra.mxu0 0
  %98 = vmatpush.bf16.msra.mxu0 0
  %99 = vmatpush.bf16.msra.mxu0 0
  %100 = vmatpush.bf16.msra.mxu0 0
  %101 = vmatpush.bf16.msra.mxu0 0
  %102 = vmatpush.bf16.msra.mxu0 %v77
  %103 = vmatpush.bf16.msra.mxu0 %v72
  %104 = vmatmul.bf16.gmra.mxu0 %v94
  %v105 = vpop.f32.mrf.mxu0
  %v106 = vadd.f32 %v30, %v105
  %v107 = vpop.f32.mrf.mxu0
  %108 = vdwg.mxu0
  %109 = vmatpush.bf16.msra.mxu0 0
  %110 = vmatpush.bf16.msra.mxu0 0
  %111 = vmatpush.bf16.msra.mxu0 0
  %112 = vmatpush.bf16.msra.mxu0 0
  %113 = vmatpush.bf16.msra.mxu0 0
  %114 = vmatpush.bf16.msra.mxu0 0
  %115 = vmatpush.bf16.msra.mxu0 %v78
  %116 = vmatpush.bf16.msra.mxu0 %v73
  %117 = vmatmul.bf16.gmra.mxu0 %v94
  %v118 = vpop.f32.mrf.mxu0
  %v119 = vadd.f32 %v31, %v118
  %v120 = vpop.f32.mrf.mxu0
  %121 = vdwg.mxu0
  %122 = vmatpush.bf16.msra.mxu0 0
  %123 = vmatpush.bf16.msra.mxu0 0
  %124 = vmatpush.bf16.msra.mxu0 0
  %125 = vmatpush.bf16.msra.mxu0 0
  %126 = vmatpush.bf16.msra.mxu0 0
  %127 = vmatpush.bf16.msra.mxu0 0
  %128 = vmatpush.bf16.msra.mxu0 %v79
  %129 = vmatpush.bf16.msra.mxu0 %v74
  %130 = vmatmul.bf16.gmra.mxu0 %v94
  %v131 = vpop.f32.mrf.mxu0
  %v132 = vadd.f32 %v32, %v131
  %v133 = vpop.f32.mrf.mxu0
  %134 = vdwg.mxu0
  %135 = vmatpush.bf16.msra.mxu0 0
  %136 = vmatpush.bf16.msra.mxu0 0
  %137 = vmatpush.bf16.msra.mxu0 0
  %138 = vmatpush.bf16.msra.mxu0 0
  %139 = vmatpush.bf16.msra.mxu0 0
  %140 = vmatpush.bf16.msra.mxu0 0
  %141 = vmatpush.bf16.msra.mxu0 %v80
  %142 = vmatpush.bf16.msra.mxu0 %v75
  %143 = vmatmul.bf16.gmra.mxu0 %v94
  %v144 = vpop.f32.mrf.mxu0
  %v145 = vadd.f32 %v33, %v144
  %v146 = vpop.f32.mrf.mxu0
  %147 = vdwg.mxu0
  %148 = vmatpush.bf16.msra.mxu0 0
  %149 = vmatpush.bf16.msra.mxu0 0
  %150 = vmatpush.bf16.msra.mxu0 0
  %151 = vmatpush.bf16.msra.mxu0 0
  %152 = vmatpush.bf16.msra.mxu0 0
  %153 = vmatpush.bf16.msra.mxu0 0
  %154 = vmatpush.bf16.msra.mxu0 %v81
  %155 = vmatpush.bf16.msra.mxu0 %v76
  %156 = vmatmul.bf16.gmra.mxu0 %v94
  %v157 = vpop.f32.mrf.mxu0
  %v158 = vadd.f32 %v34, %v157
  %v159 = vpop.f32.mrf.mxu0
  %160 = vdwg.mxu0
  %v161 = vmax.f32 %v106, 0.0
  %v162 = vmax.f32 %v119, 0.0
  %v163 = vmax.f32 %v132, 0.0
  %v164 = vmax.f32 %v145, 0.0
  %v165 = vmax.f32 %v158, 0.0
  %v170 = vrot.slane %v162, 6
  %v171 = vrot.slane %v163, 4
  %v172 = vrot.slane %v164, 2
  %vm173 = vcmask 1041408
  %v174 = vsel %vm173, %v161, %v170
  %vm175 = vcmask 1045508
  %v176 = vsel %vm175, %v171, %v172
  %vm177 = vcmask 1043456
  %v178 = vsel %vm177, %v174, %v176
  %180 = vst [vmem:[%s3] sm:$0xff] %v178
  %vm181 = vcmask 517120
  %182 = vst.msk [vmem:[%s3 + $0x8] sm:$0x3] %vm181, %v165
  // Predicated region
  $region14: #{decoder_forward.5} parent=0 // pred_check
    _
  $region15: #{decoder_forward.5} parent=0 // pred_check_branch
    %184 = sbr.rel (0) target = $region17
  $region16: #{decoder_forward.5} parent=0 // pred_region
    _
  $region17: #{decoder_forward.5} parent=0 // pred_fallthru
    _
  // Predicated region
  $region18: #{decoder_forward.5} parent=0 // pred_check
    _
  $region19: #{decoder_forward.5} parent=0 // pred_check_branch
    %186 = sbr.rel (0) target = $region21
  $region20: #{decoder_forward.5} parent=0 // pred_region
    _
  $region21: #{decoder_forward.5} parent=0 // pred_fallthru
    _

// kernel: reverse.2
$region0: #{reverse.2}
  #allocation0 [shape = 's32[1]{0}', space=sflag, size = 0x4, scoped, tag = 'scoped memory for reverse.2']
  %s0 = inlined_call_operand.vmem [shape: f32[64,128,3,3], index: 0, kind: input, shape index: {}]
  %s1 = inlined_call_operand.vmem [shape: bf16[64,128,3,3], index: 1, kind: output, shape index: {}]
  %s2 = scalar_lea.vmem %s0, 512
  %v3 = vld [vmem:[%s2] sm:$0xff]
  %v4 = vpack.c.bf16 0.0, %v3
  %5 = vst [vmem:[%s1] sm:$0xf] %v4
  %s6 = scalar_lea.vmem %s0, 320
  %v7 = vld [vmem:[%s6] sm:$0xff]
  %s8 = scalar_lea.vmem %s1, 96
  %v9 = vpack.c.bf16 0.0, %v7
  %10 = vst [vmem:[%s8] sm:$0xf] %v9
  %s11 = scalar_lea.vmem %s0, 128
  %v12 = vld [vmem:[%s11] sm:$0xff]
  %s13 = scalar_lea.vmem %s1, 192
  %v14 = vpack.c.bf16 0.0, %v12
  %15 = vst [vmem:[%s13] sm:$0xf] %v14
  %s16 = scalar_lea.vmem %s0, 448
  %v17 = vld [vmem:[%s16] sm:$0xff]
  %s18 = scalar_lea.vmem %s1, 32
  %v19 = vpack.c.bf16 0.0, %v17
  %20 = vst [vmem:[%s18] sm:$0xf] %v19
  %s21 = scalar_lea.vmem %s0, 256
  %v22 = vld [vmem:[%s21] sm:$0xff]
  %s23 = scalar_lea.vmem %s1, 128
  %v24 = vpack.c.bf16 0.0, %v22
  %25 = vst [vmem:[%s23] sm:$0xf] %v24
  %s26 = scalar_lea.vmem %s0, 64
  %v27 = vld [vmem:[%s26] sm:$0xff]
  %s28 = scalar_lea.vmem %s1, 224
  %v29 = vpack.c.bf16 0.0, %v27
  %30 = vst [vmem:[%s28] sm:$0xf] %v29
  %s31 = scalar_lea.vmem %s0, 384
  %v32 = vld [vmem:[%s31] sm:$0xff]
  %s33 = scalar_lea.vmem %s1, 64
  %v34 = vpack.c.bf16 0.0, %v32
  %35 = vst [vmem:[%s33] sm:$0xf] %v34
  %s36 = scalar_lea.vmem %s0, 192
  %v37 = vld [vmem:[%s36] sm:$0xff]
  %s38 = scalar_lea.vmem %s1, 160
  %v39 = vpack.c.bf16 0.0, %v37
  %40 = vst [vmem:[%s38] sm:$0xf] %v39
  %v41 = vld [vmem:[%s0] sm:$0xff]
  %s42 = scalar_lea.vmem %s1, 256
  %v43 = vpack.c.bf16 0.0, %v41
  %44 = vst [vmem:[%s42] sm:$0xf] %v43
  %s45 = scalar_lea.vmem %s0, 520
  %v46 = vld [vmem:[%s45] sm:$0xff]
  %s47 = scalar_lea.vmem %s1, 4
  %v48 = vpack.c.bf16 0.0, %v46
  %49 = vst [vmem:[%s47] sm:$0xf] %v48
  %s50 = scalar_lea.vmem %s0, 328
  %v51 = vld [vmem:[%s50] sm:$0xff]
  %s52 = scalar_lea.vmem %s1, 100
  %v53 = vpack.c.bf16 0.0, %v51
  %54 = vst [vmem:[%s52] sm:$0xf] %v53
  %s55 = scalar_lea.vmem %s0, 136
  %v56 = vld [vmem:[%s55] sm:$0xff]
  %s57 = scalar_lea.vmem %s1, 196
  %v58 = vpack.c.bf16 0.0, %v56
  %59 = vst [vmem:[%s57] sm:$0xf] %v58
  %s60 = scalar_lea.vmem %s0, 456
  %v61 = vld [vmem:[%s60] sm:$0xff]
  %s62 = scalar_lea.vmem %s1, 36
  %v63 = vpack.c.bf16 0.0, %v61
  %64 = vst [vmem:[%s62] sm:$0xf] %v63
  %s65 = scalar_lea.vmem %s0, 264
  %v66 = vld [vmem:[%s65] sm:$0xff]
  %s67 = scalar_lea.vmem %s1, 132
  %v68 = vpack.c.bf16 0.0, %v66
  %69 = vst [vmem:[%s67] sm:$0xf] %v68
  %s70 = scalar_lea.vmem %s0, 72
  %v71 = vld [vmem:[%s70] sm:$0xff]
  %s72 = scalar_lea.vmem %s1, 228
  %v73 = vpack.c.bf16 0.0, %v71
  %74 = vst [vmem:[%s72] sm:$0xf] %v73
  %s75 = scalar_lea.vmem %s0, 392
  %v76 = vld [vmem:[%s75] sm:$0xff]
  %s77 = scalar_lea.vmem %s1, 68
  %v78 = vpack.c.bf16 0.0, %v76
  %79 = vst [vmem:[%s77] sm:$0xf] %v78
  %s80 = scalar_lea.vmem %s0, 200
  %v81 = vld [vmem:[%s80] sm:$0xff]
  %s82 = scalar_lea.vmem %s1, 164
  %v83 = vpack.c.bf16 0.0, %v81
  %84 = vst [vmem:[%s82] sm:$0xf] %v83
  %s85 = scalar_lea.vmem %s0, 8
  %v86 = vld [vmem:[%s85] sm:$0xff]
  %s87 = scalar_lea.vmem %s1, 260
  %v88 = vpack.c.bf16 0.0, %v86
  %89 = vst [vmem:[%s87] sm:$0xf] %v88
  %s90 = scalar_lea.vmem %s0, 528
  %v91 = vld [vmem:[%s90] sm:$0xff]
  %s92 = scalar_lea.vmem %s1, 8
  %v93 = vpack.c.bf16 0.0, %v91
  %94 = vst [vmem:[%s92] sm:$0xf] %v93
  %s95 = scalar_lea.vmem %s0, 336
  %v96 = vld [vmem:[%s95] sm:$0xff]
  %s97 = scalar_lea.vmem %s1, 104
  %v98 = vpack.c.bf16 0.0, %v96
  %99 = vst [vmem:[%s97] sm:$0xf] %v98
  %s100 = scalar_lea.vmem %s0, 144
  %v101 = vld [vmem:[%s100] sm:$0xff]
  %s102 = scalar_lea.vmem %s1, 200
  %v103 = vpack.c.bf16 0.0, %v101
  %104 = vst [vmem:[%s102] sm:$0xf] %v103
  %s105 = scalar_lea.vmem %s0, 464
  %v106 = vld [vmem:[%s105] sm:$0xff]
  %s107 = scalar_lea.vmem %s1, 40
  %v108 = vpack.c.bf16 0.0, %v106
  %109 = vst [vmem:[%s107] sm:$0xf] %v108
  %s110 = scalar_lea.vmem %s0, 272
  %v111 = vld [vmem:[%s110] sm:$0xff]
  %s112 = scalar_lea.vmem %s1, 136
  %v113 = vpack.c.bf16 0.0, %v111
  %114 = vst [vmem:[%s112] sm:$0xf] %v113
  %s115 = scalar_lea.vmem %s0, 80
  %v116 = vld [vmem:[%s115] sm:$0xff]
  %s117 = scalar_lea.vmem %s1, 232
  %v118 = vpack.c.bf16 0.0, %v116
  %119 = vst [vmem:[%s117] sm:$0xf] %v118
  %s120 = scalar_lea.vmem %s0, 400
  %v121 = vld [vmem:[%s120] sm:$0xff]
  %s122 = scalar_lea.vmem %s1, 72
  %v123 = vpack.c.bf16 0.0, %v121
  %124 = vst [vmem:[%s122] sm:$0xf] %v123
  %s125 = scalar_lea.vmem %s0, 208
  %v126 = vld [vmem:[%s125] sm:$0xff]
  %s127 = scalar_lea.vmem %s1, 168
  %v128 = vpack.c.bf16 0.0, %v126
  %129 = vst [vmem:[%s127] sm:$0xf] %v128
  %s130 = scalar_lea.vmem %s0, 16
  %v131 = vld [vmem:[%s130] sm:$0xff]
  %s132 = scalar_lea.vmem %s1, 264
  %v133 = vpack.c.bf16 0.0, %v131
  %134 = vst [vmem:[%s132] sm:$0xf] %v133
  %s135 = scalar_lea.vmem %s0, 536
  %v136 = vld [vmem:[%s135] sm:$0xff]
  %s137 = scalar_lea.vmem %s1, 12
  %v138 = vpack.c.bf16 0.0, %v136
  %139 = vst [vmem:[%s137] sm:$0xf] %v138
  %s140 = scalar_lea.vmem %s0, 344
  %v141 = vld [vmem:[%s140] sm:$0xff]
  %s142 = scalar_lea.vmem %s1, 108
  %v143 = vpack.c.bf16 0.0, %v141
  %144 = vst [vmem:[%s142] sm:$0xf] %v143
  %s145 = scalar_lea.vmem %s0, 152
  %v146 = vld [vmem:[%s145] sm:$0xff]
  %s147 = scalar_lea.vmem %s1, 204
  %v148 = vpack.c.bf16 0.0, %v146
  %149 = vst [vmem:[%s147] sm:$0xf] %v148
  %s150 = scalar_lea.vmem %s0, 472
  %v151 = vld [vmem:[%s150] sm:$0xff]
  %s152 = scalar_lea.vmem %s1, 44
  %v153 = vpack.c.bf16 0.0, %v151
  %154 = vst [vmem:[%s152] sm:$0xf] %v153
  %s155 = scalar_lea.vmem %s0, 280
  %v156 = vld [vmem:[%s155] sm:$0xff]
  %s157 = scalar_lea.vmem %s1, 140
  %v158 = vpack.c.bf16 0.0, %v156
  %159 = vst [vmem:[%s157] sm:$0xf] %v158
  %s160 = scalar_lea.vmem %s0, 88
  %v161 = vld [vmem:[%s160] sm:$0xff]
  %s162 = scalar_lea.vmem %s1, 236
  %v163 = vpack.c.bf16 0.0, %v161
  %164 = vst [vmem:[%s162] sm:$0xf] %v163
  %s165 = scalar_lea.vmem %s0, 408
  %v166 = vld [vmem:[%s165] sm:$0xff]
  %s167 = scalar_lea.vmem %s1, 76
  %v168 = vpack.c.bf16 0.0, %v166
  %169 = vst [vmem:[%s167] sm:$0xf] %v168
  %s170 = scalar_lea.vmem %s0, 216
  %v171 = vld [vmem:[%s170] sm:$0xff]
  %s172 = scalar_lea.vmem %s1, 172
  %v173 = vpack.c.bf16 0.0, %v171
  %174 = vst [vmem:[%s172] sm:$0xf] %v173
  %s175 = scalar_lea.vmem %s0, 24
  %v176 = vld [vmem:[%s175] sm:$0xff]
  %s177 = scalar_lea.vmem %s1, 268
  %v178 = vpack.c.bf16 0.0, %v176
  %179 = vst [vmem:[%s177] sm:$0xf] %v178
  %s180 = scalar_lea.vmem %s0, 544
  %v181 = vld [vmem:[%s180] sm:$0xff]
  %s182 = scalar_lea.vmem %s1, 16
  %v183 = vpack.c.bf16 0.0, %v181
  %184 = vst [vmem:[%s182] sm:$0xf] %v183
  %s185 = scalar_lea.vmem %s0, 352
  %v186 = vld [vmem:[%s185] sm:$0xff]
  %s187 = scalar_lea.vmem %s1, 112
  %v188 = vpack.c.bf16 0.0, %v186
  %189 = vst [vmem:[%s187] sm:$0xf] %v188
  %s190 = scalar_lea.vmem %s0, 160
  %v191 = vld [vmem:[%s190] sm:$0xff]
  %s192 = scalar_lea.vmem %s1, 208
  %v193 = vpack.c.bf16 0.0, %v191
  %194 = vst [vmem:[%s192] sm:$0xf] %v193
  %s195 = scalar_lea.vmem %s0, 480
  %v196 = vld [vmem:[%s195] sm:$0xff]
  %s197 = scalar_lea.vmem %s1, 48
  %v198 = vpack.c.bf16 0.0, %v196
  %199 = vst [vmem:[%s197] sm:$0xf] %v198
  %s200 = scalar_lea.vmem %s0, 288
  %v201 = vld [vmem:[%s200] sm:$0xff]
  %s202 = scalar_lea.vmem %s1, 144
  %v203 = vpack.c.bf16 0.0, %v201
  %204 = vst [vmem:[%s202] sm:$0xf] %v203
  %s205 = scalar_lea.vmem %s0, 96
  %v206 = vld [vmem:[%s205] sm:$0xff]
  %s207 = scalar_lea.vmem %s1, 240
  %v208 = vpack.c.bf16 0.0, %v206
  %209 = vst [vmem:[%s207] sm:$0xf] %v208
  %s210 = scalar_lea.vmem %s0, 416
  %v211 = vld [vmem:[%s210] sm:$0xff]
  %s212 = scalar_lea.vmem %s1, 80
  %v213 = vpack.c.bf16 0.0, %v211
  %214 = vst [vmem:[%s212] sm:$0xf] %v213
  %s215 = scalar_lea.vmem %s0, 224
  %v216 = vld [vmem:[%s215] sm:$0xff]
  %s217 = scalar_lea.vmem %s1, 176
  %v218 = vpack.c.bf16 0.0, %v216
  %219 = vst [vmem:[%s217] sm:$0xf] %v218
  %s220 = scalar_lea.vmem %s0, 32
  %v221 = vld [vmem:[%s220] sm:$0xff]
  %s222 = scalar_lea.vmem %s1, 272
  %v223 = vpack.c.bf16 0.0, %v221
  %224 = vst [vmem:[%s222] sm:$0xf] %v223
  %s225 = scalar_lea.vmem %s0, 552
  %v226 = vld [vmem:[%s225] sm:$0xff]
  %s227 = scalar_lea.vmem %s1, 20
  %v228 = vpack.c.bf16 0.0, %v226
  %229 = vst [vmem:[%s227] sm:$0xf] %v228
  %s230 = scalar_lea.vmem %s0, 360
  %v231 = vld [vmem:[%s230] sm:$0xff]
  %s232 = scalar_lea.vmem %s1, 116
  %v233 = vpack.c.bf16 0.0, %v231
  %234 = vst [vmem:[%s232] sm:$0xf] %v233
  %s235 = scalar_lea.vmem %s0, 168
  %v236 = vld [vmem:[%s235] sm:$0xff]
  %s237 = scalar_lea.vmem %s1, 212
  %v238 = vpack.c.bf16 0.0, %v236
  %239 = vst [vmem:[%s237] sm:$0xf] %v238
  %s240 = scalar_lea.vmem %s0, 488
  %v241 = vld [vmem:[%s240] sm:$0xff]
  %s242 = scalar_lea.vmem %s1, 52
  %v243 = vpack.c.bf16 0.0, %v241
  %244 = vst [vmem:[%s242] sm:$0xf] %v243
  %s245 = scalar_lea.vmem %s0, 296
  %v246 = vld [vmem:[%s245] sm:$0xff]
  %s247 = scalar_lea.vmem %s1, 148
  %v248 = vpack.c.bf16 0.0, %v246
  %249 = vst [vmem:[%s247] sm:$0xf] %v248
  %s250 = scalar_lea.vmem %s0, 104
  %v251 = vld [vmem:[%s250] sm:$0xff]
  %s252 = scalar_lea.vmem %s1, 244
  %v253 = vpack.c.bf16 0.0, %v251
  %254 = vst [vmem:[%s252] sm:$0xf] %v253
  %s255 = scalar_lea.vmem %s0, 424
  %v256 = vld [vmem:[%s255] sm:$0xff]
  %s257 = scalar_lea.vmem %s1, 84
  %v258 = vpack.c.bf16 0.0, %v256
  %259 = vst [vmem:[%s257] sm:$0xf] %v258
  %s260 = scalar_lea.vmem %s0, 232
  %v261 = vld [vmem:[%s260] sm:$0xff]
  %s262 = scalar_lea.vmem %s1, 180
  %v263 = vpack.c.bf16 0.0, %v261
  %264 = vst [vmem:[%s262] sm:$0xf] %v263
  %s265 = scalar_lea.vmem %s0, 40
  %v266 = vld [vmem:[%s265] sm:$0xff]
  %s267 = scalar_lea.vmem %s1, 276
  %v268 = vpack.c.bf16 0.0, %v266
  %269 = vst [vmem:[%s267] sm:$0xf] %v268
  %s270 = scalar_lea.vmem %s0, 560
  %v271 = vld [vmem:[%s270] sm:$0xff]
  %s272 = scalar_lea.vmem %s1, 24
  %v273 = vpack.c.bf16 0.0, %v271
  %274 = vst [vmem:[%s272] sm:$0xf] %v273
  %s275 = scalar_lea.vmem %s0, 368
  %v276 = vld [vmem:[%s275] sm:$0xff]
  %s277 = scalar_lea.vmem %s1, 120
  %v278 = vpack.c.bf16 0.0, %v276
  %279 = vst [vmem:[%s277] sm:$0xf] %v278
  %s280 = scalar_lea.vmem %s0, 176
  %v281 = vld [vmem:[%s280] sm:$0xff]
  %s282 = scalar_lea.vmem %s1, 216
  %v283 = vpack.c.bf16 0.0, %v281
  %284 = vst [vmem:[%s282] sm:$0xf] %v283
  %s285 = scalar_lea.vmem %s0, 496
  %v286 = vld [vmem:[%s285] sm:$0xff]
  %s287 = scalar_lea.vmem %s1, 56
  %v288 = vpack.c.bf16 0.0, %v286
  %289 = vst [vmem:[%s287] sm:$0xf] %v288
  %s290 = scalar_lea.vmem %s0, 304
  %v291 = vld [vmem:[%s290] sm:$0xff]
  %s292 = scalar_lea.vmem %s1, 152
  %v293 = vpack.c.bf16 0.0, %v291
  %294 = vst [vmem:[%s292] sm:$0xf] %v293
  %s295 = scalar_lea.vmem %s0, 112
  %v296 = vld [vmem:[%s295] sm:$0xff]
  %s297 = scalar_lea.vmem %s1, 248
  %v298 = vpack.c.bf16 0.0, %v296
  %299 = vst [vmem:[%s297] sm:$0xf] %v298
  %s300 = scalar_lea.vmem %s0, 432
  %v301 = vld [vmem:[%s300] sm:$0xff]
  %s302 = scalar_lea.vmem %s1, 88
  %v303 = vpack.c.bf16 0.0, %v301
  %304 = vst [vmem:[%s302] sm:$0xf] %v303
  %s305 = scalar_lea.vmem %s0, 240
  %v306 = vld [vmem:[%s305] sm:$0xff]
  %s307 = scalar_lea.vmem %s1, 184
  %v308 = vpack.c.bf16 0.0, %v306
  %309 = vst [vmem:[%s307] sm:$0xf] %v308
  %s310 = scalar_lea.vmem %s0, 48
  %v311 = vld [vmem:[%s310] sm:$0xff]
  %s312 = scalar_lea.vmem %s1, 280
  %v313 = vpack.c.bf16 0.0, %v311
  %314 = vst [vmem:[%s312] sm:$0xf] %v313
  %s315 = scalar_lea.vmem %s0, 568
  %v316 = vld [vmem:[%s315] sm:$0xff]
  %s317 = scalar_lea.vmem %s1, 28
  %v318 = vpack.c.bf16 0.0, %v316
  %319 = vst [vmem:[%s317] sm:$0xf] %v318
  %s320 = scalar_lea.vmem %s0, 376
  %v321 = vld [vmem:[%s320] sm:$0xff]
  %s322 = scalar_lea.vmem %s1, 124
  %v323 = vpack.c.bf16 0.0, %v321
  %324 = vst [vmem:[%s322] sm:$0xf] %v323
  %s325 = scalar_lea.vmem %s0, 184
  %v326 = vld [vmem:[%s325] sm:$0xff]
  %s327 = scalar_lea.vmem %s1, 220
  %v328 = vpack.c.bf16 0.0, %v326
  %329 = vst [vmem:[%s327] sm:$0xf] %v328
  %s330 = scalar_lea.vmem %s0, 504
  %v331 = vld [vmem:[%s330] sm:$0xff]
  %s332 = scalar_lea.vmem %s1, 60
  %v333 = vpack.c.bf16 0.0, %v331
  %334 = vst [vmem:[%s332] sm:$0xf] %v333
  %s335 = scalar_lea.vmem %s0, 312
  %v336 = vld [vmem:[%s335] sm:$0xff]
  %s337 = scalar_lea.vmem %s1, 156
  %v338 = vpack.c.bf16 0.0, %v336
  %339 = vst [vmem:[%s337] sm:$0xf] %v338
  %s340 = scalar_lea.vmem %s0, 120
  %v341 = vld [vmem:[%s340] sm:$0xff]
  %s342 = scalar_lea.vmem %s1, 252
  %v343 = vpack.c.bf16 0.0, %v341
  %344 = vst [vmem:[%s342] sm:$0xf] %v343
  %s345 = scalar_lea.vmem %s0, 440
  %v346 = vld [vmem:[%s345] sm:$0xff]
  %s347 = scalar_lea.vmem %s1, 92
  %v348 = vpack.c.bf16 0.0, %v346
  %349 = vst [vmem:[%s347] sm:$0xf] %v348
  %s350 = scalar_lea.vmem %s0, 248
  %v351 = vld [vmem:[%s350] sm:$0xff]
  %s352 = scalar_lea.vmem %s1, 188
  %v353 = vpack.c.bf16 0.0, %v351
  %354 = vst [vmem:[%s352] sm:$0xf] %v353
  %s355 = scalar_lea.vmem %s0, 56
  %v356 = vld [vmem:[%s355] sm:$0xff]
  %s357 = scalar_lea.vmem %s1, 284
  %v358 = vpack.c.bf16 0.0, %v356
  %359 = vst [vmem:[%s357] sm:$0xf] %v358

// kernel: decoder_forward.6
$region0: #{decoder_forward.6}
  #allocation0 [shape = 'u32[]', space=smem, size = 0x4, offset = 0x4, fixed_abs, tag = 'smem constant byte address 0x4 - core index']
  #allocation1 [shape = 'u32[72,128]{1,0:T(1,128)}', space=vmem, size = 0x9000, scoped, tag = 'internal scratch']
  %s0 = inlined_call_operand.vmem [shape: bf16[50,576], index: 0, kind: input, shape index: {}]
  %s1 = inlined_call_operand.vmem [shape: bf16[576,128], index: 1, kind: input, shape index: {}]
  %s2 = inlined_call_operand.vmem [shape: f32[1,128], index: 2, kind: input, shape index: {}]
  %s3 = inlined_call_operand.vmem [shape: f32[50,128], index: 3, kind: output, shape index: {}]
  %s4 = sld [smem:[#allocation0]]
  $region22: #{decoder_forward.6} parent=0
    _
  %s6 = ssub.s32 1, %s4
  %s7 = scalar_select 0, %s6, %s4
  // Predicated region
  $region2: #{decoder_forward.6} parent=0 // pred_check
    _
  $region3: #{decoder_forward.6} parent=0 // pred_check_branch
    %9 = sbr.rel (0) target = $region5
  $region4: #{decoder_forward.6} parent=0 // pred_region
    _
  $region5: #{decoder_forward.6} parent=0 // pred_fallthru
    _
  // Predicated region
  $region6: #{decoder_forward.6} parent=0 // pred_check
    _
  $region7: #{decoder_forward.6} parent=0 // pred_check_branch
    %11 = sbr.rel (0) target = $region9
  $region8: #{decoder_forward.6} parent=0 // pred_region
    _
  $region9: #{decoder_forward.6} parent=0 // pred_fallthru
    _
  // Predicated region
  $region10: #{decoder_forward.6} parent=0 // pred_check
    _
  $region11: #{decoder_forward.6} parent=0 // pred_check_branch
    %13 = sbr.rel (0) target = $region13
  $region12: #{decoder_forward.6} parent=0 // pred_region
    _
  $region13: #{decoder_forward.6} parent=0 // pred_fallthru
    _
  %v15 = vld [vmem:[%s0] sm:$0xff]
  %v16 = vld [vmem:[%s0 + $0x8] sm:$0xff]
  %v17 = vld [vmem:[%s0 + $0x10] sm:$0xf]
  %v18 = vld [vmem:[%s0 + $0x14] sm:$0xff]
  %v19 = vld [vmem:[%s0 + $0x1c] sm:$0xff]
  %v20 = vld [vmem:[%s0 + $0x24] sm:$0xf]
  %v21 = vld [vmem:[%s0 + $0x28] sm:$0xff]
  %v22 = vld [vmem:[%s0 + $0x30] sm:$0xff]
  %v23 = vld [vmem:[%s0 + $0x38] sm:$0xf]
  %v24 = vld [vmem:[%s0 + $0x3c] sm:$0xff]
  %v25 = vld [vmem:[%s0 + $0x44] sm:$0xff]
  %v26 = vld [vmem:[%s0 + $0x4c] sm:$0xf]
  %v27 = vld [vmem:[%s0 + $0x50] sm:$0xff]
  %v28 = vld [vmem:[%s0 + $0x58] sm:$0xff]
  %v29 = vld [vmem:[%s0 + $0x60] sm:$0xf]
  %v30 = vld [vmem:[%s0 + $0x64] sm:$0xff]
  %v31 = vld [vmem:[%s0 + $0x6c] sm:$0xff]
  %v32 = vld [vmem:[%s0 + $0x74] sm:$0xf]
  %v33 = vld [vmem:[%s0 + $0x78] sm:$0x11]
  %v34 = vld [vmem:[%s0 + $0x80] sm:$0x11]
  %v35 = vld [vmem:[%s0 + $0x88] sm:$0x1]
  %v36 = vld [vmem:[%s1] sm:$0xf]
  %v37 = vld [vmem:[%s1 + $0x4] sm:$0xf]
  %v38 = vld [vmem:[%s1 + $0x8] sm:$0xf]
  %v39 = vld [vmem:[%s1 + $0xc] sm:$0xf]
  %v40 = vld [vmem:[%s1 + $0x10] sm:$0xf]
  %v41 = vld [vmem:[%s1 + $0x14] sm:$0xf]
  %v42 = vld [vmem:[%s1 + $0x18] sm:$0xf]
  %v43 = vld [vmem:[%s1 + $0x1c] sm:$0xf]
  %v44 = vld [vmem:[%s1 + $0x20] sm:$0xf]
  %v45 = vld [vmem:[%s1 + $0x24] sm:$0xf]
  %v46 = vld [vmem:[%s1 + $0x28] sm:$0xf]
  %v47 = vld [vmem:[%s1 + $0x2c] sm:$0xf]
  %v48 = vld [vmem:[%s1 + $0x30] sm:$0xf]
  %v49 = vld [vmem:[%s1 + $0x34] sm:$0xf]
  %v50 = vld [vmem:[%s1 + $0x38] sm:$0xf]
  %v51 = vld [vmem:[%s1 + $0x3c] sm:$0xf]
  %v52 = vld [vmem:[%s1 + $0x40] sm:$0xf]
  %v53 = vld [vmem:[%s1 + $0x44] sm:$0xf]
  %v54 = vld [vmem:[%s1 + $0x48] sm:$0xf]
  %v55 = vld [vmem:[%s1 + $0x4c] sm:$0xf]
  %v56 = vld [vmem:[%s1 + $0x50] sm:$0xf]
  %v57 = vld [vmem:[%s1 + $0x54] sm:$0xf]
  %v58 = vld [vmem:[%s1 + $0x58] sm:$0xf]
  %v59 = vld [vmem:[%s1 + $0x5c] sm:$0xf]
  %v60 = vld [vmem:[%s1 + $0x60] sm:$0xf]
  %v61 = vld [vmem:[%s1 + $0x64] sm:$0xf]
  %v62 = vld [vmem:[%s1 + $0x68] sm:$0xf]
  %v63 = vld [vmem:[%s1 + $0x6c] sm:$0xf]
  %v64 = vld [vmem:[%s1 + $0x70] sm:$0xf]
  %v65 = vld [vmem:[%s1 + $0x74] sm:$0xf]
  %v66 = vld [vmem:[%s1 + $0x78] sm:$0xf]
  %v67 = vld [vmem:[%s1 + $0x7c] sm:$0xf]
  %v68 = vld [vmem:[%s1 + $0x80] sm:$0xf]
  %v69 = vld [vmem:[%s1 + $0x84] sm:$0xf]
  %v70 = vld [vmem:[%s1 + $0x88] sm:$0xf]
  %v71 = vld [vmem:[%s1 + $0x8c] sm:$0xf]
  %v72 = vld [vmem:[%s1 + $0x90] sm:$0xf]
  %v73 = vld [vmem:[%s1 + $0x94] sm:$0xf]
  %v74 = vld [vmem:[%s1 + $0x98] sm:$0xf]
  %v75 = vld [vmem:[%s1 + $0x9c] sm:$0xf]
  %v76 = vld [vmem:[%s1 + $0xa0] sm:$0xf]
  %v77 = vld [vmem:[%s1 + $0xa4] sm:$0xf]
  %v78 = vld [vmem:[%s1 + $0xa8] sm:$0xf]
  %v79 = vld [vmem:[%s1 + $0xac] sm:$0xf]
  %v80 = vld [vmem:[%s1 + $0xb0] sm:$0xf]
  %v81 = vld [vmem:[%s1 + $0xb4] sm:$0xf]
  %v82 = vld [vmem:[%s1 + $0xb8] sm:$0xf]
  %v83 = vld [vmem:[%s1 + $0xbc] sm:$0xf]
  %v84 = vld [vmem:[%s1 + $0xc0] sm:$0xf]
  %v85 = vld [vmem:[%s1 + $0xc4] sm:$0xf]
  %v86 = vld [vmem:[%s1 + $0xc8] sm:$0xf]
  %v87 = vld [vmem:[%s1 + $0xcc] sm:$0xf]
  %v88 = vld [vmem:[%s1 + $0xd0] sm:$0xf]
  %v89 = vld [vmem:[%s1 + $0xd4] sm:$0xf]
  %v90 = vld [vmem:[%s1 + $0xd8] sm:$0xf]
  %v91 = vld [vmem:[%s1 + $0xdc] sm:$0xf]
  %v92 = vld [vmem:[%s1 + $0xe0] sm:$0xf]
  %v93 = vld [vmem:[%s1 + $0xe4] sm:$0xf]
  %v94 = vld [vmem:[%s1 + $0xe8] sm:$0xf]
  %v95 = vld [vmem:[%s1 + $0xec] sm:$0xf]
  %v96 = vld [vmem:[%s1 + $0xf0] sm:$0xf]
  %v97 = vld [vmem:[%s1 + $0xf4] sm:$0xf]
  %v98 = vld [vmem:[%s1 + $0xf8] sm:$0xf]
  %v99 = vld [vmem:[%s1 + $0xfc] sm:$0xf]
  %v100 = vld [vmem:[%s1 + $0x100] sm:$0xf]
  %v101 = vld [vmem:[%s1 + $0x104] sm:$0xf]
  %v102 = vld [vmem:[%s1 + $0x108] sm:$0xf]
  %v103 = vld [vmem:[%s1 + $0x10c] sm:$0xf]
  %v104 = vld [vmem:[%s1 + $0x110] sm:$0xf]
  %v105 = vld [vmem:[%s1 + $0x114] sm:$0xf]
  %v106 = vld [vmem:[%s1 + $0x118] sm:$0xf]
  %v107 = vld [vmem:[%s1 + $0x11c] sm:$0xf]
  %v108 = vld [vmem:[%s2] sm:$0x1]
  %v110 = vperm.slane %v108, 0
  %v133 = vunpack.c.l.b16 %v15
  %v134 = vunpack.c.h.b16 %v15
  %v135 = vunpack.c.l.b16 %v16
  %v136 = vunpack.c.h.b16 %v16
  %v137 = vunpack.c.l.b16 %v17
  %v138 = vunpack.c.l.b16 %v18
  %v139 = vunpack.c.h.b16 %v18
  %v140 = vunpack.c.l.b16 %v19
  %v141 = vunpack.c.h.b16 %v19
  %v142 = vunpack.c.l.b16 %v20
  %v143 = vunpack.c.l.b16 %v21
  %v144 = vunpack.c.h.b16 %v21
  %v145 = vunpack.c.l.b16 %v22
  %v146 = vunpack.c.h.b16 %v22
  %v147 = vunpack.c.l.b16 %v23
  %v148 = vunpack.c.l.b16 %v24
  %v149 = vunpack.c.h.b16 %v24
  %v150 = vunpack.c.l.b16 %v25
  %v151 = vunpack.c.h.b16 %v25
  %v152 = vunpack.c.l.b16 %v26
  %v153 = vunpack.c.l.b16 %v27
  %v154 = vunpack.c.h.b16 %v27
  %v155 = vunpack.c.l.b16 %v28
  %v156 = vunpack.c.h.b16 %v28
  %v157 = vunpack.c.l.b16 %v29
  %v158 = vunpack.c.l.b16 %v30
  %v159 = vunpack.c.h.b16 %v30
  %v160 = vunpack.c.l.b16 %v31
  %v161 = vunpack.c.h.b16 %v31
  %v162 = vunpack.c.l.b16 %v32
  %v163 = vunpack.c.l.b16 %v33
  %v164 = vunpack.c.h.b16 %v33
  %v165 = vunpack.c.l.b16 %v34
  %v166 = vunpack.c.h.b16 %v34
  %v167 = vunpack.c.l.b16 %v35
  %v168 = vpack.c.b16 %v138, %v133
  %v169 = vpack.c.b16 %v139, %v134
  %v170 = vpack.c.b16 %v140, %v135
  %v171 = vpack.c.b16 %v141, %v136
  %v172 = vpack.c.b16 %v142, %v137
  %v173 = vpack.c.b16 %v148, %v143
  %v174 = vpack.c.b16 %v149, %v144
  %v175 = vpack.c.b16 %v150, %v145
  %v176 = vpack.c.b16 %v151, %v146
  %v177 = vpack.c.b16 %v152, %v147
  %v178 = vpack.c.b16 %v158, %v153
  %v179 = vpack.c.b16 %v159, %v154
  %v180 = vpack.c.b16 %v160, %v155
  %v181 = vpack.c.b16 %v161, %v156
  %v182 = vpack.c.b16 %v162, %v157
  %v183 = vpack.c.b16 %v163, %v163
  %v184 = vpack.c.b16 %v164, %v164
  %v185 = vpack.c.b16 %v165, %v165
  %v186 = vpack.c.b16 %v166, %v166
  %v187 = vpack.c.b16 %v167, %v167
  %v276 = vunpack.c.l.b16 %v36
  %v277 = vunpack.c.l.b16 %v37
  %v278 = vunpack.c.l.b16 %v38
  %v279 = vunpack.c.l.b16 %v39
  %v280 = vunpack.c.l.b16 %v40
  %v281 = vunpack.c.l.b16 %v41
  %v282 = vunpack.c.l.b16 %v42
  %v283 = vunpack.c.l.b16 %v43
  %v284 = vunpack.c.l.b16 %v44
  %v285 = vunpack.c.l.b16 %v45
  %v286 = vunpack.c.l.b16 %v46
  %v287 = vunpack.c.l.b16 %v47
  %v288 = vunpack.c.l.b16 %v48
  %v289 = vunpack.c.l.b16 %v49
  %v290 = vunpack.c.l.b16 %v50
  %v291 = vunpack.c.l.b16 %v51
  %v292 = vunpack.c.l.b16 %v52
  %v293 = vunpack.c.l.b16 %v53
  %v294 = vunpack.c.l.b16 %v54
  %v295 = vunpack.c.l.b16 %v55
  %v296 = vunpack.c.l.b16 %v56
  %v297 = vunpack.c.l.b16 %v57
  %v298 = vunpack.c.l.b16 %v58
  %v299 = vunpack.c.l.b16 %v59
  %v300 = vunpack.c.l.b16 %v60
  %v301 = vunpack.c.l.b16 %v61
  %v302 = vunpack.c.l.b16 %v62
  %v303 = vunpack.c.l.b16 %v63
  %v304 = vunpack.c.l.b16 %v64
  %v305 = vunpack.c.l.b16 %v65
  %v306 = vunpack.c.l.b16 %v66
  %v307 = vunpack.c.l.b16 %v67
  %v308 = vunpack.c.l.b16 %v68
  %v309 = vunpack.c.l.b16 %v69
  %v310 = vunpack.c.l.b16 %v70
  %v311 = vunpack.c.l.b16 %v71
  %v312 = vunpack.c.l.b16 %v72
  %v313 = vunpack.c.l.b16 %v73
  %v314 = vunpack.c.l.b16 %v74
  %v315 = vunpack.c.l.b16 %v75
  %v316 = vunpack.c.l.b16 %v76
  %v317 = vunpack.c.l.b16 %v77
  %v318 = vunpack.c.l.b16 %v78
  %v319 = vunpack.c.l.b16 %v79
  %v320 = vunpack.c.l.b16 %v80
  %v321 = vunpack.c.l.b16 %v81
  %v322 = vunpack.c.l.b16 %v82
  %v323 = vunpack.c.l.b16 %v83
  %v324 = vunpack.c.l.b16 %v84
  %v325 = vunpack.c.l.b16 %v85
  %v326 = vunpack.c.l.b16 %v86
  %v327 = vunpack.c.l.b16 %v87
  %v328 = vunpack.c.l.b16 %v88
  %v329 = vunpack.c.l.b16 %v89
  %v330 = vunpack.c.l.b16 %v90
  %v331 = vunpack.c.l.b16 %v91
  %v332 = vunpack.c.l.b16 %v92
  %v333 = vunpack.c.l.b16 %v93
  %v334 = vunpack.c.l.b16 %v94
  %v335 = vunpack.c.l.b16 %v95
  %v336 = vunpack.c.l.b16 %v96
  %v337 = vunpack.c.l.b16 %v97
  %v338 = vunpack.c.l.b16 %v98
  %v339 = vunpack.c.l.b16 %v99
  %v340 = vunpack.c.l.b16 %v100
  %v341 = vunpack.c.l.b16 %v101
  %v342 = vunpack.c.l.b16 %v102
  %v343 = vunpack.c.l.b16 %v103
  %v344 = vunpack.c.l.b16 %v104
  %v345 = vunpack.c.l.b16 %v105
  %v346 = vunpack.c.l.b16 %v106
  %v347 = vunpack.c.l.b16 %v107
  %v348 = vpack.c.b16 %v277, %v276
  %v349 = vpack.c.b16 %v279, %v278
  %v350 = vpack.c.b16 %v281, %v280
  %v351 = vpack.c.b16 %v283, %v282
  %v352 = vpack.c.b16 %v285, %v284
  %v353 = vpack.c.b16 %v287, %v286
  %v354 = vpack.c.b16 %v289, %v288
  %v355 = vpack.c.b16 %v291, %v290
  %v356 = vpack.c.b16 %v293, %v292
  %v357 = vpack.c.b16 %v295, %v294
  %v358 = vpack.c.b16 %v297, %v296
  %v359 = vpack.c.b16 %v299, %v298
  %v360 = vpack.c.b16 %v301, %v300
  %v361 = vpack.c.b16 %v303, %v302
  %v362 = vpack.c.b16 %v305, %v304
  %v363 = vpack.c.b16 %v307, %v306
  %v364 = vpack.c.b16 %v309, %v308
  %v365 = vpack.c.b16 %v311, %v310
  %v366 = vpack.c.b16 %v313, %v312
  %v367 = vpack.c.b16 %v315, %v314
  %v368 = vpack.c.b16 %v317, %v316
  %v369 = vpack.c.b16 %v319, %v318
  %v370 = vpack.c.b16 %v321, %v320
  %v371 = vpack.c.b16 %v323, %v322
  %v372 = vpack.c.b16 %v325, %v324
  %v373 = vpack.c.b16 %v327, %v326
  %v374 = vpack.c.b16 %v329, %v328
  %v375 = vpack.c.b16 %v331, %v330
  %v376 = vpack.c.b16 %v333, %v332
  %v377 = vpack.c.b16 %v335, %v334
  %v378 = vpack.c.b16 %v337, %v336
  %v379 = vpack.c.b16 %v339, %v338
  %v380 = vpack.c.b16 %v341, %v340
  %v381 = vpack.c.b16 %v343, %v342
  %v382 = vpack.c.b16 %v345, %v344
  %v383 = vpack.c.b16 %v347, %v346
  %vm420 = vcmask 523264
  %v422 = vsel %vm420, %v172, 0
  %v425 = vsel %vm420, %v177, 0
  %v428 = vsel %vm420, %v182, 0
  %v431 = vsel %vm420, %v187, 0
  %433 = vmatpush.bf16.msra.mxu0 %v355
  %434 = vmatpush.bf16.msra.mxu0 %v354
  %435 = vmatpush.bf16.msra.mxu0 %v353
  %436 = vmatpush.bf16.msra.mxu0 %v352
  %437 = vmatpush.bf16.msra.mxu0 %v351
  %438 = vmatpush.bf16.msra.mxu0 %v350
  %439 = vmatpush.bf16.msra.mxu0 %v349
  %440 = vmatpush.bf16.msra.mxu0 %v348
  %441 = vmatmul.bf16.gmra.mxu0 %v168
  %v442 = vpop.f32.mrf.mxu0
  %v443 = vadd.f32 %v110, %v442
  %v444 = vpop.f32.mrf.mxu0
  %v445 = vadd.f32 %v110, %v444
  %446 = vmatmul.bf16.gmra.mxu0 %v173
  %v447 = vpop.f32.mrf.mxu0
  %v448 = vadd.f32 %v110, %v447
  %v449 = vpop.f32.mrf.mxu0
  %v450 = vadd.f32 %v110, %v449
  %451 = vmatmul.bf16.gmra.mxu0 %v178
  %v452 = vpop.f32.mrf.mxu0
  %v453 = vadd.f32 %v110, %v452
  %v454 = vpop.f32.mrf.mxu0
  %v455 = vadd.f32 %v110, %v454
  %456 = vmatmul.bf16.gmra.mxu0 %v183
  %v457 = vpop.f32.mrf.mxu0
  %v458 = vadd.f32 %v110, %v457
  %v459 = vpop.f32.mrf.mxu0
  %460 = vdwg.mxu0
  %461 = vmatpush.bf16.msra.mxu0 %v363
  %462 = vmatpush.bf16.msra.mxu0 %v362
  %463 = vmatpush.bf16.msra.mxu0 %v361
  %464 = vmatpush.bf16.msra.mxu0 %v360
  %465 = vmatpush.bf16.msra.mxu0 %v359
  %466 = vmatpush.bf16.msra.mxu0 %v358
  %467 = vmatpush.bf16.msra.mxu0 %v357
  %468 = vmatpush.bf16.msra.mxu0 %v356
  %469 = vmatmul.bf16.gmra.mxu0 %v169
  %v470 = vpop.f32.mrf.mxu0
  %v471 = vadd.f32 %v443, %v470
  %v472 = vpop.f32.mrf.mxu0
  %v473 = vadd.f32 %v445, %v472
  %474 = vmatmul.bf16.gmra.mxu0 %v174
  %v475 = vpop.f32.mrf.mxu0
  %v476 = vadd.f32 %v448, %v475
  %v477 = vpop.f32.mrf.mxu0
  %v478 = vadd.f32 %v450, %v477
  %479 = vmatmul.bf16.gmra.mxu0 %v179
  %v480 = vpop.f32.mrf.mxu0
  %v481 = vadd.f32 %v453, %v480
  %v482 = vpop.f32.mrf.mxu0
  %v483 = vadd.f32 %v455, %v482
  %484 = vmatmul.bf16.gmra.mxu0 %v184
  %v485 = vpop.f32.mrf.mxu0
  %v486 = vadd.f32 %v458, %v485
  %v487 = vpop.f32.mrf.mxu0
  %488 = vdwg.mxu0
  %489 = vmatpush.bf16.msra.mxu0 %v371
  %490 = vmatpush.bf16.msra.mxu0 %v370
  %491 = vmatpush.bf16.msra.mxu0 %v369
  %492 = vmatpush.bf16.msra.mxu0 %v368
  %493 = vmatpush.bf16.msra.mxu0 %v367
  %494 = vmatpush.bf16.msra.mxu0 %v366
  %495 = vmatpush.bf16.msra.mxu0 %v365
  %496 = vmatpush.bf16.msra.mxu0 %v364
  %497 = vmatmul.bf16.gmra.mxu0 %v170
  %v498 = vpop.f32.mrf.mxu0
  %v499 = vadd.f32 %v471, %v498
  %v500 = vpop.f32.mrf.mxu0
  %v501 = vadd.f32 %v473, %v500
  %502 = vmatmul.bf16.gmra.mxu0 %v175
  %v503 = vpop.f32.mrf.mxu0
  %v504 = vadd.f32 %v476, %v503
  %v505 = vpop.f32.mrf.mxu0
  %v506 = vadd.f32 %v478, %v505
  %507 = vmatmul.bf16.gmra.mxu0 %v180
  %v508 = vpop.f32.mrf.mxu0
  %v509 = vadd.f32 %v481, %v508
  %v510 = vpop.f32.mrf.mxu0
  %v511 = vadd.f32 %v483, %v510
  %512 = vmatmul.bf16.gmra.mxu0 %v185
  %v513 = vpop.f32.mrf.mxu0
  %v514 = vadd.f32 %v486, %v513
  %v515 = vpop.f32.mrf.mxu0
  %516 = vdwg.mxu0
  %517 = vmatpush.bf16.msra.mxu0 %v379
  %518 = vmatpush.bf16.msra.mxu0 %v378
  %519 = vmatpush.bf16.msra.mxu0 %v377
  %520 = vmatpush.bf16.msra.mxu0 %v376
  %521 = vmatpush.bf16.msra.mxu0 %v375
  %522 = vmatpush.bf16.msra.mxu0 %v374
  %523 = vmatpush.bf16.msra.mxu0 %v373
  %524 = vmatpush.bf16.msra.mxu0 %v372
  %525 = vmatmul.bf16.gmra.mxu0 %v171
  %v526 = vpop.f32.mrf.mxu0
  %v527 = vadd.f32 %v499, %v526
  %v528 = vpop.f32.mrf.mxu0
  %v529 = vadd.f32 %v501, %v528
  %530 = vmatmul.bf16.gmra.mxu0 %v176
  %v531 = vpop.f32.mrf.mxu0
  %v532 = vadd.f32 %v504, %v531
  %v533 = vpop.f32.mrf.mxu0
  %v534 = vadd.f32 %v506, %v533
  %535 = vmatmul.bf16.gmra.mxu0 %v181
  %v536 = vpop.f32.mrf.mxu0
  %v537 = vadd.f32 %v509, %v536
  %v538 = vpop.f32.mrf.mxu0
  %v539 = vadd.f32 %v511, %v538
  %540 = vmatmul.bf16.gmra.mxu0 %v186
  %v541 = vpop.f32.mrf.mxu0
  %v542 = vadd.f32 %v514, %v541
  %v543 = vpop.f32.mrf.mxu0
  %544 = vdwg.mxu0
  %545 = vmatpush.bf16.msra.mxu0 0
  %546 = vmatpush.bf16.msra.mxu0 0
  %547 = vmatpush.bf16.msra.mxu0 0
  %548 = vmatpush.bf16.msra.mxu0 0
  %549 = vmatpush.bf16.msra.mxu0 %v383
  %550 = vmatpush.bf16.msra.mxu0 %v382
  %551 = vmatpush.bf16.msra.mxu0 %v381
  %552 = vmatpush.bf16.msra.mxu0 %v380
  %553 = vmatmul.bf16.gmra.mxu0 %v422
  %v554 = vpop.f32.mrf.mxu0
  %v555 = vadd.f32 %v527, %v554
  %v556 = vpop.f32.mrf.mxu0
  %v557 = vadd.f32 %v529, %v556
  %558 = vmatmul.bf16.gmra.mxu0 %v425
  %v559 = vpop.f32.mrf.mxu0
  %v560 = vadd.f32 %v532, %v559
  %v561 = vpop.f32.mrf.mxu0
  %v562 = vadd.f32 %v534, %v561
  %563 = vmatmul.bf16.gmra.mxu0 %v428
  %v564 = vpop.f32.mrf.mxu0
  %v565 = vadd.f32 %v537, %v564
  %v566 = vpop.f32.mrf.mxu0
  %v567 = vadd.f32 %v539, %v566
  %568 = vmatmul.bf16.gmra.mxu0 %v431
  %v569 = vpop.f32.mrf.mxu0
  %v570 = vadd.f32 %v542, %v569
  %v571 = vpop.f32.mrf.mxu0
  %572 = vdwg.mxu0
  %v573 = vmax.f32 %v555, 0.0
  %v574 = vmax.f32 %v557, 0.0
  %v575 = vmax.f32 %v560, 0.0
  %v576 = vmax.f32 %v562, 0.0
  %v577 = vmax.f32 %v565, 0.0
  %v578 = vmax.f32 %v567, 0.0
  %v579 = vmax.f32 %v570, 0.0
  %580 = vst [vmem:[%s3] sm:$0xff] %v573
  %581 = vst [vmem:[%s3 + $0x8] sm:$0xff] %v574
  %582 = vst [vmem:[%s3 + $0x10] sm:$0xff] %v575
  %583 = vst [vmem:[%s3 + $0x18] sm:$0xff] %v576
  %584 = vst [vmem:[%s3 + $0x20] sm:$0xff] %v577
  %585 = vst [vmem:[%s3 + $0x28] sm:$0xff] %v578
  %586 = vst [vmem:[%s3 + $0x30] sm:$0x3] %v579
  // Predicated region
  $region14: #{decoder_forward.6} parent=0 // pred_check
    _
  $region15: #{decoder_forward.6} parent=0 // pred_check_branch
    %588 = sbr.rel (0) target = $region17
  $region16: #{decoder_forward.6} parent=0 // pred_region
    _
  $region17: #{decoder_forward.6} parent=0 // pred_fallthru
    _
  // Predicated region
  $region18: #{decoder_forward.6} parent=0 // pred_check
    _
  $region19: #{decoder_forward.6} parent=0 // pred_check_branch
    %590 = sbr.rel (0) target = $region21
  $region20: #{decoder_forward.6} parent=0 // pred_region
    _
  $region21: #{decoder_forward.6} parent=0 // pred_fallthru
    _

// kernel: tile.20
$region0: #{tile.20}
  #allocation0 [shape = 's32[1]{0}', space=sflag, size = 0x4, scoped, tag = 'scoped memory for tile.20']
  %s0 = inlined_call_operand.vmem [shape: f32[64], index: 0, kind: input, shape index: {}]
  %s1 = inlined_call_operand.vmem [shape: f32[4,64], index: 1, kind: output, shape index: {}]
  // Predicated region
  $region2: #{tile.20} parent=0 // pred_check
    _
  $region3: #{tile.20} parent=0 // pred_check_branch
    %3 = sbr.rel (0) target = $region5
  $region4: #{tile.20} parent=0 // pred_region
    _
  $region5: #{tile.20} parent=0 // pred_fallthru
    _
  %v4 = vld [vmem:[%s0] ss:$0 sm:$0xff]
  %5 = vst [vmem:[%s1] sm:$0xf] %v4

// kernel: tile.21
$region0: #{tile.21}
  %s0 = inlined_call_operand.vmem [shape: f32[4,64], index: 0, kind: input, shape index: {}]
  %s1 = inlined_call_operand.vmem [shape: f32[1,256], index: 1, kind: output, shape index: {}]
  $region1: #{tile.21} parent=0
    #allocation0 [shape = 'u8[8192]{0}', space=vmem, size = 0x2000, scoped, tag = 'scoped mem for output reshape']
    #allocation1 [shape = 'u8[4096]{0}', space=vmem, size = 0x1000, scoped, tag = 'scoped mem for input reshape']
    %s3 = ssub.s32 16, 1
    %v4 = vld [vmem:[%s0] sm:%s3]
    %5 = vst [vmem:[#allocation1] sm:%s3] %v4
    %s6 = smov 3
    %v7 = vld [vmem:[#allocation1] ss:$2 sm:%s6]
    %vm8 = vcmask 523264
    %9 = vst.msk [vmem:[#allocation0] ss:$8 sm:$0x3] %vm8, %v7
    %s10 = scalar_lea.vmem [#allocation1], 1
    %s11 = smov 3
    %v12 = vld [vmem:[%s10] ss:$2 sm:%s11]
    %13 = vrot.lane.b32.xlu0 %v12, 64
    %v14 = vpop.permute.xlu0 %13
    %vm15 = vcmask 1048064
    %16 = vst.msk [vmem:[#allocation0] ss:$8 sm:$0x3] %vm15, %v14
    %s18 = ssub.s32 2, 1
    %v19 = vld [vmem:[#allocation0] sm:%s18]
    %s21 = ssub.s32 2, 1
    %22 = vst [vmem:[%s1] sm:%s21] %v19
    %s23 = scalar_lea.vmem [#allocation0], 8
    %v24 = vld [vmem:[%s23] sm:%s18]
    %s26 = ssub.s32 2, 1
    %s27 = scalar_lea.vmem %s1, 1
    %28 = vst [vmem:[%s27] sm:%s26] %v24

// kernel: decoder_forward.7
$region0: #{decoder_forward.7}
  #allocation0 [shape = 'u32[]', space=smem, size = 0x4, offset = 0x4, fixed_abs, tag = 'smem constant byte address 0x4 - core index']
  #allocation1 [shape = 'u32[72,128]{1,0:T(1,128)}', space=vmem, size = 0x9000, scoped, tag = 'internal scratch']
  %s0 = inlined_call_operand.vmem [shape: bf16[72,512], index: 0, kind: input, shape index: {}]
  %s1 = inlined_call_operand.vmem [shape: bf16[512,256], index: 1, kind: input, shape index: {}]
  %s2 = inlined_call_operand.vmem [shape: f32[1,256], index: 2, kind: input, shape index: {}]
  %s3 = inlined_call_operand.vmem [shape: f32[72,256], index: 3, kind: output, shape index: {}]
  %s4 = sld [smem:[#allocation0]]
  $region22: #{decoder_forward.7} parent=0
    _
  %s6 = ssub.s32 1, %s4
  %s7 = scalar_select 0, %s6, %s4
  // Predicated region
  $region2: #{decoder_forward.7} parent=0 // pred_check
    _
  $region3: #{decoder_forward.7} parent=0 // pred_check_branch
    %9 = sbr.rel (0) target = $region5
  $region4: #{decoder_forward.7} parent=0 // pred_region
    _
  $region5: #{decoder_forward.7} parent=0 // pred_fallthru
    _
  // Predicated region
  $region6: #{decoder_forward.7} parent=0 // pred_check
    _
  $region7: #{decoder_forward.7} parent=0 // pred_check_branch
    %11 = sbr.rel (0) target = $region9
  $region8: #{decoder_forward.7} parent=0 // pred_region
    _
  $region9: #{decoder_forward.7} parent=0 // pred_fallthru
    _
  // Predicated region
  $region10: #{decoder_forward.7} parent=0 // pred_check
    _
  $region11: #{decoder_forward.7} parent=0 // pred_check_branch
    %13 = sbr.rel (0) target = $region13
  $region12: #{decoder_forward.7} parent=0 // pred_region
    _
  $region13: #{decoder_forward.7} parent=0 // pred_fallthru
    _
  %v14 = vld [vmem:[%s0] sm:$0xff]
  %v15 = vld [vmem:[%s0 + $0x8] sm:$0xff]
  %v16 = vld [vmem:[%s0 + $0x10] sm:$0xff]
  %v17 = vld [vmem:[%s0 + $0x18] sm:$0xff]
  %v18 = vld [vmem:[%s0 + $0x20] sm:$0xff]
  %v19 = vld [vmem:[%s0 + $0x28] sm:$0xff]
  %v20 = vld [vmem:[%s0 + $0x30] sm:$0xff]
  %v21 = vld [vmem:[%s0 + $0x38] sm:$0xff]
  %v22 = vld [vmem:[%s0 + $0x40] sm:$0xff]
  %v23 = vld [vmem:[%s0 + $0x48] sm:$0xff]
  %v24 = vld [vmem:[%s0 + $0x50] sm:$0xff]
  %v25 = vld [vmem:[%s0 + $0x58] sm:$0xff]
  %v26 = vld [vmem:[%s0 + $0x60] sm:$0xff]
  %v27 = vld [vmem:[%s0 + $0x68] sm:$0xff]
  %v28 = vld [vmem:[%s0 + $0x70] sm:$0xff]
  %v29 = vld [vmem:[%s0 + $0x78] sm:$0xff]
  %v30 = vld [vmem:[%s0 + $0x80] sm:$0xff]
  %v31 = vld [vmem:[%s0 + $0x88] sm:$0xff]
  %v32 = vld [vmem:[%s1] sm:$0xff]
  %v33 = vld [vmem:[%s1 + $0x8] sm:$0xff]
  %v34 = vld [vmem:[%s1 + $0x10] sm:$0xff]
  %v35 = vld [vmem:[%s1 + $0x18] sm:$0xff]
  %v36 = vld [vmem:[%s1 + $0x20] sm:$0xff]
  %v37 = vld [vmem:[%s1 + $0x28] sm:$0xff]
  %v38 = vld [vmem:[%s1 + $0x30] sm:$0xff]
  %v39 = vld [vmem:[%s1 + $0x38] sm:$0xff]
  %v40 = vld [vmem:[%s1 + $0x40] sm:$0xff]
  %v41 = vld [vmem:[%s1 + $0x48] sm:$0xff]
  %v42 = vld [vmem:[%s1 + $0x50] sm:$0xff]
  %v43 = vld [vmem:[%s1 + $0x58] sm:$0xff]
  %v44 = vld [vmem:[%s1 + $0x60] sm:$0xff]
  %v45 = vld [vmem:[%s1 + $0x68] sm:$0xff]
  %v46 = vld [vmem:[%s1 + $0x70] sm:$0xff]
  %v47 = vld [vmem:[%s1 + $0x78] sm:$0xff]
  %v48 = vld [vmem:[%s1 + $0x80] sm:$0xff]
  %v49 = vld [vmem:[%s1 + $0x88] sm:$0xff]
  %v50 = vld [vmem:[%s1 + $0x90] sm:$0xff]
  %v51 = vld [vmem:[%s1 + $0x98] sm:$0xff]
  %v52 = vld [vmem:[%s1 + $0xa0] sm:$0xff]
  %v53 = vld [vmem:[%s1 + $0xa8] sm:$0xff]
  %v54 = vld [vmem:[%s1 + $0xb0] sm:$0xff]
  %v55 = vld [vmem:[%s1 + $0xb8] sm:$0xff]
  %v56 = vld [vmem:[%s1 + $0xc0] sm:$0xff]
  %v57 = vld [vmem:[%s1 + $0xc8] sm:$0xff]
  %v58 = vld [vmem:[%s1 + $0xd0] sm:$0xff]
  %v59 = vld [vmem:[%s1 + $0xd8] sm:$0xff]
  %v60 = vld [vmem:[%s1 + $0xe0] sm:$0xff]
  %v61 = vld [vmem:[%s1 + $0xe8] sm:$0xff]
  %v62 = vld [vmem:[%s1 + $0xf0] sm:$0xff]
  %v63 = vld [vmem:[%s1 + $0xf8] sm:$0xff]
  %v64 = vld [vmem:[%s1 + $0x100] sm:$0xff]
  %v65 = vld [vmem:[%s1 + $0x108] sm:$0xff]
  %v66 = vld [vmem:[%s1 + $0x110] sm:$0xff]
  %v67 = vld [vmem:[%s1 + $0x118] sm:$0xff]
  %v68 = vld [vmem:[%s1 + $0x120] sm:$0xff]
  %v69 = vld [vmem:[%s1 + $0x128] sm:$0xff]
  %v70 = vld [vmem:[%s1 + $0x130] sm:$0xff]
  %v71 = vld [vmem:[%s1 + $0x138] sm:$0xff]
  %v72 = vld [vmem:[%s1 + $0x140] sm:$0xff]
  %v73 = vld [vmem:[%s1 + $0x148] sm:$0xff]
  %v74 = vld [vmem:[%s1 + $0x150] sm:$0xff]
  %v75 = vld [vmem:[%s1 + $0x158] sm:$0xff]
  %v76 = vld [vmem:[%s1 + $0x160] sm:$0xff]
  %v77 = vld [vmem:[%s1 + $0x168] sm:$0xff]
  %v78 = vld [vmem:[%s1 + $0x170] sm:$0xff]
  %v79 = vld [vmem:[%s1 + $0x178] sm:$0xff]
  %v80 = vld [vmem:[%s1 + $0x180] sm:$0xff]
  %v81 = vld [vmem:[%s1 + $0x188] sm:$0xff]
  %v82 = vld [vmem:[%s1 + $0x190] sm:$0xff]
  %v83 = vld [vmem:[%s1 + $0x198] sm:$0xff]
  %v84 = vld [vmem:[%s1 + $0x1a0] sm:$0xff]
  %v85 = vld [vmem:[%s1 + $0x1a8] sm:$0xff]
  %v86 = vld [vmem:[%s1 + $0x1b0] sm:$0xff]
  %v87 = vld [vmem:[%s1 + $0x1b8] sm:$0xff]
  %v88 = vld [vmem:[%s1 + $0x1c0] sm:$0xff]
  %v89 = vld [vmem:[%s1 + $0x1c8] sm:$0xff]
  %v90 = vld [vmem:[%s1 + $0x1d0] sm:$0xff]
  %v91 = vld [vmem:[%s1 + $0x1d8] sm:$0xff]
  %v92 = vld [vmem:[%s1 + $0x1e0] sm:$0xff]
  %v93 = vld [vmem:[%s1 + $0x1e8] sm:$0xff]
  %v94 = vld [vmem:[%s1 + $0x1f0] sm:$0xff]
  %v95 = vld [vmem:[%s1 + $0x1f8] sm:$0xff]
  %v96 = vld [vmem:[%s2] sm:$0x3]
  %v98 = vperm.slane %v96, 0
  %v99 = vperm.slane %v96, 1
  %v120 = vunpack.c.l.b16 %v14
  %v121 = vunpack.c.h.b16 %v14
  %v122 = vunpack.c.l.b16 %v15
  %v123 = vunpack.c.h.b16 %v15
  %v124 = vunpack.c.l.b16 %v16
  %v125 = vunpack.c.h.b16 %v16
  %v126 = vunpack.c.l.b16 %v17
  %v127 = vunpack.c.h.b16 %v17
  %v128 = vunpack.c.l.b16 %v18
  %v129 = vunpack.c.h.b16 %v18
  %v130 = vunpack.c.l.b16 %v19
  %v131 = vunpack.c.h.b16 %v19
  %v132 = vunpack.c.l.b16 %v20
  %v133 = vunpack.c.h.b16 %v20
  %v134 = vunpack.c.l.b16 %v21
  %v135 = vunpack.c.h.b16 %v21
  %v136 = vunpack.c.l.b16 %v22
  %v137 = vunpack.c.h.b16 %v22
  %v138 = vunpack.c.l.b16 %v23
  %v139 = vunpack.c.h.b16 %v23
  %v140 = vunpack.c.l.b16 %v24
  %v141 = vunpack.c.h.b16 %v24
  %v142 = vunpack.c.l.b16 %v25
  %v143 = vunpack.c.h.b16 %v25
  %v144 = vunpack.c.l.b16 %v26
  %v145 = vunpack.c.h.b16 %v26
  %v146 = vunpack.c.l.b16 %v27
  %v147 = vunpack.c.h.b16 %v27
  %v148 = vunpack.c.l.b16 %v28
  %v149 = vunpack.c.h.b16 %v28
  %v150 = vunpack.c.l.b16 %v29
  %v151 = vunpack.c.h.b16 %v29
  %v152 = vunpack.c.l.b16 %v30
  %v153 = vunpack.c.h.b16 %v30
  %v154 = vunpack.c.l.b16 %v31
  %v155 = vunpack.c.h.b16 %v31
  %v156 = vpack.c.b16 %v124, %v120
  %v157 = vpack.c.b16 %v125, %v121
  %v158 = vpack.c.b16 %v126, %v122
  %v159 = vpack.c.b16 %v127, %v123
  %v160 = vpack.c.b16 %v132, %v128
  %v161 = vpack.c.b16 %v133, %v129
  %v162 = vpack.c.b16 %v134, %v130
  %v163 = vpack.c.b16 %v135, %v131
  %v164 = vpack.c.b16 %v140, %v136
  %v165 = vpack.c.b16 %v141, %v137
  %v166 = vpack.c.b16 %v142, %v138
  %v167 = vpack.c.b16 %v143, %v139
  %v168 = vpack.c.b16 %v148, %v144
  %v169 = vpack.c.b16 %v149, %v145
  %v170 = vpack.c.b16 %v150, %v146
  %v171 = vpack.c.b16 %v151, %v147
  %v172 = vpack.c.b16 %v152, %v152
  %v173 = vpack.c.b16 %v153, %v153
  %v174 = vpack.c.b16 %v154, %v154
  %v175 = vpack.c.b16 %v155, %v155
  %v260 = vunpack.c.l.b16 %v32
  %v261 = vunpack.c.h.b16 %v32
  %v262 = vunpack.c.l.b16 %v33
  %v263 = vunpack.c.h.b16 %v33
  %v264 = vunpack.c.l.b16 %v34
  %v265 = vunpack.c.h.b16 %v34
  %v266 = vunpack.c.l.b16 %v35
  %v267 = vunpack.c.h.b16 %v35
  %v268 = vunpack.c.l.b16 %v36
  %v269 = vunpack.c.h.b16 %v36
  %v270 = vunpack.c.l.b16 %v37
  %v271 = vunpack.c.h.b16 %v37
  %v272 = vunpack.c.l.b16 %v38
  %v273 = vunpack.c.h.b16 %v38
  %v274 = vunpack.c.l.b16 %v39
  %v275 = vunpack.c.h.b16 %v39
  %v276 = vunpack.c.l.b16 %v40
  %v277 = vunpack.c.h.b16 %v40
  %v278 = vunpack.c.l.b16 %v41
  %v279 = vunpack.c.h.b16 %v41
  %v280 = vunpack.c.l.b16 %v42
  %v281 = vunpack.c.h.b16 %v42
  %v282 = vunpack.c.l.b16 %v43
  %v283 = vunpack.c.h.b16 %v43
  %v284 = vunpack.c.l.b16 %v44
  %v285 = vunpack.c.h.b16 %v44
  %v286 = vunpack.c.l.b16 %v45
  %v287 = vunpack.c.h.b16 %v45
  %v288 = vunpack.c.l.b16 %v46
  %v289 = vunpack.c.h.b16 %v46
  %v290 = vunpack.c.l.b16 %v47
  %v291 = vunpack.c.h.b16 %v47
  %v292 = vunpack.c.l.b16 %v48
  %v293 = vunpack.c.h.b16 %v48
  %v294 = vunpack.c.l.b16 %v49
  %v295 = vunpack.c.h.b16 %v49
  %v296 = vunpack.c.l.b16 %v50
  %v297 = vunpack.c.h.b16 %v50
  %v298 = vunpack.c.l.b16 %v51
  %v299 = vunpack.c.h.b16 %v51
  %v300 = vunpack.c.l.b16 %v52
  %v301 = vunpack.c.h.b16 %v52
  %v302 = vunpack.c.l.b16 %v53
  %v303 = vunpack.c.h.b16 %v53
  %v304 = vunpack.c.l.b16 %v54
  %v305 = vunpack.c.h.b16 %v54
  %v306 = vunpack.c.l.b16 %v55
  %v307 = vunpack.c.h.b16 %v55
  %v308 = vunpack.c.l.b16 %v56
  %v309 = vunpack.c.h.b16 %v56
  %v310 = vunpack.c.l.b16 %v57
  %v311 = vunpack.c.h.b16 %v57
  %v312 = vunpack.c.l.b16 %v58
  %v313 = vunpack.c.h.b16 %v58
  %v314 = vunpack.c.l.b16 %v59
  %v315 = vunpack.c.h.b16 %v59
  %v316 = vunpack.c.l.b16 %v60
  %v317 = vunpack.c.h.b16 %v60
  %v318 = vunpack.c.l.b16 %v61
  %v319 = vunpack.c.h.b16 %v61
  %v320 = vunpack.c.l.b16 %v62
  %v321 = vunpack.c.h.b16 %v62
  %v322 = vunpack.c.l.b16 %v63
  %v323 = vunpack.c.h.b16 %v63
  %v324 = vunpack.c.l.b16 %v64
  %v325 = vunpack.c.h.b16 %v64
  %v326 = vunpack.c.l.b16 %v65
  %v327 = vunpack.c.h.b16 %v65
  %v328 = vunpack.c.l.b16 %v66
  %v329 = vunpack.c.h.b16 %v66
  %v330 = vunpack.c.l.b16 %v67
  %v331 = vunpack.c.h.b16 %v67
  %v332 = vunpack.c.l.b16 %v68
  %v333 = vunpack.c.h.b16 %v68
  %v334 = vunpack.c.l.b16 %v69
  %v335 = vunpack.c.h.b16 %v69
  %v336 = vunpack.c.l.b16 %v70
  %v337 = vunpack.c.h.b16 %v70
  %v338 = vunpack.c.l.b16 %v71
  %v339 = vunpack.c.h.b16 %v71
  %v340 = vunpack.c.l.b16 %v72
  %v341 = vunpack.c.h.b16 %v72
  %v342 = vunpack.c.l.b16 %v73
  %v343 = vunpack.c.h.b16 %v73
  %v344 = vunpack.c.l.b16 %v74
  %v345 = vunpack.c.h.b16 %v74
  %v346 = vunpack.c.l.b16 %v75
  %v347 = vunpack.c.h.b16 %v75
  %v348 = vunpack.c.l.b16 %v76
  %v349 = vunpack.c.h.b16 %v76
  %v350 = vunpack.c.l.b16 %v77
  %v351 = vunpack.c.h.b16 %v77
  %v352 = vunpack.c.l.b16 %v78
  %v353 = vunpack.c.h.b16 %v78
  %v354 = vunpack.c.l.b16 %v79
  %v355 = vunpack.c.h.b16 %v79
  %v356 = vunpack.c.l.b16 %v80
  %v357 = vunpack.c.h.b16 %v80
  %v358 = vunpack.c.l.b16 %v81
  %v359 = vunpack.c.h.b16 %v81
  %v360 = vunpack.c.l.b16 %v82
  %v361 = vunpack.c.h.b16 %v82
  %v362 = vunpack.c.l.b16 %v83
  %v363 = vunpack.c.h.b16 %v83
  %v364 = vunpack.c.l.b16 %v84
  %v365 = vunpack.c.h.b16 %v84
  %v366 = vunpack.c.l.b16 %v85
  %v367 = vunpack.c.h.b16 %v85
  %v368 = vunpack.c.l.b16 %v86
  %v369 = vunpack.c.h.b16 %v86
  %v370 = vunpack.c.l.b16 %v87
  %v371 = vunpack.c.h.b16 %v87
  %v372 = vunpack.c.l.b16 %v88
  %v373 = vunpack.c.h.b16 %v88
  %v374 = vunpack.c.l.b16 %v89
  %v375 = vunpack.c.h.b16 %v89
  %v376 = vunpack.c.l.b16 %v90
  %v377 = vunpack.c.h.b16 %v90
  %v378 = vunpack.c.l.b16 %v91
  %v379 = vunpack.c.h.b16 %v91
  %v380 = vunpack.c.l.b16 %v92
  %v381 = vunpack.c.h.b16 %v92
  %v382 = vunpack.c.l.b16 %v93
  %v383 = vunpack.c.h.b16 %v93
  %v384 = vunpack.c.l.b16 %v94
  %v385 = vunpack.c.h.b16 %v94
  %v386 = vunpack.c.l.b16 %v95
  %v387 = vunpack.c.h.b16 %v95
  %v388 = vpack.c.b16 %v262, %v260
  %v389 = vpack.c.b16 %v263, %v261
  %v390 = vpack.c.b16 %v266, %v264
  %v391 = vpack.c.b16 %v267, %v265
  %v392 = vpack.c.b16 %v270, %v268
  %v393 = vpack.c.b16 %v271, %v269
  %v394 = vpack.c.b16 %v274, %v272
  %v395 = vpack.c.b16 %v275, %v273
  %v396 = vpack.c.b16 %v278, %v276
  %v397 = vpack.c.b16 %v279, %v277
  %v398 = vpack.c.b16 %v282, %v280
  %v399 = vpack.c.b16 %v283, %v281
  %v400 = vpack.c.b16 %v286, %v284
  %v401 = vpack.c.b16 %v287, %v285
  %v402 = vpack.c.b16 %v290, %v288
  %v403 = vpack.c.b16 %v291, %v289
  %v404 = vpack.c.b16 %v294, %v292
  %v405 = vpack.c.b16 %v295, %v293
  %v406 = vpack.c.b16 %v298, %v296
  %v407 = vpack.c.b16 %v299, %v297
  %v408 = vpack.c.b16 %v302, %v300
  %v409 = vpack.c.b16 %v303, %v301
  %v410 = vpack.c.b16 %v306, %v304
  %v411 = vpack.c.b16 %v307, %v305
  %v412 = vpack.c.b16 %v310, %v308
  %v413 = vpack.c.b16 %v311, %v309
  %v414 = vpack.c.b16 %v314, %v312
  %v415 = vpack.c.b16 %v315, %v313
  %v416 = vpack.c.b16 %v318, %v316
  %v417 = vpack.c.b16 %v319, %v317
  %v418 = vpack.c.b16 %v322, %v320
  %v419 = vpack.c.b16 %v323, %v321
  %v420 = vpack.c.b16 %v326, %v324
  %v421 = vpack.c.b16 %v327, %v325
  %v422 = vpack.c.b16 %v330, %v328
  %v423 = vpack.c.b16 %v331, %v329
  %v424 = vpack.c.b16 %v334, %v332
  %v425 = vpack.c.b16 %v335, %v333
  %v426 = vpack.c.b16 %v338, %v336
  %v427 = vpack.c.b16 %v339, %v337
  %v428 = vpack.c.b16 %v342, %v340
  %v429 = vpack.c.b16 %v343, %v341
  %v430 = vpack.c.b16 %v346, %v344
  %v431 = vpack.c.b16 %v347, %v345
  %v432 = vpack.c.b16 %v350, %v348
  %v433 = vpack.c.b16 %v351, %v349
  %v434 = vpack.c.b16 %v354, %v352
  %v435 = vpack.c.b16 %v355, %v353
  %v436 = vpack.c.b16 %v358, %v356
  %v437 = vpack.c.b16 %v359, %v357
  %v438 = vpack.c.b16 %v362, %v360
  %v439 = vpack.c.b16 %v363, %v361
  %v440 = vpack.c.b16 %v366, %v364
  %v441 = vpack.c.b16 %v367, %v365
  %v442 = vpack.c.b16 %v370, %v368
  %v443 = vpack.c.b16 %v371, %v369
  %v444 = vpack.c.b16 %v374, %v372
  %v445 = vpack.c.b16 %v375, %v373
  %v446 = vpack.c.b16 %v378, %v376
  %v447 = vpack.c.b16 %v379, %v377
  %v448 = vpack.c.b16 %v382, %v380
  %v449 = vpack.c.b16 %v383, %v381
  %v450 = vpack.c.b16 %v386, %v384
  %v451 = vpack.c.b16 %v387, %v385
  %516 = vmatpush.bf16.msra.mxu0 %v402
  %517 = vmatpush.bf16.msra.mxu0 %v400
  %518 = vmatpush.bf16.msra.mxu0 %v398
  %519 = vmatpush.bf16.msra.mxu0 %v396
  %520 = vmatpush.bf16.msra.mxu0 %v394
  %521 = vmatpush.bf16.msra.mxu0 %v392
  %522 = vmatpush.bf16.msra.mxu0 %v390
  %523 = vmatpush.bf16.msra.mxu0 %v388
  %524 = vmatmul.bf16.gmra.mxu0 %v156
  %v525 = vpop.f32.mrf.mxu0
  %v526 = vadd.f32 %v98, %v525
  %v527 = vpop.f32.mrf.mxu0
  %v528 = vadd.f32 %v98, %v527
  %529 = vmatmul.bf16.gmra.mxu0 %v160
  %v530 = vpop.f32.mrf.mxu0
  %v531 = vadd.f32 %v98, %v530
  %v532 = vpop.f32.mrf.mxu0
  %v533 = vadd.f32 %v98, %v532
  %534 = vmatmul.bf16.gmra.mxu0 %v164
  %v535 = vpop.f32.mrf.mxu0
  %v536 = vadd.f32 %v98, %v535
  %v537 = vpop.f32.mrf.mxu0
  %v538 = vadd.f32 %v98, %v537
  %539 = vmatmul.bf16.gmra.mxu0 %v168
  %v540 = vpop.f32.mrf.mxu0
  %v541 = vadd.f32 %v98, %v540
  %v542 = vpop.f32.mrf.mxu0
  %v543 = vadd.f32 %v98, %v542
  %544 = vmatmul.bf16.gmra.mxu0 %v172
  %v545 = vpop.f32.mrf.mxu0
  %v546 = vadd.f32 %v98, %v545
  %v547 = vpop.f32.mrf.mxu0
  %548 = vdwg.mxu0
  %549 = vmatpush.bf16.msra.mxu0 %v418
  %550 = vmatpush.bf16.msra.mxu0 %v416
  %551 = vmatpush.bf16.msra.mxu0 %v414
  %552 = vmatpush.bf16.msra.mxu0 %v412
  %553 = vmatpush.bf16.msra.mxu0 %v410
  %554 = vmatpush.bf16.msra.mxu0 %v408
  %555 = vmatpush.bf16.msra.mxu0 %v406
  %556 = vmatpush.bf16.msra.mxu0 %v404
  %557 = vmatmul.bf16.gmra.mxu0 %v157
  %v558 = vpop.f32.mrf.mxu0
  %v559 = vadd.f32 %v526, %v558
  %v560 = vpop.f32.mrf.mxu0
  %v561 = vadd.f32 %v528, %v560
  %562 = vmatmul.bf16.gmra.mxu0 %v161
  %v563 = vpop.f32.mrf.mxu0
  %v564 = vadd.f32 %v531, %v563
  %v565 = vpop.f32.mrf.mxu0
  %v566 = vadd.f32 %v533, %v565
  %567 = vmatmul.bf16.gmra.mxu0 %v165
  %v568 = vpop.f32.mrf.mxu0
  %v569 = vadd.f32 %v536, %v568
  %v570 = vpop.f32.mrf.mxu0
  %v571 = vadd.f32 %v538, %v570
  %572 = vmatmul.bf16.gmra.mxu0 %v169
  %v573 = vpop.f32.mrf.mxu0
  %v574 = vadd.f32 %v541, %v573
  %v575 = vpop.f32.mrf.mxu0
  %v576 = vadd.f32 %v543, %v575
  %577 = vmatmul.bf16.gmra.mxu0 %v173
  %v578 = vpop.f32.mrf.mxu0
  %v579 = vadd.f32 %v546, %v578
  %v580 = vpop.f32.mrf.mxu0
  %581 = vdwg.mxu0
  %582 = vmatpush.bf16.msra.mxu0 %v434
  %583 = vmatpush.bf16.msra.mxu0 %v432
  %584 = vmatpush.bf16.msra.mxu0 %v430
  %585 = vmatpush.bf16.msra.mxu0 %v428
  %586 = vmatpush.bf16.msra.mxu0 %v426
  %587 = vmatpush.bf16.msra.mxu0 %v424
  %588 = vmatpush.bf16.msra.mxu0 %v422
  %589 = vmatpush.bf16.msra.mxu0 %v420
  %590 = vmatmul.bf16.gmra.mxu0 %v158
  %v591 = vpop.f32.mrf.mxu0
  %v592 = vadd.f32 %v559, %v591
  %v593 = vpop.f32.mrf.mxu0
  %v594 = vadd.f32 %v561, %v593
  %595 = vmatmul.bf16.gmra.mxu0 %v162
  %v596 = vpop.f32.mrf.mxu0
  %v597 = vadd.f32 %v564, %v596
  %v598 = vpop.f32.mrf.mxu0
  %v599 = vadd.f32 %v566, %v598
  %600 = vmatmul.bf16.gmra.mxu0 %v166
  %v601 = vpop.f32.mrf.mxu0
  %v602 = vadd.f32 %v569, %v601
  %v603 = vpop.f32.mrf.mxu0
  %v604 = vadd.f32 %v571, %v603
  %605 = vmatmul.bf16.gmra.mxu0 %v170
  %v606 = vpop.f32.mrf.mxu0
  %v607 = vadd.f32 %v574, %v606
  %v608 = vpop.f32.mrf.mxu0
  %v609 = vadd.f32 %v576, %v608
  %610 = vmatmul.bf16.gmra.mxu0 %v174
  %v611 = vpop.f32.mrf.mxu0
  %v612 = vadd.f32 %v579, %v611
  %v613 = vpop.f32.mrf.mxu0
  %614 = vdwg.mxu0
  %615 = vmatpush.bf16.msra.mxu0 %v450
  %616 = vmatpush.bf16.msra.mxu0 %v448
  %617 = vmatpush.bf16.msra.mxu0 %v446
  %618 = vmatpush.bf16.msra.mxu0 %v444
  %619 = vmatpush.bf16.msra.mxu0 %v442
  %620 = vmatpush.bf16.msra.mxu0 %v440
  %621 = vmatpush.bf16.msra.mxu0 %v438
  %622 = vmatpush.bf16.msra.mxu0 %v436
  %623 = vmatmul.bf16.gmra.mxu0 %v159
  %v624 = vpop.f32.mrf.mxu0
  %v625 = vadd.f32 %v592, %v624
  %v626 = vpop.f32.mrf.mxu0
  %v627 = vadd.f32 %v594, %v626
  %628 = vmatmul.bf16.gmra.mxu0 %v163
  %v629 = vpop.f32.mrf.mxu0
  %v630 = vadd.f32 %v597, %v629
  %v631 = vpop.f32.mrf.mxu0
  %v632 = vadd.f32 %v599, %v631
  %633 = vmatmul.bf16.gmra.mxu0 %v167
  %v634 = vpop.f32.mrf.mxu0
  %v635 = vadd.f32 %v602, %v634
  %v636 = vpop.f32.mrf.mxu0
  %v637 = vadd.f32 %v604, %v636
  %638 = vmatmul.bf16.gmra.mxu0 %v171
  %v639 = vpop.f32.mrf.mxu0
  %v640 = vadd.f32 %v607, %v639
  %v641 = vpop.f32.mrf.mxu0
  %v642 = vadd.f32 %v609, %v641
  %643 = vmatmul.bf16.gmra.mxu0 %v175
  %v644 = vpop.f32.mrf.mxu0
  %v645 = vadd.f32 %v612, %v644
  %v646 = vpop.f32.mrf.mxu0
  %647 = vdwg.mxu0
  %648 = vmatpush.bf16.msra.mxu0 %v403
  %649 = vmatpush.bf16.msra.mxu0 %v401
  %650 = vmatpush.bf16.msra.mxu0 %v399
  %651 = vmatpush.bf16.msra.mxu0 %v397
  %652 = vmatpush.bf16.msra.mxu0 %v395
  %653 = vmatpush.bf16.msra.mxu0 %v393
  %654 = vmatpush.bf16.msra.mxu0 %v391
  %655 = vmatpush.bf16.msra.mxu0 %v389
  %656 = vmatmul.bf16.gmra.mxu0 %v156
  %v657 = vpop.f32.mrf.mxu0
  %v658 = vadd.f32 %v99, %v657
  %v659 = vpop.f32.mrf.mxu0
  %v660 = vadd.f32 %v99, %v659
  %661 = vmatmul.bf16.gmra.mxu0 %v160
  %v662 = vpop.f32.mrf.mxu0
  %v663 = vadd.f32 %v99, %v662
  %v664 = vpop.f32.mrf.mxu0
  %v665 = vadd.f32 %v99, %v664
  %666 = vmatmul.bf16.gmra.mxu0 %v164
  %v667 = vpop.f32.mrf.mxu0
  %v668 = vadd.f32 %v99, %v667
  %v669 = vpop.f32.mrf.mxu0
  %v670 = vadd.f32 %v99, %v669
  %671 = vmatmul.bf16.gmra.mxu0 %v168
  %v672 = vpop.f32.mrf.mxu0
  %v673 = vadd.f32 %v99, %v672
  %v674 = vpop.f32.mrf.mxu0
  %v675 = vadd.f32 %v99, %v674
  %676 = vmatmul.bf16.gmra.mxu0 %v172
  %v677 = vpop.f32.mrf.mxu0
  %v678 = vadd.f32 %v99, %v677
  %v679 = vpop.f32.mrf.mxu0
  %680 = vdwg.mxu0
  %681 = vmatpush.bf16.msra.mxu0 %v419
  %682 = vmatpush.bf16.msra.mxu0 %v417
  %683 = vmatpush.bf16.msra.mxu0 %v415
  %684 = vmatpush.bf16.msra.mxu0 %v413
  %685 = vmatpush.bf16.msra.mxu0 %v411
  %686 = vmatpush.bf16.msra.mxu0 %v409
  %687 = vmatpush.bf16.msra.mxu0 %v407
  %688 = vmatpush.bf16.msra.mxu0 %v405
  %689 = vmatmul.bf16.gmra.mxu0 %v157
  %v690 = vpop.f32.mrf.mxu0
  %v691 = vadd.f32 %v658, %v690
  %v692 = vpop.f32.mrf.mxu0
  %v693 = vadd.f32 %v660, %v692
  %694 = vmatmul.bf16.gmra.mxu0 %v161
  %v695 = vpop.f32.mrf.mxu0
  %v696 = vadd.f32 %v663, %v695
  %v697 = vpop.f32.mrf.mxu0
  %v698 = vadd.f32 %v665, %v697
  %699 = vmatmul.bf16.gmra.mxu0 %v165
  %v700 = vpop.f32.mrf.mxu0
  %v701 = vadd.f32 %v668, %v700
  %v702 = vpop.f32.mrf.mxu0
  %v703 = vadd.f32 %v670, %v702
  %704 = vmatmul.bf16.gmra.mxu0 %v169
  %v705 = vpop.f32.mrf.mxu0
  %v706 = vadd.f32 %v673, %v705
  %v707 = vpop.f32.mrf.mxu0
  %v708 = vadd.f32 %v675, %v707
  %709 = vmatmul.bf16.gmra.mxu0 %v173
  %v710 = vpop.f32.mrf.mxu0
  %v711 = vadd.f32 %v678, %v710
  %v712 = vpop.f32.mrf.mxu0
  %713 = vdwg.mxu0
  %714 = vmatpush.bf16.msra.mxu0 %v435
  %715 = vmatpush.bf16.msra.mxu0 %v433
  %716 = vmatpush.bf16.msra.mxu0 %v431
  %717 = vmatpush.bf16.msra.mxu0 %v429
  %718 = vmatpush.bf16.msra.mxu0 %v427
  %719 = vmatpush.bf16.msra.mxu0 %v425
  %720 = vmatpush.bf16.msra.mxu0 %v423
  %721 = vmatpush.bf16.msra.mxu0 %v421
  %722 = vmatmul.bf16.gmra.mxu0 %v158
  %v723 = vpop.f32.mrf.mxu0
  %v724 = vadd.f32 %v691, %v723
  %v725 = vpop.f32.mrf.mxu0
  %v726 = vadd.f32 %v693, %v725
  %727 = vmatmul.bf16.gmra.mxu0 %v162
  %v728 = vpop.f32.mrf.mxu0
  %v729 = vadd.f32 %v696, %v728
  %v730 = vpop.f32.mrf.mxu0
  %v731 = vadd.f32 %v698, %v730
  %732 = vmatmul.bf16.gmra.mxu0 %v166
  %v733 = vpop.f32.mrf.mxu0
  %v734 = vadd.f32 %v701, %v733
  %v735 = vpop.f32.mrf.mxu0
  %v736 = vadd.f32 %v703, %v735
  %737 = vmatmul.bf16.gmra.mxu0 %v170
  %v738 = vpop.f32.mrf.mxu0
  %v739 = vadd.f32 %v706, %v738
  %v740 = vpop.f32.mrf.mxu0
  %v741 = vadd.f32 %v708, %v740
  %742 = vmatmul.bf16.gmra.mxu0 %v174
  %v743 = vpop.f32.mrf.mxu0
  %v744 = vadd.f32 %v711, %v743
  %v745 = vpop.f32.mrf.mxu0
  %746 = vdwg.mxu0
  %747 = vmatpush.bf16.msra.mxu0 %v451
  %748 = vmatpush.bf16.msra.mxu0 %v449
  %749 = vmatpush.bf16.msra.mxu0 %v447
  %750 = vmatpush.bf16.msra.mxu0 %v445
  %751 = vmatpush.bf16.msra.mxu0 %v443
  %752 = vmatpush.bf16.msra.mxu0 %v441
  %753 = vmatpush.bf16.msra.mxu0 %v439
  %754 = vmatpush.bf16.msra.mxu0 %v437
  %755 = vmatmul.bf16.gmra.mxu0 %v159
  %v756 = vpop.f32.mrf.mxu0
  %v757 = vadd.f32 %v724, %v756
  %v758 = vpop.f32.mrf.mxu0
  %v759 = vadd.f32 %v726, %v758
  %760 = vmatmul.bf16.gmra.mxu0 %v163
  %v761 = vpop.f32.mrf.mxu0
  %v762 = vadd.f32 %v729, %v761
  %v763 = vpop.f32.mrf.mxu0
  %v764 = vadd.f32 %v731, %v763
  %765 = vmatmul.bf16.gmra.mxu0 %v167
  %v766 = vpop.f32.mrf.mxu0
  %v767 = vadd.f32 %v734, %v766
  %v768 = vpop.f32.mrf.mxu0
  %v769 = vadd.f32 %v736, %v768
  %770 = vmatmul.bf16.gmra.mxu0 %v171
  %v771 = vpop.f32.mrf.mxu0
  %v772 = vadd.f32 %v739, %v771
  %v773 = vpop.f32.mrf.mxu0
  %v774 = vadd.f32 %v741, %v773
  %775 = vmatmul.bf16.gmra.mxu0 %v175
  %v776 = vpop.f32.mrf.mxu0
  %v777 = vadd.f32 %v744, %v776
  %v778 = vpop.f32.mrf.mxu0
  %779 = vdwg.mxu0
  %v780 = vmax.f32 %v625, 0.0
  %v781 = vmax.f32 %v757, 0.0
  %v782 = vmax.f32 %v627, 0.0
  %v783 = vmax.f32 %v759, 0.0
  %v784 = vmax.f32 %v630, 0.0
  %v785 = vmax.f32 %v762, 0.0
  %v786 = vmax.f32 %v632, 0.0
  %v787 = vmax.f32 %v764, 0.0
  %v788 = vmax.f32 %v635, 0.0
  %v789 = vmax.f32 %v767, 0.0
  %v790 = vmax.f32 %v637, 0.0
  %v791 = vmax.f32 %v769, 0.0
  %v792 = vmax.f32 %v640, 0.0
  %v793 = vmax.f32 %v772, 0.0
  %v794 = vmax.f32 %v642, 0.0
  %v795 = vmax.f32 %v774, 0.0
  %v796 = vmax.f32 %v645, 0.0
  %v797 = vmax.f32 %v777, 0.0
  %798 = vst [vmem:[%s3] sm:$0xff] %v780
  %799 = vst [vmem:[%s3 + $0x8] sm:$0xff] %v781
  %800 = vst [vmem:[%s3 + $0x10] sm:$0xff] %v782
  %801 = vst [vmem:[%s3 + $0x18] sm:$0xff] %v783
  %802 = vst [vmem:[%s3 + $0x20] sm:$0xff] %v784
  %803 = vst [vmem:[%s3 + $0x28] sm:$0xff] %v785
  %804 = vst [vmem:[%s3 + $0x30] sm:$0xff] %v786
  %805 = vst [vmem:[%s3 + $0x38] sm:$0xff] %v787
  %806 = vst [vmem:[%s3 + $0x40] sm:$0xff] %v788
  %807 = vst [vmem:[%s3 + $0x48] sm:$0xff] %v789
  %808 = vst [vmem:[%s3 + $0x50] sm:$0xff] %v790
  %809 = vst [vmem:[%s3 + $0x58] sm:$0xff] %v791
  %810 = vst [vmem:[%s3 + $0x60] sm:$0xff] %v792
  %811 = vst [vmem:[%s3 + $0x68] sm:$0xff] %v793
  %812 = vst [vmem:[%s3 + $0x70] sm:$0xff] %v794
  %813 = vst [vmem:[%s3 + $0x78] sm:$0xff] %v795
  %814 = vst [vmem:[%s3 + $0x80] sm:$0xff] %v796
  %815 = vst [vmem:[%s3 + $0x88] sm:$0xff] %v797
  // Predicated region
  $region14: #{decoder_forward.7} parent=0 // pred_check
    _
  $region15: #{decoder_forward.7} parent=0 // pred_check_branch
    %817 = sbr.rel (0) target = $region17
  $region16: #{decoder_forward.7} parent=0 // pred_region
    _
  $region17: #{decoder_forward.7} parent=0 // pred_fallthru
    _
  // Predicated region
  $region18: #{decoder_forward.7} parent=0 // pred_check
    _
  $region19: #{decoder_forward.7} parent=0 // pred_check_branch
    %819 = sbr.rel (0) target = $region21
  $region20: #{decoder_forward.7} parent=0 // pred_region
    _
  $region21: #{decoder_forward.7} parent=0 // pred_fallthru
    _

// kernel: tile.25
$region0: #{tile.25}
  #allocation0 [shape = 's32[1]{0}', space=sflag, size = 0x4, scoped, tag = 'scoped memory for tile.25']
  %s0 = inlined_call_operand.vmem [shape: f32[32], index: 0, kind: input, shape index: {}]
  %s1 = inlined_call_operand.vmem [shape: f32[4,32], index: 1, kind: output, shape index: {}]
  // Predicated region
  $region2: #{tile.25} parent=0 // pred_check
    _
  $region3: #{tile.25} parent=0 // pred_check_branch
    %3 = sbr.rel (0) target = $region5
  $region4: #{tile.25} parent=0 // pred_region
    _
  $region5: #{tile.25} parent=0 // pred_fallthru
    _
  %v4 = vld [vmem:[%s0] ss:$0 sm:$0xff]
  %5 = vst [vmem:[%s1] sm:$0xf] %v4

// kernel: tile.26
$region0: #{tile.26}
  %s0 = inlined_call_operand.vmem [shape: f32[4,32], index: 0, kind: input, shape index: {}]
  %s1 = inlined_call_operand.vmem [shape: f32[1,128], index: 1, kind: output, shape index: {}]
  $region1: #{tile.26} parent=0
    #allocation0 [shape = 'u8[4096]{0}', space=vmem, size = 0x1000, scoped, tag = 'scoped mem for output reshape']
    #allocation1 [shape = 'u8[4096]{0}', space=vmem, size = 0x1000, scoped, tag = 'scoped mem for input reshape']
    %s3 = ssub.s32 16, 1
    %v4 = vld [vmem:[%s0] sm:%s3]
    %5 = vst [vmem:[#allocation1] sm:%s3] %v4
    %v6 = vld [vmem:[#allocation1] sm:$0x1]
    %vm7 = vcmask 261120
    %8 = vst.msk [vmem:[#allocation0] sm:$0x1] %vm7, %v6
    %s9 = scalar_lea.vmem [#allocation1], 3
    %v10 = vld [vmem:[%s9] sm:$0x1]
    %11 = vrot.lane.b32.xlu0 %v10, 96
    %v12 = vpop.permute.xlu0 %11
    %vm13 = vcmask 1048320
    %14 = vst.msk [vmem:[#allocation0] sm:$0x1] %vm13, %v12
    %s15 = scalar_lea.vmem [#allocation1], 2
    %v16 = vld [vmem:[%s15] sm:$0x1]
    %17 = vrot.lane.b32.xlu0 %v16, 64
    %v18 = vpop.permute.xlu0 %17
    %vm19 = vcmask 785920
    %20 = vst.msk [vmem:[#allocation0] sm:$0x1] %vm19, %v18
    %s21 = scalar_lea.vmem [#allocation1], 1
    %v22 = vld [vmem:[%s21] sm:$0x1]
    %23 = vrot.lane.b32.xlu0 %v22, 32
    %v24 = vpop.permute.xlu0 %23
    %vm25 = vcmask 523520
    %26 = vst.msk [vmem:[#allocation0] sm:$0x1] %vm25, %v24
    %s28 = ssub.s32 2, 1
    %v29 = vld [vmem:[#allocation0] sm:%s28]
    %s31 = ssub.s32 2, 1
    %32 = vst [vmem:[%s1] sm:%s31] %v29

// kernel: decoder_forward.8
$region0: #{decoder_forward.8}
  #allocation0 [shape = 'u32[]', space=smem, size = 0x4, offset = 0x4, fixed_abs, tag = 'smem constant byte address 0x4 - core index']
  #allocation1 [shape = 'u32[72,128]{1,0:T(1,128)}', space=vmem, size = 0x9000, scoped, tag = 'internal scratch']
  %s0 = inlined_call_operand.vmem [shape: bf16[392,256], index: 0, kind: input, shape index: {}]
  %s1 = inlined_call_operand.vmem [shape: bf16[256,128], index: 1, kind: input, shape index: {}]
  %s2 = inlined_call_operand.vmem [shape: f32[1,128], index: 2, kind: input, shape index: {}]
  %s3 = inlined_call_operand.vmem [shape: f32[392,128], index: 3, kind: output, shape index: {}]
  %s4 = sld [smem:[#allocation0]]
  $region22: #{decoder_forward.8} parent=0
    _
  %s6 = ssub.s32 1, %s4
  %s7 = scalar_select 0, %s6, %s4
  // Predicated region
  $region2: #{decoder_forward.8} parent=0 // pred_check
    _
  $region3: #{decoder_forward.8} parent=0 // pred_check_branch
    %9 = sbr.rel (0) target = $region5
  $region4: #{decoder_forward.8} parent=0 // pred_region
    _
  $region5: #{decoder_forward.8} parent=0 // pred_fallthru
    _
  // Predicated region
  $region6: #{decoder_forward.8} parent=0 // pred_check
    _
  $region7: #{decoder_forward.8} parent=0 // pred_check_branch
    %11 = sbr.rel (0) target = $region9
  $region8: #{decoder_forward.8} parent=0 // pred_region
    _
  $region9: #{decoder_forward.8} parent=0 // pred_fallthru
    _
  // Predicated region
  $region10: #{decoder_forward.8} parent=0 // pred_check
    _
  $region11: #{decoder_forward.8} parent=0 // pred_check_branch
    %13 = sbr.rel (0) target = $region13
  $region12: #{decoder_forward.8} parent=0 // pred_region
    _
  $region13: #{decoder_forward.8} parent=0 // pred_fallthru
    _
  %v14 = vld [vmem:[%s0] sm:$0xff]
  %v15 = vld [vmem:[%s0 + $0x8] sm:$0xff]
  %v16 = vld [vmem:[%s0 + $0x10] sm:$0xff]
  %v17 = vld [vmem:[%s0 + $0x18] sm:$0xff]
  %v18 = vld [vmem:[%s0 + $0x20] sm:$0xff]
  %v19 = vld [vmem:[%s0 + $0x28] sm:$0xff]
  %v20 = vld [vmem:[%s0 + $0x30] sm:$0xff]
  %v21 = vld [vmem:[%s0 + $0x38] sm:$0xff]
  %v22 = vld [vmem:[%s0 + $0x40] sm:$0xff]
  %v23 = vld [vmem:[%s0 + $0x48] sm:$0xff]
  %v24 = vld [vmem:[%s0 + $0x50] sm:$0xff]
  %v25 = vld [vmem:[%s0 + $0x58] sm:$0xff]
  %v26 = vld [vmem:[%s0 + $0x60] sm:$0xff]
  %v27 = vld [vmem:[%s0 + $0x68] sm:$0xff]
  %v28 = vld [vmem:[%s0 + $0x70] sm:$0xff]
  %v29 = vld [vmem:[%s0 + $0x78] sm:$0xff]
  %v30 = vld [vmem:[%s0 + $0x80] sm:$0xff]
  %v31 = vld [vmem:[%s0 + $0x88] sm:$0xff]
  %v32 = vld [vmem:[%s0 + $0x90] sm:$0xff]
  %v33 = vld [vmem:[%s0 + $0x98] sm:$0xff]
  %v34 = vld [vmem:[%s0 + $0xa0] sm:$0xff]
  %v35 = vld [vmem:[%s0 + $0xa8] sm:$0xff]
  %v36 = vld [vmem:[%s0 + $0xb0] sm:$0xff]
  %v37 = vld [vmem:[%s0 + $0xb8] sm:$0xff]
  %v38 = vld [vmem:[%s0 + $0xc0] sm:$0xff]
  %v39 = vld [vmem:[%s0 + $0xc8] sm:$0xff]
  %v40 = vld [vmem:[%s0 + $0xd0] sm:$0xff]
  %v41 = vld [vmem:[%s0 + $0xd8] sm:$0xff]
  %v42 = vld [vmem:[%s0 + $0xe0] sm:$0xff]
  %v43 = vld [vmem:[%s0 + $0xe8] sm:$0xff]
  %v44 = vld [vmem:[%s0 + $0xf0] sm:$0xff]
  %v45 = vld [vmem:[%s0 + $0xf8] sm:$0xff]
  %v46 = vld [vmem:[%s0 + $0x100] sm:$0xff]
  %v47 = vld [vmem:[%s0 + $0x108] sm:$0xff]
  %v48 = vld [vmem:[%s0 + $0x110] sm:$0xff]
  %v49 = vld [vmem:[%s0 + $0x118] sm:$0xff]
  %v50 = vld [vmem:[%s0 + $0x120] sm:$0xff]
  %v51 = vld [vmem:[%s0 + $0x128] sm:$0xff]
  %v52 = vld [vmem:[%s0 + $0x130] sm:$0xff]
  %v53 = vld [vmem:[%s0 + $0x138] sm:$0xff]
  %v54 = vld [vmem:[%s0 + $0x140] sm:$0xff]
  %v55 = vld [vmem:[%s0 + $0x148] sm:$0xff]
  %v56 = vld [vmem:[%s0 + $0x150] sm:$0xff]
  %v57 = vld [vmem:[%s0 + $0x158] sm:$0xff]
  %v58 = vld [vmem:[%s0 + $0x160] sm:$0xff]
  %v59 = vld [vmem:[%s0 + $0x168] sm:$0xff]
  %v60 = vld [vmem:[%s0 + $0x170] sm:$0xff]
  %v61 = vld [vmem:[%s0 + $0x178] sm:$0xff]
  %v62 = vld [vmem:[%s0 + $0x180] sm:$0xff]
  %v63 = vld [vmem:[%s1] sm:$0xf]
  %v64 = vld [vmem:[%s1 + $0x4] sm:$0xf]
  %v65 = vld [vmem:[%s1 + $0x8] sm:$0xf]
  %v66 = vld [vmem:[%s1 + $0xc] sm:$0xf]
  %v67 = vld [vmem:[%s1 + $0x10] sm:$0xf]
  %v68 = vld [vmem:[%s1 + $0x14] sm:$0xf]
  %v69 = vld [vmem:[%s1 + $0x18] sm:$0xf]
  %v70 = vld [vmem:[%s1 + $0x1c] sm:$0xf]
  %v71 = vld [vmem:[%s1 + $0x20] sm:$0xf]
  %v72 = vld [vmem:[%s1 + $0x24] sm:$0xf]
  %v73 = vld [vmem:[%s1 + $0x28] sm:$0xf]
  %v74 = vld [vmem:[%s1 + $0x2c] sm:$0xf]
  %v75 = vld [vmem:[%s1 + $0x30] sm:$0xf]
  %v76 = vld [vmem:[%s1 + $0x34] sm:$0xf]
  %v77 = vld [vmem:[%s1 + $0x38] sm:$0xf]
  %v78 = vld [vmem:[%s1 + $0x3c] sm:$0xf]
  %v79 = vld [vmem:[%s1 + $0x40] sm:$0xf]
  %v80 = vld [vmem:[%s1 + $0x44] sm:$0xf]
  %v81 = vld [vmem:[%s1 + $0x48] sm:$0xf]
  %v82 = vld [vmem:[%s1 + $0x4c] sm:$0xf]
  %v83 = vld [vmem:[%s1 + $0x50] sm:$0xf]
  %v84 = vld [vmem:[%s1 + $0x54] sm:$0xf]
  %v85 = vld [vmem:[%s1 + $0x58] sm:$0xf]
  %v86 = vld [vmem:[%s1 + $0x5c] sm:$0xf]
  %v87 = vld [vmem:[%s1 + $0x60] sm:$0xf]
  %v88 = vld [vmem:[%s1 + $0x64] sm:$0xf]
  %v89 = vld [vmem:[%s1 + $0x68] sm:$0xf]
  %v90 = vld [vmem:[%s1 + $0x6c] sm:$0xf]
  %v91 = vld [vmem:[%s1 + $0x70] sm:$0xf]
  %v92 = vld [vmem:[%s1 + $0x74] sm:$0xf]
  %v93 = vld [vmem:[%s1 + $0x78] sm:$0xf]
  %v94 = vld [vmem:[%s1 + $0x7c] sm:$0xf]
  %v95 = vld [vmem:[%s2] sm:$0x1]
  %v97 = vperm.slane %v95, 0
  %v148 = vunpack.c.l.b16 %v14
  %v149 = vunpack.c.h.b16 %v14
  %v150 = vunpack.c.l.b16 %v15
  %v151 = vunpack.c.h.b16 %v15
  %v152 = vunpack.c.l.b16 %v16
  %v153 = vunpack.c.h.b16 %v16
  %v154 = vunpack.c.l.b16 %v17
  %v155 = vunpack.c.h.b16 %v17
  %v156 = vunpack.c.l.b16 %v18
  %v157 = vunpack.c.h.b16 %v18
  %v158 = vunpack.c.l.b16 %v19
  %v159 = vunpack.c.h.b16 %v19
  %v160 = vunpack.c.l.b16 %v20
  %v161 = vunpack.c.h.b16 %v20
  %v162 = vunpack.c.l.b16 %v21
  %v163 = vunpack.c.h.b16 %v21
  %v164 = vunpack.c.l.b16 %v22
  %v165 = vunpack.c.h.b16 %v22
  %v166 = vunpack.c.l.b16 %v23
  %v167 = vunpack.c.h.b16 %v23
  %v168 = vunpack.c.l.b16 %v24
  %v169 = vunpack.c.h.b16 %v24
  %v170 = vunpack.c.l.b16 %v25
  %v171 = vunpack.c.h.b16 %v25
  %v172 = vunpack.c.l.b16 %v26
  %v173 = vunpack.c.h.b16 %v26
  %v174 = vunpack.c.l.b16 %v27
  %v175 = vunpack.c.h.b16 %v27
  %v176 = vunpack.c.l.b16 %v28
  %v177 = vunpack.c.h.b16 %v28
  %v178 = vunpack.c.l.b16 %v29
  %v179 = vunpack.c.h.b16 %v29
  %v180 = vunpack.c.l.b16 %v30
  %v181 = vunpack.c.h.b16 %v30
  %v182 = vunpack.c.l.b16 %v31
  %v183 = vunpack.c.h.b16 %v31
  %v184 = vunpack.c.l.b16 %v32
  %v185 = vunpack.c.h.b16 %v32
  %v186 = vunpack.c.l.b16 %v33
  %v187 = vunpack.c.h.b16 %v33
  %v188 = vunpack.c.l.b16 %v34
  %v189 = vunpack.c.h.b16 %v34
  %v190 = vunpack.c.l.b16 %v35
  %v191 = vunpack.c.h.b16 %v35
  %v192 = vunpack.c.l.b16 %v36
  %v193 = vunpack.c.h.b16 %v36
  %v194 = vunpack.c.l.b16 %v37
  %v195 = vunpack.c.h.b16 %v37
  %v196 = vunpack.c.l.b16 %v38
  %v197 = vunpack.c.h.b16 %v38
  %v198 = vunpack.c.l.b16 %v39
  %v199 = vunpack.c.h.b16 %v39
  %v200 = vunpack.c.l.b16 %v40
  %v201 = vunpack.c.h.b16 %v40
  %v202 = vunpack.c.l.b16 %v41
  %v203 = vunpack.c.h.b16 %v41
  %v204 = vunpack.c.l.b16 %v42
  %v205 = vunpack.c.h.b16 %v42
  %v206 = vunpack.c.l.b16 %v43
  %v207 = vunpack.c.h.b16 %v43
  %v208 = vunpack.c.l.b16 %v44
  %v209 = vunpack.c.h.b16 %v44
  %v210 = vunpack.c.l.b16 %v45
  %v211 = vunpack.c.h.b16 %v45
  %v212 = vunpack.c.l.b16 %v46
  %v213 = vunpack.c.h.b16 %v46
  %v214 = vunpack.c.l.b16 %v47
  %v215 = vunpack.c.h.b16 %v47
  %v216 = vunpack.c.l.b16 %v48
  %v217 = vunpack.c.h.b16 %v48
  %v218 = vunpack.c.l.b16 %v49
  %v219 = vunpack.c.h.b16 %v49
  %v220 = vunpack.c.l.b16 %v50
  %v221 = vunpack.c.h.b16 %v50
  %v222 = vunpack.c.l.b16 %v51
  %v223 = vunpack.c.h.b16 %v51
  %v224 = vunpack.c.l.b16 %v52
  %v225 = vunpack.c.h.b16 %v52
  %v226 = vunpack.c.l.b16 %v53
  %v227 = vunpack.c.h.b16 %v53
  %v228 = vunpack.c.l.b16 %v54
  %v229 = vunpack.c.h.b16 %v54
  %v230 = vunpack.c.l.b16 %v55
  %v231 = vunpack.c.h.b16 %v55
  %v232 = vunpack.c.l.b16 %v56
  %v233 = vunpack.c.h.b16 %v56
  %v234 = vunpack.c.l.b16 %v57
  %v235 = vunpack.c.h.b16 %v57
  %v236 = vunpack.c.l.b16 %v58
  %v237 = vunpack.c.h.b16 %v58
  %v238 = vunpack.c.l.b16 %v59
  %v239 = vunpack.c.h.b16 %v59
  %v240 = vunpack.c.l.b16 %v60
  %v241 = vunpack.c.h.b16 %v60
  %v242 = vunpack.c.l.b16 %v61
  %v243 = vunpack.c.h.b16 %v61
  %v244 = vunpack.c.l.b16 %v62
  %v245 = vunpack.c.h.b16 %v62
  %v246 = vpack.c.b16 %v150, %v148
  %v247 = vpack.c.b16 %v151, %v149
  %v248 = vpack.c.b16 %v154, %v152
  %v249 = vpack.c.b16 %v155, %v153
  %v250 = vpack.c.b16 %v158, %v156
  %v251 = vpack.c.b16 %v159, %v157
  %v252 = vpack.c.b16 %v162, %v160
  %v253 = vpack.c.b16 %v163, %v161
  %v254 = vpack.c.b16 %v166, %v164
  %v255 = vpack.c.b16 %v167, %v165
  %v256 = vpack.c.b16 %v170, %v168
  %v257 = vpack.c.b16 %v171, %v169
  %v258 = vpack.c.b16 %v174, %v172
  %v259 = vpack.c.b16 %v175, %v173
  %v260 = vpack.c.b16 %v178, %v176
  %v261 = vpack.c.b16 %v179, %v177
  %v262 = vpack.c.b16 %v182, %v180
  %v263 = vpack.c.b16 %v183, %v181
  %v264 = vpack.c.b16 %v186, %v184
  %v265 = vpack.c.b16 %v187, %v185
  %v266 = vpack.c.b16 %v190, %v188
  %v267 = vpack.c.b16 %v191, %v189
  %v268 = vpack.c.b16 %v194, %v192
  %v269 = vpack.c.b16 %v195, %v193
  %v270 = vpack.c.b16 %v198, %v196
  %v271 = vpack.c.b16 %v199, %v197
  %v272 = vpack.c.b16 %v202, %v200
  %v273 = vpack.c.b16 %v203, %v201
  %v274 = vpack.c.b16 %v206, %v204
  %v275 = vpack.c.b16 %v207, %v205
  %v276 = vpack.c.b16 %v210, %v208
  %v277 = vpack.c.b16 %v211, %v209
  %v278 = vpack.c.b16 %v214, %v212
  %v279 = vpack.c.b16 %v215, %v213
  %v280 = vpack.c.b16 %v218, %v216
  %v281 = vpack.c.b16 %v219, %v217
  %v282 = vpack.c.b16 %v222, %v220
  %v283 = vpack.c.b16 %v223, %v221
  %v284 = vpack.c.b16 %v226, %v224
  %v285 = vpack.c.b16 %v227, %v225
  %v286 = vpack.c.b16 %v230, %v228
  %v287 = vpack.c.b16 %v231, %v229
  %v288 = vpack.c.b16 %v234, %v232
  %v289 = vpack.c.b16 %v235, %v233
  %v290 = vpack.c.b16 %v238, %v236
  %v291 = vpack.c.b16 %v239, %v237
  %v292 = vpack.c.b16 %v242, %v240
  %v293 = vpack.c.b16 %v243, %v241
  %v294 = vpack.c.b16 %v244, %v244
  %v295 = vpack.c.b16 %v245, %v245
  %v378 = vunpack.c.l.b16 %v63
  %v379 = vunpack.c.l.b16 %v64
  %v380 = vunpack.c.l.b16 %v65
  %v381 = vunpack.c.l.b16 %v66
  %v382 = vunpack.c.l.b16 %v67
  %v383 = vunpack.c.l.b16 %v68
  %v384 = vunpack.c.l.b16 %v69
  %v385 = vunpack.c.l.b16 %v70
  %v386 = vunpack.c.l.b16 %v71
  %v387 = vunpack.c.l.b16 %v72
  %v388 = vunpack.c.l.b16 %v73
  %v389 = vunpack.c.l.b16 %v74
  %v390 = vunpack.c.l.b16 %v75
  %v391 = vunpack.c.l.b16 %v76
  %v392 = vunpack.c.l.b16 %v77
  %v393 = vunpack.c.l.b16 %v78
  %v394 = vunpack.c.l.b16 %v79
  %v395 = vunpack.c.l.b16 %v80
  %v396 = vunpack.c.l.b16 %v81
  %v397 = vunpack.c.l.b16 %v82
  %v398 = vunpack.c.l.b16 %v83
  %v399 = vunpack.c.l.b16 %v84
  %v400 = vunpack.c.l.b16 %v85
  %v401 = vunpack.c.l.b16 %v86
  %v402 = vunpack.c.l.b16 %v87
  %v403 = vunpack.c.l.b16 %v88
  %v404 = vunpack.c.l.b16 %v89
  %v405 = vunpack.c.l.b16 %v90
  %v406 = vunpack.c.l.b16 %v91
  %v407 = vunpack.c.l.b16 %v92
  %v408 = vunpack.c.l.b16 %v93
  %v409 = vunpack.c.l.b16 %v94
  %v410 = vpack.c.b16 %v379, %v378
  %v411 = vpack.c.b16 %v381, %v380
  %v412 = vpack.c.b16 %v383, %v382
  %v413 = vpack.c.b16 %v385, %v384
  %v414 = vpack.c.b16 %v387, %v386
  %v415 = vpack.c.b16 %v389, %v388
  %v416 = vpack.c.b16 %v391, %v390
  %v417 = vpack.c.b16 %v393, %v392
  %v418 = vpack.c.b16 %v395, %v394
  %v419 = vpack.c.b16 %v397, %v396
  %v420 = vpack.c.b16 %v399, %v398
  %v421 = vpack.c.b16 %v401, %v400
  %v422 = vpack.c.b16 %v403, %v402
  %v423 = vpack.c.b16 %v405, %v404
  %v424 = vpack.c.b16 %v407, %v406
  %v425 = vpack.c.b16 %v409, %v408
  %442 = vmatpush.bf16.msra.mxu0 %v417
  %443 = vmatpush.bf16.msra.mxu0 %v416
  %444 = vmatpush.bf16.msra.mxu0 %v415
  %445 = vmatpush.bf16.msra.mxu0 %v414
  %446 = vmatpush.bf16.msra.mxu0 %v413
  %447 = vmatpush.bf16.msra.mxu0 %v412
  %448 = vmatpush.bf16.msra.mxu0 %v411
  %449 = vmatpush.bf16.msra.mxu0 %v410
  %450 = vmatmul.bf16.gmra.mxu0 %v246
  %v451 = vpop.f32.mrf.mxu0
  %v452 = vadd.f32 %v97, %v451
  %v453 = vpop.f32.mrf.mxu0
  %v454 = vadd.f32 %v97, %v453
  %455 = vmatmul.bf16.gmra.mxu0 %v248
  %v456 = vpop.f32.mrf.mxu0
  %v457 = vadd.f32 %v97, %v456
  %v458 = vpop.f32.mrf.mxu0
  %v459 = vadd.f32 %v97, %v458
  %460 = vmatmul.bf16.gmra.mxu0 %v250
  %v461 = vpop.f32.mrf.mxu0
  %v462 = vadd.f32 %v97, %v461
  %v463 = vpop.f32.mrf.mxu0
  %v464 = vadd.f32 %v97, %v463
  %465 = vmatmul.bf16.gmra.mxu0 %v252
  %v466 = vpop.f32.mrf.mxu0
  %v467 = vadd.f32 %v97, %v466
  %v468 = vpop.f32.mrf.mxu0
  %v469 = vadd.f32 %v97, %v468
  %470 = vmatmul.bf16.gmra.mxu0 %v254
  %v471 = vpop.f32.mrf.mxu0
  %v472 = vadd.f32 %v97, %v471
  %v473 = vpop.f32.mrf.mxu0
  %v474 = vadd.f32 %v97, %v473
  %475 = vmatmul.bf16.gmra.mxu0 %v256
  %v476 = vpop.f32.mrf.mxu0
  %v477 = vadd.f32 %v97, %v476
  %v478 = vpop.f32.mrf.mxu0
  %v479 = vadd.f32 %v97, %v478
  %480 = vmatmul.bf16.gmra.mxu0 %v258
  %v481 = vpop.f32.mrf.mxu0
  %v482 = vadd.f32 %v97, %v481
  %v483 = vpop.f32.mrf.mxu0
  %v484 = vadd.f32 %v97, %v483
  %485 = vmatmul.bf16.gmra.mxu0 %v260
  %v486 = vpop.f32.mrf.mxu0
  %v487 = vadd.f32 %v97, %v486
  %v488 = vpop.f32.mrf.mxu0
  %v489 = vadd.f32 %v97, %v488
  %490 = vmatmul.bf16.gmra.mxu0 %v262
  %v491 = vpop.f32.mrf.mxu0
  %v492 = vadd.f32 %v97, %v491
  %v493 = vpop.f32.mrf.mxu0
  %v494 = vadd.f32 %v97, %v493
  %495 = vmatmul.bf16.gmra.mxu0 %v264
  %v496 = vpop.f32.mrf.mxu0
  %v497 = vadd.f32 %v97, %v496
  %v498 = vpop.f32.mrf.mxu0
  %v499 = vadd.f32 %v97, %v498
  %500 = vmatmul.bf16.gmra.mxu0 %v266
  %v501 = vpop.f32.mrf.mxu0
  %v502 = vadd.f32 %v97, %v501
  %v503 = vpop.f32.mrf.mxu0
  %v504 = vadd.f32 %v97, %v503
  %505 = vmatmul.bf16.gmra.mxu0 %v268
  %v506 = vpop.f32.mrf.mxu0
  %v507 = vadd.f32 %v97, %v506
  %v508 = vpop.f32.mrf.mxu0
  %v509 = vadd.f32 %v97, %v508
  %510 = vmatmul.bf16.gmra.mxu0 %v270
  %v511 = vpop.f32.mrf.mxu0
  %v512 = vadd.f32 %v97, %v511
  %v513 = vpop.f32.mrf.mxu0
  %v514 = vadd.f32 %v97, %v513
  %515 = vmatmul.bf16.gmra.mxu0 %v272
  %v516 = vpop.f32.mrf.mxu0
  %v517 = vadd.f32 %v97, %v516
  %v518 = vpop.f32.mrf.mxu0
  %v519 = vadd.f32 %v97, %v518
  %520 = vmatmul.bf16.gmra.mxu0 %v274
  %v521 = vpop.f32.mrf.mxu0
  %v522 = vadd.f32 %v97, %v521
  %v523 = vpop.f32.mrf.mxu0
  %v524 = vadd.f32 %v97, %v523
  %525 = vmatmul.bf16.gmra.mxu0 %v276
  %v526 = vpop.f32.mrf.mxu0
  %v527 = vadd.f32 %v97, %v526
  %v528 = vpop.f32.mrf.mxu0
  %v529 = vadd.f32 %v97, %v528
  %530 = vmatmul.bf16.gmra.mxu0 %v278
  %v531 = vpop.f32.mrf.mxu0
  %v532 = vadd.f32 %v97, %v531
  %v533 = vpop.f32.mrf.mxu0
  %v534 = vadd.f32 %v97, %v533
  %535 = vmatmul.bf16.gmra.mxu0 %v280
  %v536 = vpop.f32.mrf.mxu0
  %v537 = vadd.f32 %v97, %v536
  %v538 = vpop.f32.mrf.mxu0
  %v539 = vadd.f32 %v97, %v538
  %540 = vmatmul.bf16.gmra.mxu0 %v282
  %v541 = vpop.f32.mrf.mxu0
  %v542 = vadd.f32 %v97, %v541
  %v543 = vpop.f32.mrf.mxu0
  %v544 = vadd.f32 %v97, %v543
  %545 = vmatmul.bf16.gmra.mxu0 %v284
  %v546 = vpop.f32.mrf.mxu0
  %v547 = vadd.f32 %v97, %v546
  %v548 = vpop.f32.mrf.mxu0
  %v549 = vadd.f32 %v97, %v548
  %550 = vmatmul.bf16.gmra.mxu0 %v286
  %v551 = vpop.f32.mrf.mxu0
  %v552 = vadd.f32 %v97, %v551
  %v553 = vpop.f32.mrf.mxu0
  %v554 = vadd.f32 %v97, %v553
  %555 = vmatmul.bf16.gmra.mxu0 %v288
  %v556 = vpop.f32.mrf.mxu0
  %v557 = vadd.f32 %v97, %v556
  %v558 = vpop.f32.mrf.mxu0
  %v559 = vadd.f32 %v97, %v558
  %560 = vmatmul.bf16.gmra.mxu0 %v290
  %v561 = vpop.f32.mrf.mxu0
  %v562 = vadd.f32 %v97, %v561
  %v563 = vpop.f32.mrf.mxu0
  %v564 = vadd.f32 %v97, %v563
  %565 = vmatmul.bf16.gmra.mxu0 %v292
  %v566 = vpop.f32.mrf.mxu0
  %v567 = vadd.f32 %v97, %v566
  %v568 = vpop.f32.mrf.mxu0
  %v569 = vadd.f32 %v97, %v568
  %570 = vmatmul.bf16.gmra.mxu0 %v294
  %v571 = vpop.f32.mrf.mxu0
  %v572 = vadd.f32 %v97, %v571
  %v573 = vpop.f32.mrf.mxu0
  %574 = vdwg.mxu0
  %575 = vmatpush.bf16.msra.mxu0 %v425
  %576 = vmatpush.bf16.msra.mxu0 %v424
  %577 = vmatpush.bf16.msra.mxu0 %v423
  %578 = vmatpush.bf16.msra.mxu0 %v422
  %579 = vmatpush.bf16.msra.mxu0 %v421
  %580 = vmatpush.bf16.msra.mxu0 %v420
  %581 = vmatpush.bf16.msra.mxu0 %v419
  %582 = vmatpush.bf16.msra.mxu0 %v418
  %583 = vmatmul.bf16.gmra.mxu0 %v247
  %v584 = vpop.f32.mrf.mxu0
  %v585 = vadd.f32 %v452, %v584
  %v586 = vpop.f32.mrf.mxu0
  %v587 = vadd.f32 %v454, %v586
  %588 = vmatmul.bf16.gmra.mxu0 %v249
  %v589 = vpop.f32.mrf.mxu0
  %v590 = vadd.f32 %v457, %v589
  %v591 = vpop.f32.mrf.mxu0
  %v592 = vadd.f32 %v459, %v591
  %593 = vmatmul.bf16.gmra.mxu0 %v251
  %v594 = vpop.f32.mrf.mxu0
  %v595 = vadd.f32 %v462, %v594
  %v596 = vpop.f32.mrf.mxu0
  %v597 = vadd.f32 %v464, %v596
  %598 = vmatmul.bf16.gmra.mxu0 %v253
  %v599 = vpop.f32.mrf.mxu0
  %v600 = vadd.f32 %v467, %v599
  %v601 = vpop.f32.mrf.mxu0
  %v602 = vadd.f32 %v469, %v601
  %603 = vmatmul.bf16.gmra.mxu0 %v255
  %v604 = vpop.f32.mrf.mxu0
  %v605 = vadd.f32 %v472, %v604
  %v606 = vpop.f32.mrf.mxu0
  %v607 = vadd.f32 %v474, %v606
  %608 = vmatmul.bf16.gmra.mxu0 %v257
  %v609 = vpop.f32.mrf.mxu0
  %v610 = vadd.f32 %v477, %v609
  %v611 = vpop.f32.mrf.mxu0
  %v612 = vadd.f32 %v479, %v611
  %613 = vmatmul.bf16.gmra.mxu0 %v259
  %v614 = vpop.f32.mrf.mxu0
  %v615 = vadd.f32 %v482, %v614
  %v616 = vpop.f32.mrf.mxu0
  %v617 = vadd.f32 %v484, %v616
  %618 = vmatmul.bf16.gmra.mxu0 %v261
  %v619 = vpop.f32.mrf.mxu0
  %v620 = vadd.f32 %v487, %v619
  %v621 = vpop.f32.mrf.mxu0
  %v622 = vadd.f32 %v489, %v621
  %623 = vmatmul.bf16.gmra.mxu0 %v263
  %v624 = vpop.f32.mrf.mxu0
  %v625 = vadd.f32 %v492, %v624
  %v626 = vpop.f32.mrf.mxu0
  %v627 = vadd.f32 %v494, %v626
  %628 = vmatmul.bf16.gmra.mxu0 %v265
  %v629 = vpop.f32.mrf.mxu0
  %v630 = vadd.f32 %v497, %v629
  %v631 = vpop.f32.mrf.mxu0
  %v632 = vadd.f32 %v499, %v631
  %633 = vmatmul.bf16.gmra.mxu0 %v267
  %v634 = vpop.f32.mrf.mxu0
  %v635 = vadd.f32 %v502, %v634
  %v636 = vpop.f32.mrf.mxu0
  %v637 = vadd.f32 %v504, %v636
  %638 = vmatmul.bf16.gmra.mxu0 %v269
  %v639 = vpop.f32.mrf.mxu0
  %v640 = vadd.f32 %v507, %v639
  %v641 = vpop.f32.mrf.mxu0
  %v642 = vadd.f32 %v509, %v641
  %643 = vmatmul.bf16.gmra.mxu0 %v271
  %v644 = vpop.f32.mrf.mxu0
  %v645 = vadd.f32 %v512, %v644
  %v646 = vpop.f32.mrf.mxu0
  %v647 = vadd.f32 %v514, %v646
  %648 = vmatmul.bf16.gmra.mxu0 %v273
  %v649 = vpop.f32.mrf.mxu0
  %v650 = vadd.f32 %v517, %v649
  %v651 = vpop.f32.mrf.mxu0
  %v652 = vadd.f32 %v519, %v651
  %653 = vmatmul.bf16.gmra.mxu0 %v275
  %v654 = vpop.f32.mrf.mxu0
  %v655 = vadd.f32 %v522, %v654
  %v656 = vpop.f32.mrf.mxu0
  %v657 = vadd.f32 %v524, %v656
  %658 = vmatmul.bf16.gmra.mxu0 %v277
  %v659 = vpop.f32.mrf.mxu0
  %v660 = vadd.f32 %v527, %v659
  %v661 = vpop.f32.mrf.mxu0
  %v662 = vadd.f32 %v529, %v661
  %663 = vmatmul.bf16.gmra.mxu0 %v279
  %v664 = vpop.f32.mrf.mxu0
  %v665 = vadd.f32 %v532, %v664
  %v666 = vpop.f32.mrf.mxu0
  %v667 = vadd.f32 %v534, %v666
  %668 = vmatmul.bf16.gmra.mxu0 %v281
  %v669 = vpop.f32.mrf.mxu0
  %v670 = vadd.f32 %v537, %v669
  %v671 = vpop.f32.mrf.mxu0
  %v672 = vadd.f32 %v539, %v671
  %673 = vmatmul.bf16.gmra.mxu0 %v283
  %v674 = vpop.f32.mrf.mxu0
  %v675 = vadd.f32 %v542, %v674
  %v676 = vpop.f32.mrf.mxu0
  %v677 = vadd.f32 %v544, %v676
  %678 = vmatmul.bf16.gmra.mxu0 %v285
  %v679 = vpop.f32.mrf.mxu0
  %v680 = vadd.f32 %v547, %v679
  %v681 = vpop.f32.mrf.mxu0
  %v682 = vadd.f32 %v549, %v681
  %683 = vmatmul.bf16.gmra.mxu0 %v287
  %v684 = vpop.f32.mrf.mxu0
  %v685 = vadd.f32 %v552, %v684
  %v686 = vpop.f32.mrf.mxu0
  %v687 = vadd.f32 %v554, %v686
  %688 = vmatmul.bf16.gmra.mxu0 %v289
  %v689 = vpop.f32.mrf.mxu0
  %v690 = vadd.f32 %v557, %v689
  %v691 = vpop.f32.mrf.mxu0
  %v692 = vadd.f32 %v559, %v691
  %693 = vmatmul.bf16.gmra.mxu0 %v291
  %v694 = vpop.f32.mrf.mxu0
  %v695 = vadd.f32 %v562, %v694
  %v696 = vpop.f32.mrf.mxu0
  %v697 = vadd.f32 %v564, %v696
  %698 = vmatmul.bf16.gmra.mxu0 %v293
  %v699 = vpop.f32.mrf.mxu0
  %v700 = vadd.f32 %v567, %v699
  %v701 = vpop.f32.mrf.mxu0
  %v702 = vadd.f32 %v569, %v701
  %703 = vmatmul.bf16.gmra.mxu0 %v295
  %v704 = vpop.f32.mrf.mxu0
  %v705 = vadd.f32 %v572, %v704
  %v706 = vpop.f32.mrf.mxu0
  %707 = vdwg.mxu0
  %v708 = vmax.f32 %v585, 0.0
  %v709 = vmax.f32 %v587, 0.0
  %v710 = vmax.f32 %v590, 0.0
  %v711 = vmax.f32 %v592, 0.0
  %v712 = vmax.f32 %v595, 0.0
  %v713 = vmax.f32 %v597, 0.0
  %v714 = vmax.f32 %v600, 0.0
  %v715 = vmax.f32 %v602, 0.0
  %v716 = vmax.f32 %v605, 0.0
  %v717 = vmax.f32 %v607, 0.0
  %v718 = vmax.f32 %v610, 0.0
  %v719 = vmax.f32 %v612, 0.0
  %v720 = vmax.f32 %v615, 0.0
  %v721 = vmax.f32 %v617, 0.0
  %v722 = vmax.f32 %v620, 0.0
  %v723 = vmax.f32 %v622, 0.0
  %v724 = vmax.f32 %v625, 0.0
  %v725 = vmax.f32 %v627, 0.0
  %v726 = vmax.f32 %v630, 0.0
  %v727 = vmax.f32 %v632, 0.0
  %v728 = vmax.f32 %v635, 0.0
  %v729 = vmax.f32 %v637, 0.0
  %v730 = vmax.f32 %v640, 0.0
  %v731 = vmax.f32 %v642, 0.0
  %v732 = vmax.f32 %v645, 0.0
  %v733 = vmax.f32 %v647, 0.0
  %v734 = vmax.f32 %v650, 0.0
  %v735 = vmax.f32 %v652, 0.0
  %v736 = vmax.f32 %v655, 0.0
  %v737 = vmax.f32 %v657, 0.0
  %v738 = vmax.f32 %v660, 0.0
  %v739 = vmax.f32 %v662, 0.0
  %v740 = vmax.f32 %v665, 0.0
  %v741 = vmax.f32 %v667, 0.0
  %v742 = vmax.f32 %v670, 0.0
  %v743 = vmax.f32 %v672, 0.0
  %v744 = vmax.f32 %v675, 0.0
  %v745 = vmax.f32 %v677, 0.0
  %v746 = vmax.f32 %v680, 0.0
  %v747 = vmax.f32 %v682, 0.0
  %v748 = vmax.f32 %v685, 0.0
  %v749 = vmax.f32 %v687, 0.0
  %v750 = vmax.f32 %v690, 0.0
  %v751 = vmax.f32 %v692, 0.0
  %v752 = vmax.f32 %v695, 0.0
  %v753 = vmax.f32 %v697, 0.0
  %v754 = vmax.f32 %v700, 0.0
  %v755 = vmax.f32 %v702, 0.0
  %v756 = vmax.f32 %v705, 0.0
  %757 = vst [vmem:[%s3] sm:$0xff] %v708
  %758 = vst [vmem:[%s3 + $0x8] sm:$0xff] %v709
  %759 = vst [vmem:[%s3 + $0x10] sm:$0xff] %v710
  %760 = vst [vmem:[%s3 + $0x18] sm:$0xff] %v711
  %761 = vst [vmem:[%s3 + $0x20] sm:$0xff] %v712
  %762 = vst [vmem:[%s3 + $0x28] sm:$0xff] %v713
  %763 = vst [vmem:[%s3 + $0x30] sm:$0xff] %v714
  %764 = vst [vmem:[%s3 + $0x38] sm:$0xff] %v715
  %765 = vst [vmem:[%s3 + $0x40] sm:$0xff] %v716
  %766 = vst [vmem:[%s3 + $0x48] sm:$0xff] %v717
  %767 = vst [vmem:[%s3 + $0x50] sm:$0xff] %v718
  %768 = vst [vmem:[%s3 + $0x58] sm:$0xff] %v719
  %769 = vst [vmem:[%s3 + $0x60] sm:$0xff] %v720
  %770 = vst [vmem:[%s3 + $0x68] sm:$0xff] %v721
  %771 = vst [vmem:[%s3 + $0x70] sm:$0xff] %v722
  %772 = vst [vmem:[%s3 + $0x78] sm:$0xff] %v723
  %773 = vst [vmem:[%s3 + $0x80] sm:$0xff] %v724
  %774 = vst [vmem:[%s3 + $0x88] sm:$0xff] %v725
  %775 = vst [vmem:[%s3 + $0x90] sm:$0xff] %v726
  %776 = vst [vmem:[%s3 + $0x98] sm:$0xff] %v727
  %777 = vst [vmem:[%s3 + $0xa0] sm:$0xff] %v728
  %778 = vst [vmem:[%s3 + $0xa8] sm:$0xff] %v729
  %779 = vst [vmem:[%s3 + $0xb0] sm:$0xff] %v730
  %780 = vst [vmem:[%s3 + $0xb8] sm:$0xff] %v731
  %781 = vst [vmem:[%s3 + $0xc0] sm:$0xff] %v732
  %782 = vst [vmem:[%s3 + $0xc8] sm:$0xff] %v733
  %783 = vst [vmem:[%s3 + $0xd0] sm:$0xff] %v734
  %784 = vst [vmem:[%s3 + $0xd8] sm:$0xff] %v735
  %785 = vst [vmem:[%s3 + $0xe0] sm:$0xff] %v736
  %786 = vst [vmem:[%s3 + $0xe8] sm:$0xff] %v737
  %787 = vst [vmem:[%s3 + $0xf0] sm:$0xff] %v738
  %788 = vst [vmem:[%s3 + $0xf8] sm:$0xff] %v739
  %789 = vst [vmem:[%s3 + $0x100] sm:$0xff] %v740
  %790 = vst [vmem:[%s3 + $0x108] sm:$0xff] %v741
  %791 = vst [vmem:[%s3 + $0x110] sm:$0xff] %v742
  %792 = vst [vmem:[%s3 + $0x118] sm:$0xff] %v743
  %793 = vst [vmem:[%s3 + $0x120] sm:$0xff] %v744
  %794 = vst [vmem:[%s3 + $0x128] sm:$0xff] %v745
  %795 = vst [vmem:[%s3 + $0x130] sm:$0xff] %v746
  %796 = vst [vmem:[%s3 + $0x138] sm:$0xff] %v747
  %797 = vst [vmem:[%s3 + $0x140] sm:$0xff] %v748
  %798 = vst [vmem:[%s3 + $0x148] sm:$0xff] %v749
  %799 = vst [vmem:[%s3 + $0x150] sm:$0xff] %v750
  %800 = vst [vmem:[%s3 + $0x158] sm:$0xff] %v751
  %801 = vst [vmem:[%s3 + $0x160] sm:$0xff] %v752
  %802 = vst [vmem:[%s3 + $0x168] sm:$0xff] %v753
  %803 = vst [vmem:[%s3 + $0x170] sm:$0xff] %v754
  %804 = vst [vmem:[%s3 + $0x178] sm:$0xff] %v755
  %805 = vst [vmem:[%s3 + $0x180] sm:$0xff] %v756
  // Predicated region
  $region14: #{decoder_forward.8} parent=0 // pred_check
    _
  $region15: #{decoder_forward.8} parent=0 // pred_check_branch
    %807 = sbr.rel (0) target = $region17
  $region16: #{decoder_forward.8} parent=0 // pred_region
    _
  $region17: #{decoder_forward.8} parent=0 // pred_fallthru
    _
  // Predicated region
  $region18: #{decoder_forward.8} parent=0 // pred_check
    _
  $region19: #{decoder_forward.8} parent=0 // pred_check_branch
    %809 = sbr.rel (0) target = $region21
  $region20: #{decoder_forward.8} parent=0 // pred_region
    _
  $region21: #{decoder_forward.8} parent=0 // pred_fallthru
    _

// kernel: decoder_forward.9
$region0: #{decoder_forward.9}
  #allocation0 [shape = 'u32[]', space=smem, size = 0x4, offset = 0x4, fixed_abs, tag = 'smem constant byte address 0x4 - core index']
  #allocation1 [shape = 'u32[72,128]{1,0:T(1,128)}', space=vmem, size = 0x9000, scoped, tag = 'internal scratch']
  %s0 = inlined_call_operand.vmem [shape: bf16[1624,128], index: 0, kind: input, shape index: {}]
  %s1 = inlined_call_operand.vmem [shape: bf16[128,16], index: 1, kind: input, shape index: {}]
  %s2 = inlined_call_operand.vmem [shape: f32[1,16], index: 2, kind: input, shape index: {}]
  %s3 = inlined_call_operand.vmem [shape: f32[1624,16], index: 3, kind: output, shape index: {}]
  %s4 = sld [smem:[#allocation0]]
  $region93: #{decoder_forward.9} parent=0
    _
  %s6 = ssub.s32 1, %s4
  %s7 = scalar_select 0, %s6, %s4
  $region1: #{decoder_forward.9} parent=0
    #allocation2 [shape = 'u8[524288]{0}', space=vmem, size = 0x80000, scoped, tag = 'output window, operand 0']
    loop: start=0, step=1, limit=6
    $region2: #{decoder_forward.9} parent=1 // loop_pre_header
      _
    $region3: #{decoder_forward.9} parent=1 // loop_header
      %s9 = sphi 0, %s13
      %p10 = scmp.ge.s32.totalorder %s9, 6
      %s19 = sphi 0, %s21
      %s22 = sphi 0, %s19
      %s23 = sphi 0, %s22
      %s39 = sphi 0, %s23
      %s43 = sphi 0, %s43
      %s45 = sphi 0, %s43
      %s46 = sphi 0, %s45
      %s60 = sphi 0, %s46
      %s64 = sphi 0, %s64
      %s66 = sphi 0, %s64
      %s67 = sphi 0, %s66
      %s81 = sphi 0, %s67
      %s87 = sphi 0, %s89
      %s90 = sphi 0, %s87
      %s91 = sphi 0, %s90
      %s107 = sphi 0, %s91
    $region4: #{decoder_forward.9} parent=1 // loop_header_branch
      %12 = sbr.rel (%p10) target = $region8
    $region5: #{decoder_forward.9} parent=1 // loop_body
      %s14 = ssub.s32 %s9, 1
      %s15 = ssub.s32 %s9, 2
      %s16 = sadd.s32 %s9, 1
      %s17 = ssub.s32 %s9, %s16
      %p18 = scmp.eq.s32.totalorder %s17, 0
      %s20 = sadd.s32 %s19, 1
      %s21 = scalar_select %p18, %s19, %s20
      %p24 = pneg %p18
      %p25 = scmp.eq.s32.totalorder %s9, 3
      %p26 = por %p24, %p25
      %p27 = scmp.ne.s32.totalorder %s19, %s22
      %p28 = scmp.eq.s32.totalorder %s9, 0
      %p29 = por %p27, %p28
      %p30 = scmp.ne.s32.totalorder %s19, %s22
      %p31 = scmp.eq.s32.totalorder %s14, 3
      %p32 = por %p30, %p31
      %p33 = scmp.ne.s32.totalorder %s22, %s23
      %p34 = scmp.eq.s32.totalorder %s14, 0
      %p35 = por %p33, %p34
      %p36 = scmp.ne.s32.totalorder %s22, %s23
      %p37 = scmp.eq.s32.totalorder %s15, 3
      %p38 = por %p36, %p37
      %p40 = scmp.ne.s32.totalorder %s23, %s39
      %p41 = scmp.eq.s32.totalorder %s15, 0
      %p42 = por %p40, %p41
      %s44 = sadd.s32 %s43, 1
      %p47 = scmp.eq.s32.totalorder %s9, 3
      %p48 = scmp.ne.s32.totalorder %s43, %s45
      %p49 = scmp.eq.s32.totalorder %s9, 0
      %p50 = por %p48, %p49
      %p51 = scmp.ne.s32.totalorder %s43, %s45
      %p52 = scmp.eq.s32.totalorder %s14, 3
      %p53 = por %p51, %p52
      %p54 = scmp.ne.s32.totalorder %s45, %s46
      %p55 = scmp.eq.s32.totalorder %s14, 0
      %p56 = por %p54, %p55
      %p57 = scmp.ne.s32.totalorder %s45, %s46
      %p58 = scmp.eq.s32.totalorder %s15, 3
      %p59 = por %p57, %p58
      %p61 = scmp.ne.s32.totalorder %s46, %s60
      %p62 = scmp.eq.s32.totalorder %s15, 0
      %p63 = por %p61, %p62
      %s65 = sadd.s32 %s64, 1
      %p68 = scmp.eq.s32.totalorder %s9, 3
      %p69 = scmp.ne.s32.totalorder %s64, %s66
      %p70 = scmp.eq.s32.totalorder %s9, 0
      %p71 = por %p69, %p70
      %p72 = scmp.ne.s32.totalorder %s64, %s66
      %p73 = scmp.eq.s32.totalorder %s14, 3
      %p74 = por %p72, %p73
      %p75 = scmp.ne.s32.totalorder %s66, %s67
      %p76 = scmp.eq.s32.totalorder %s14, 0
      %p77 = por %p75, %p76
      %p78 = scmp.ne.s32.totalorder %s66, %s67
      %p79 = scmp.eq.s32.totalorder %s15, 3
      %p80 = por %p78, %p79
      %p82 = scmp.ne.s32.totalorder %s67, %s81
      %p83 = scmp.eq.s32.totalorder %s15, 0
      %p84 = por %p82, %p83
      %s85 = ssub.s32 %s9, %s16
      %p86 = scmp.eq.s32.totalorder %s85, 0
      %s88 = sadd.s32 %s87, 1
      %s89 = scalar_select %p86, %s87, %s88
      %p92 = pneg %p86
      %p93 = scmp.eq.s32.totalorder %s9, 3
      %p94 = por %p92, %p93
      %p95 = scmp.ne.s32.totalorder %s87, %s90
      %p96 = scmp.eq.s32.totalorder %s9, 0
      %p97 = por %p95, %p96
      %p98 = scmp.ne.s32.totalorder %s87, %s90
      %p99 = scmp.eq.s32.totalorder %s14, 3
      %p100 = por %p98, %p99
      %p101 = scmp.ne.s32.totalorder %s90, %s91
      %p102 = scmp.eq.s32.totalorder %s14, 0
      %p103 = por %p101, %p102
      %p104 = scmp.ne.s32.totalorder %s90, %s91
      %p105 = scmp.eq.s32.totalorder %s15, 3
      %p106 = por %p104, %p105
      %p108 = scmp.ne.s32.totalorder %s91, %s107
      %p109 = scmp.eq.s32.totalorder %s15, 0
      %p110 = por %p108, %p109
      %p111 = scmp.le.s32.totalorder 1, %s9
      %p112 = scmp.lt.s32.totalorder %s9, 5
      %p113 = pnand %p111, %p112
      %p114 = pneg %p113
      // Predicated region
      $region9: #{decoder_forward.9} parent=5 // pred_check
        _
      $region10: #{decoder_forward.9} parent=5 // pred_check_branch
        %116 = sbr.rel (%p113) target = $region12
      $region11: #{decoder_forward.9} parent=5 // pred_region
        %s117 = ssub.s32 %s9, 1
        // Predicated region
        $region13: #{decoder_forward.9} parent=11 // pred_check
          %p118 = pneg %p56
        $region14: #{decoder_forward.9} parent=11 // pred_check_branch
          %120 = sbr.rel (%p118) target = $region16
        $region15: #{decoder_forward.9} parent=11 // pred_region
          _
        $region16: #{decoder_forward.9} parent=11 // pred_fallthru
          _
        // Predicated region
        $region17: #{decoder_forward.9} parent=11 // pred_check
          %p121 = pneg %p77
        $region18: #{decoder_forward.9} parent=11 // pred_check_branch
          %123 = sbr.rel (%p121) target = $region20
        $region19: #{decoder_forward.9} parent=11 // pred_region
          _
        $region20: #{decoder_forward.9} parent=11 // pred_fallthru
          _
      $region12: #{decoder_forward.9} parent=5 // pred_fallthru
        _
      %p124 = scmp.lt.s32.totalorder %s9, 4
      // Predicated region
      $region21: #{decoder_forward.9} parent=5 // pred_check
        %p125 = pneg %p124
      $region22: #{decoder_forward.9} parent=5 // pred_check_branch
        %127 = sbr.rel (%p125) target = $region24
      $region23: #{decoder_forward.9} parent=5 // pred_region
        // Predicated region
        $region25: #{decoder_forward.9} parent=23 // pred_check
          %p128 = pneg %p29
        $region26: #{decoder_forward.9} parent=23 // pred_check_branch
          %130 = sbr.rel (%p128) target = $region28
        $region27: #{decoder_forward.9} parent=23 // pred_region
          %s131 = smul.u32 64, %s9
          %s132 = ssub.s32 203, %s131
          %p133 = scmp.lt.s32.totalorder %s132, 64
          %s134 = scalar_select %p133, %s132, 64
          %s135 = smul.u32 4, %s134
          %p136 = scmp.lt.s32.totalorder %s131, 202
          %s137 = scalar_select %p136, %s131, 202
          %s138 = smul.addr %s137, 4
          %s139 = scalar_lea.vmem %s0, %s138
          %s140 = smul.u32 64, %s9
          %s141 = ssub.s32 203, %s140
          %p142 = scmp.lt.s32.totalorder %s141, 64
          %s143 = scalar_select %p142, %s141, 64
          %s144 = smul.u32 4, %s143
        $region28: #{decoder_forward.9} parent=23 // pred_fallthru
          _
      $region24: #{decoder_forward.9} parent=5 // pred_fallthru
        _
      %p145 = scmp.le.s32.totalorder 1, %s9
      %p146 = scmp.lt.s32.totalorder %s9, 5
      %p147 = pnand %p145, %p146
      %p148 = pneg %p147
      // Predicated region
      $region29: #{decoder_forward.9} parent=5 // pred_check
        _
      $region30: #{decoder_forward.9} parent=5 // pred_check_branch
        %150 = sbr.rel (%p147) target = $region32
      $region31: #{decoder_forward.9} parent=5 // pred_region
        %s151 = ssub.s32 %s9, 1
        %s152 = smul.u32 64, %s14
        %s153 = ssub.s32 203, %s152
        %p154 = scmp.lt.s32.totalorder %s153, 64
        %s155 = scalar_select %p154, %s153, 64
        %s156 = smul.u32 4, %s155
        %p157 = scmp.lt.s32.totalorder %s152, 202
        %s158 = scalar_select %p157, %s152, 202
        %s159 = smul.addr %s158, 4
        %s160 = scalar_lea.vmem %s0, %s159
        %p161 = pneg %p35
        %p162 = pneg %p32
        %p163 = pneg %p56
        %p164 = pneg %p53
        %p165 = pneg %p77
        %p166 = pneg %p74
        %p167 = pneg %p103
        %p168 = pneg %p100
        %s169 = sand.u32 %s90, 1
        %s170 = sand.u32 %s90, 1
        %s171 = smul.addr %s170, 512
        %s172 = scalar_lea.vmem [#allocation2], %s171
        %s173 = smul.u32 64, %s14
        %s174 = ssub.s32 203, %s173
        %p175 = scmp.lt.s32.totalorder %s174, 64
        %s176 = scalar_select %p175, %s174, 64
        %s177 = smul.u32 4, %s176
        %p178 = scmp.lt.s32.totalorder %s173, 202
        %s179 = scalar_select %p178, %s173, 202
        %s180 = smul.addr %s179, 4
        %s181 = scalar_lea.vmem %s0, %s180
        %s182 = smul.u32 64, %s14
        %s183 = ssub.s32 203, %s182
        %p184 = scmp.lt.s32.totalorder %s183, 64
        %s185 = scalar_select %p184, %s183, 64
        %s186 = smul.u32 4, %s185
        %s187 = smul.u32 64, %s14
        %s188 = ssub.s32 203, %s187
        %p189 = scmp.lt.s32.totalorder %s188, 64
        %s190 = scalar_select %p189, %s188, 64
        %s191 = smul.u32 8, %s190
        %v192 = vld [vmem:[%s181] sm:$0xf]
        %v193 = vld [vmem:[%s181 + $0x4] sm:$0xf]
        %v194 = vld [vmem:[%s181 + $0x8] sm:$0xf]
        %v195 = vld [vmem:[%s181 + $0xc] sm:$0xf]
        %v196 = vld [vmem:[%s181 + $0x10] sm:$0xf]
        %v197 = vld [vmem:[%s181 + $0x14] sm:$0xf]
        %v198 = vld [vmem:[%s181 + $0x18] sm:$0xf]
        %v199 = vld [vmem:[%s181 + $0x1c] sm:$0xf]
        %v200 = vld [vmem:[%s181 + $0x20] sm:$0xf]
        %v201 = vld [vmem:[%s181 + $0x24] sm:$0xf]
        %v202 = vld [vmem:[%s181 + $0x28] sm:$0xf]
        %v203 = vld [vmem:[%s181 + $0x2c] sm:$0xf]
        %v204 = vld [vmem:[%s181 + $0x30] sm:$0xf]
        %v205 = vld [vmem:[%s181 + $0x34] sm:$0xf]
        %v206 = vld [vmem:[%s181 + $0x38] sm:$0xf]
        %v207 = vld [vmem:[%s181 + $0x3c] sm:$0xf]
        %v208 = vld [vmem:[%s181 + $0x40] sm:$0xf]
        %v209 = vld [vmem:[%s181 + $0x44] sm:$0xf]
        %v210 = vld [vmem:[%s181 + $0x48] sm:$0xf]
        %v211 = vld [vmem:[%s181 + $0x4c] sm:$0xf]
        %v212 = vld [vmem:[%s181 + $0x50] sm:$0xf]
        %v213 = vld [vmem:[%s181 + $0x54] sm:$0xf]
        %v214 = vld [vmem:[%s181 + $0x58] sm:$0xf]
        %v215 = vld [vmem:[%s181 + $0x5c] sm:$0xf]
        %v216 = vld [vmem:[%s181 + $0x60] sm:$0xf]
        %v217 = vld [vmem:[%s181 + $0x64] sm:$0xf]
        %v218 = vld [vmem:[%s181 + $0x68] sm:$0xf]
        %v219 = vld [vmem:[%s181 + $0x6c] sm:$0xf]
        %v220 = vld [vmem:[%s181 + $0x70] sm:$0xf]
        %v221 = vld [vmem:[%s181 + $0x74] sm:$0xf]
        %v222 = vld [vmem:[%s181 + $0x78] sm:$0xf]
        %v223 = vld [vmem:[%s181 + $0x7c] sm:$0xf]
        %v224 = vld [vmem:[%s181 + $0x80] sm:$0xf]
        %v225 = vld [vmem:[%s181 + $0x84] sm:$0xf]
        %v226 = vld [vmem:[%s181 + $0x88] sm:$0xf]
        %v227 = vld [vmem:[%s181 + $0x8c] sm:$0xf]
        %v228 = vld [vmem:[%s181 + $0x90] sm:$0xf]
        %v229 = vld [vmem:[%s181 + $0x94] sm:$0xf]
        %v230 = vld [vmem:[%s181 + $0x98] sm:$0xf]
        %v231 = vld [vmem:[%s181 + $0x9c] sm:$0xf]
        %v232 = vld [vmem:[%s181 + $0xa0] sm:$0xf]
        %v233 = vld [vmem:[%s181 + $0xa4] sm:$0xf]
        %v234 = vld [vmem:[%s181 + $0xa8] sm:$0xf]
        %v235 = vld [vmem:[%s181 + $0xac] sm:$0xf]
        %v236 = vld [vmem:[%s181 + $0xb0] sm:$0xf]
        %v237 = vld [vmem:[%s181 + $0xb4] sm:$0xf]
        %v238 = vld [vmem:[%s181 + $0xb8] sm:$0xf]
        %v239 = vld [vmem:[%s181 + $0xbc] sm:$0xf]
        %v240 = vld [vmem:[%s181 + $0xc0] sm:$0xf]
        %v241 = vld [vmem:[%s181 + $0xc4] sm:$0xf]
        %v242 = vld [vmem:[%s181 + $0xc8] sm:$0xf]
        %v243 = vld [vmem:[%s181 + $0xcc] sm:$0xf]
        %v244 = vld [vmem:[%s181 + $0xd0] sm:$0xf]
        %v245 = vld [vmem:[%s181 + $0xd4] sm:$0xf]
        %v246 = vld [vmem:[%s181 + $0xd8] sm:$0xf]
        %v247 = vld [vmem:[%s181 + $0xdc] sm:$0xf]
        %v248 = vld [vmem:[%s181 + $0xe0] sm:$0xf]
        %v249 = vld [vmem:[%s181 + $0xe4] sm:$0xf]
        %v250 = vld [vmem:[%s181 + $0xe8] sm:$0xf]
        %v251 = vld [vmem:[%s181 + $0xec] sm:$0xf]
        %v252 = vld [vmem:[%s181 + $0xf0] sm:$0xf]
        %v253 = vld [vmem:[%s181 + $0xf4] sm:$0xf]
        %v254 = vld [vmem:[%s181 + $0xf8] sm:$0xf]
        %v255 = vld [vmem:[%s181 + $0xfc] sm:$0xf]
        %v256 = vld [vmem:[%s1] sm:$0xf]
        %v257 = vld [vmem:[%s1 + $0x4] sm:$0xf]
        %v258 = vld [vmem:[%s1 + $0x8] sm:$0xf]
        %v259 = vld [vmem:[%s1 + $0xc] sm:$0xf]
        %v260 = vld [vmem:[%s1 + $0x10] sm:$0xf]
        %v261 = vld [vmem:[%s1 + $0x14] sm:$0xf]
        %v262 = vld [vmem:[%s1 + $0x18] sm:$0xf]
        %v263 = vld [vmem:[%s1 + $0x1c] sm:$0xf]
        %v264 = vld [vmem:[%s1 + $0x20] sm:$0xf]
        %v265 = vld [vmem:[%s1 + $0x24] sm:$0xf]
        %v266 = vld [vmem:[%s1 + $0x28] sm:$0xf]
        %v267 = vld [vmem:[%s1 + $0x2c] sm:$0xf]
        %v268 = vld [vmem:[%s1 + $0x30] sm:$0xf]
        %v269 = vld [vmem:[%s1 + $0x34] sm:$0xf]
        %v270 = vld [vmem:[%s1 + $0x38] sm:$0xf]
        %v271 = vld [vmem:[%s1 + $0x3c] sm:$0xf]
        %v272 = vld [vmem:[%s2] sm:$0x1]
        %v274 = vperm.slane %v272, 0
        %v340 = vunpack.c.l.b16 %v192
        %v341 = vunpack.c.l.b16 %v193
        %v342 = vunpack.c.l.b16 %v194
        %v343 = vunpack.c.l.b16 %v195
        %v344 = vunpack.c.l.b16 %v196
        %v345 = vunpack.c.l.b16 %v197
        %v346 = vunpack.c.l.b16 %v198
        %v347 = vunpack.c.l.b16 %v199
        %v348 = vunpack.c.l.b16 %v200
        %v349 = vunpack.c.l.b16 %v201
        %v350 = vunpack.c.l.b16 %v202
        %v351 = vunpack.c.l.b16 %v203
        %v352 = vunpack.c.l.b16 %v204
        %v353 = vunpack.c.l.b16 %v205
        %v354 = vunpack.c.l.b16 %v206
        %v355 = vunpack.c.l.b16 %v207
        %v356 = vunpack.c.l.b16 %v208
        %v357 = vunpack.c.l.b16 %v209
        %v358 = vunpack.c.l.b16 %v210
        %v359 = vunpack.c.l.b16 %v211
        %v360 = vunpack.c.l.b16 %v212
        %v361 = vunpack.c.l.b16 %v213
        %v362 = vunpack.c.l.b16 %v214
        %v363 = vunpack.c.l.b16 %v215
        %v364 = vunpack.c.l.b16 %v216
        %v365 = vunpack.c.l.b16 %v217
        %v366 = vunpack.c.l.b16 %v218
        %v367 = vunpack.c.l.b16 %v219
        %v368 = vunpack.c.l.b16 %v220
        %v369 = vunpack.c.l.b16 %v221
        %v370 = vunpack.c.l.b16 %v222
        %v371 = vunpack.c.l.b16 %v223
        %v372 = vunpack.c.l.b16 %v224
        %v373 = vunpack.c.l.b16 %v225
        %v374 = vunpack.c.l.b16 %v226
        %v375 = vunpack.c.l.b16 %v227
        %v376 = vunpack.c.l.b16 %v228
        %v377 = vunpack.c.l.b16 %v229
        %v378 = vunpack.c.l.b16 %v230
        %v379 = vunpack.c.l.b16 %v231
        %v380 = vunpack.c.l.b16 %v232
        %v381 = vunpack.c.l.b16 %v233
        %v382 = vunpack.c.l.b16 %v234
        %v383 = vunpack.c.l.b16 %v235
        %v384 = vunpack.c.l.b16 %v236
        %v385 = vunpack.c.l.b16 %v237
        %v386 = vunpack.c.l.b16 %v238
        %v387 = vunpack.c.l.b16 %v239
        %v388 = vunpack.c.l.b16 %v240
        %v389 = vunpack.c.l.b16 %v241
        %v390 = vunpack.c.l.b16 %v242
        %v391 = vunpack.c.l.b16 %v243
        %v392 = vunpack.c.l.b16 %v244
        %v393 = vunpack.c.l.b16 %v245
        %v394 = vunpack.c.l.b16 %v246
        %v395 = vunpack.c.l.b16 %v247
        %v396 = vunpack.c.l.b16 %v248
        %v397 = vunpack.c.l.b16 %v249
        %v398 = vunpack.c.l.b16 %v250
        %v399 = vunpack.c.l.b16 %v251
        %v400 = vunpack.c.l.b16 %v252
        %v401 = vunpack.c.l.b16 %v253
        %v402 = vunpack.c.l.b16 %v254
        %v403 = vunpack.c.l.b16 %v255
        %v404 = vpack.c.b16 %v341, %v340
        %v405 = vpack.c.b16 %v343, %v342
        %v406 = vpack.c.b16 %v345, %v344
        %v407 = vpack.c.b16 %v347, %v346
        %v408 = vpack.c.b16 %v349, %v348
        %v409 = vpack.c.b16 %v351, %v350
        %v410 = vpack.c.b16 %v353, %v352
        %v411 = vpack.c.b16 %v355, %v354
        %v412 = vpack.c.b16 %v357, %v356
        %v413 = vpack.c.b16 %v359, %v358
        %v414 = vpack.c.b16 %v361, %v360
        %v415 = vpack.c.b16 %v363, %v362
        %v416 = vpack.c.b16 %v365, %v364
        %v417 = vpack.c.b16 %v367, %v366
        %v418 = vpack.c.b16 %v369, %v368
        %v419 = vpack.c.b16 %v371, %v370
        %v420 = vpack.c.b16 %v373, %v372
        %v421 = vpack.c.b16 %v375, %v374
        %v422 = vpack.c.b16 %v377, %v376
        %v423 = vpack.c.b16 %v379, %v378
        %v424 = vpack.c.b16 %v381, %v380
        %v425 = vpack.c.b16 %v383, %v382
        %v426 = vpack.c.b16 %v385, %v384
        %v427 = vpack.c.b16 %v387, %v386
        %v428 = vpack.c.b16 %v389, %v388
        %v429 = vpack.c.b16 %v391, %v390
        %v430 = vpack.c.b16 %v393, %v392
        %v431 = vpack.c.b16 %v395, %v394
        %v432 = vpack.c.b16 %v397, %v396
        %v433 = vpack.c.b16 %v399, %v398
        %v434 = vpack.c.b16 %v401, %v400
        %v435 = vpack.c.b16 %v403, %v402
        %v484 = vunpack.c.l.b16 %v256
        %v485 = vunpack.c.l.b16 %v257
        %v486 = vunpack.c.l.b16 %v258
        %v487 = vunpack.c.l.b16 %v259
        %v488 = vunpack.c.l.b16 %v260
        %v489 = vunpack.c.l.b16 %v261
        %v490 = vunpack.c.l.b16 %v262
        %v491 = vunpack.c.l.b16 %v263
        %v492 = vunpack.c.l.b16 %v264
        %v493 = vunpack.c.l.b16 %v265
        %v494 = vunpack.c.l.b16 %v266
        %v495 = vunpack.c.l.b16 %v267
        %v496 = vunpack.c.l.b16 %v268
        %v497 = vunpack.c.l.b16 %v269
        %v498 = vunpack.c.l.b16 %v270
        %v499 = vunpack.c.l.b16 %v271
        %v500 = vpack.c.b16 %v485, %v484
        %v501 = vpack.c.b16 %v487, %v486
        %v502 = vpack.c.b16 %v489, %v488
        %v503 = vpack.c.b16 %v491, %v490
        %v504 = vpack.c.b16 %v493, %v492
        %v505 = vpack.c.b16 %v495, %v494
        %v506 = vpack.c.b16 %v497, %v496
        %v507 = vpack.c.b16 %v499, %v498
        %516 = vmatpush.bf16.msra.mxu0 %v507
        %517 = vmatpush.bf16.msra.mxu0 %v506
        %518 = vmatpush.bf16.msra.mxu0 %v505
        %519 = vmatpush.bf16.msra.mxu0 %v504
        %520 = vmatpush.bf16.msra.mxu0 %v503
        %521 = vmatpush.bf16.msra.mxu0 %v502
        %522 = vmatpush.bf16.msra.mxu0 %v501
        %523 = vmatpush.bf16.msra.mxu0 %v500
        %524 = vmatmul.bf16.gmra.mxu0 %v404
        %v525 = vpop.f32.mrf.mxu0
        %v526 = vadd.f32 %v274, %v525
        %v527 = vpop.f32.mrf.mxu0
        %v528 = vadd.f32 %v274, %v527
        %529 = vmatmul.bf16.gmra.mxu0 %v405
        %v530 = vpop.f32.mrf.mxu0
        %v531 = vadd.f32 %v274, %v530
        %v532 = vpop.f32.mrf.mxu0
        %v533 = vadd.f32 %v274, %v532
        %534 = vmatmul.bf16.gmra.mxu0 %v406
        %v535 = vpop.f32.mrf.mxu0
        %v536 = vadd.f32 %v274, %v535
        %v537 = vpop.f32.mrf.mxu0
        %v538 = vadd.f32 %v274, %v537
        %539 = vmatmul.bf16.gmra.mxu0 %v407
        %v540 = vpop.f32.mrf.mxu0
        %v541 = vadd.f32 %v274, %v540
        %v542 = vpop.f32.mrf.mxu0
        %v543 = vadd.f32 %v274, %v542
        %544 = vmatmul.bf16.gmra.mxu0 %v408
        %v545 = vpop.f32.mrf.mxu0
        %v546 = vadd.f32 %v274, %v545
        %v547 = vpop.f32.mrf.mxu0
        %v548 = vadd.f32 %v274, %v547
        %549 = vmatmul.bf16.gmra.mxu0 %v409
        %v550 = vpop.f32.mrf.mxu0
        %v551 = vadd.f32 %v274, %v550
        %v552 = vpop.f32.mrf.mxu0
        %v553 = vadd.f32 %v274, %v552
        %554 = vmatmul.bf16.gmra.mxu0 %v410
        %v555 = vpop.f32.mrf.mxu0
        %v556 = vadd.f32 %v274, %v555
        %v557 = vpop.f32.mrf.mxu0
        %v558 = vadd.f32 %v274, %v557
        %559 = vmatmul.bf16.gmra.mxu0 %v411
        %v560 = vpop.f32.mrf.mxu0
        %v561 = vadd.f32 %v274, %v560
        %v562 = vpop.f32.mrf.mxu0
        %v563 = vadd.f32 %v274, %v562
        %564 = vmatmul.bf16.gmra.mxu0 %v412
        %v565 = vpop.f32.mrf.mxu0
        %v566 = vadd.f32 %v274, %v565
        %v567 = vpop.f32.mrf.mxu0
        %v568 = vadd.f32 %v274, %v567
        %569 = vmatmul.bf16.gmra.mxu0 %v413
        %v570 = vpop.f32.mrf.mxu0
        %v571 = vadd.f32 %v274, %v570
        %v572 = vpop.f32.mrf.mxu0
        %v573 = vadd.f32 %v274, %v572
        %574 = vmatmul.bf16.gmra.mxu0 %v414
        %v575 = vpop.f32.mrf.mxu0
        %v576 = vadd.f32 %v274, %v575
        %v577 = vpop.f32.mrf.mxu0
        %v578 = vadd.f32 %v274, %v577
        %579 = vmatmul.bf16.gmra.mxu0 %v415
        %v580 = vpop.f32.mrf.mxu0
        %v581 = vadd.f32 %v274, %v580
        %v582 = vpop.f32.mrf.mxu0
        %v583 = vadd.f32 %v274, %v582
        %584 = vmatmul.bf16.gmra.mxu0 %v416
        %v585 = vpop.f32.mrf.mxu0
        %v586 = vadd.f32 %v274, %v585
        %v587 = vpop.f32.mrf.mxu0
        %v588 = vadd.f32 %v274, %v587
        %589 = vmatmul.bf16.gmra.mxu0 %v417
        %v590 = vpop.f32.mrf.mxu0
        %v591 = vadd.f32 %v274, %v590
        %v592 = vpop.f32.mrf.mxu0
        %v593 = vadd.f32 %v274, %v592
        %594 = vmatmul.bf16.gmra.mxu0 %v418
        %v595 = vpop.f32.mrf.mxu0
        %v596 = vadd.f32 %v274, %v595
        %v597 = vpop.f32.mrf.mxu0
        %v598 = vadd.f32 %v274, %v597
        %599 = vmatmul.bf16.gmra.mxu0 %v419
        %v600 = vpop.f32.mrf.mxu0
        %v601 = vadd.f32 %v274, %v600
        %v602 = vpop.f32.mrf.mxu0
        %v603 = vadd.f32 %v274, %v602
        %604 = vmatmul.bf16.gmra.mxu0 %v420
        %v605 = vpop.f32.mrf.mxu0
        %v606 = vadd.f32 %v274, %v605
        %v607 = vpop.f32.mrf.mxu0
        %v608 = vadd.f32 %v274, %v607
        %609 = vmatmul.bf16.gmra.mxu0 %v421
        %v610 = vpop.f32.mrf.mxu0
        %v611 = vadd.f32 %v274, %v610
        %v612 = vpop.f32.mrf.mxu0
        %v613 = vadd.f32 %v274, %v612
        %614 = vmatmul.bf16.gmra.mxu0 %v422
        %v615 = vpop.f32.mrf.mxu0
        %v616 = vadd.f32 %v274, %v615
        %v617 = vpop.f32.mrf.mxu0
        %v618 = vadd.f32 %v274, %v617
        %619 = vmatmul.bf16.gmra.mxu0 %v423
        %v620 = vpop.f32.mrf.mxu0
        %v621 = vadd.f32 %v274, %v620
        %v622 = vpop.f32.mrf.mxu0
        %v623 = vadd.f32 %v274, %v622
        %624 = vmatmul.bf16.gmra.mxu0 %v424
        %v625 = vpop.f32.mrf.mxu0
        %v626 = vadd.f32 %v274, %v625
        %v627 = vpop.f32.mrf.mxu0
        %v628 = vadd.f32 %v274, %v627
        %629 = vmatmul.bf16.gmra.mxu0 %v425
        %v630 = vpop.f32.mrf.mxu0
        %v631 = vadd.f32 %v274, %v630
        %v632 = vpop.f32.mrf.mxu0
        %v633 = vadd.f32 %v274, %v632
        %634 = vmatmul.bf16.gmra.mxu0 %v426
        %v635 = vpop.f32.mrf.mxu0
        %v636 = vadd.f32 %v274, %v635
        %v637 = vpop.f32.mrf.mxu0
        %v638 = vadd.f32 %v274, %v637
        %639 = vmatmul.bf16.gmra.mxu0 %v427
        %v640 = vpop.f32.mrf.mxu0
        %v641 = vadd.f32 %v274, %v640
        %v642 = vpop.f32.mrf.mxu0
        %v643 = vadd.f32 %v274, %v642
        %644 = vmatmul.bf16.gmra.mxu0 %v428
        %v645 = vpop.f32.mrf.mxu0
        %v646 = vadd.f32 %v274, %v645
        %v647 = vpop.f32.mrf.mxu0
        %v648 = vadd.f32 %v274, %v647
        %649 = vmatmul.bf16.gmra.mxu0 %v429
        %v650 = vpop.f32.mrf.mxu0
        %v651 = vadd.f32 %v274, %v650
        %v652 = vpop.f32.mrf.mxu0
        %v653 = vadd.f32 %v274, %v652
        %654 = vmatmul.bf16.gmra.mxu0 %v430
        %v655 = vpop.f32.mrf.mxu0
        %v656 = vadd.f32 %v274, %v655
        %v657 = vpop.f32.mrf.mxu0
        %v658 = vadd.f32 %v274, %v657
        %659 = vmatmul.bf16.gmra.mxu0 %v431
        %v660 = vpop.f32.mrf.mxu0
        %v661 = vadd.f32 %v274, %v660
        %v662 = vpop.f32.mrf.mxu0
        %v663 = vadd.f32 %v274, %v662
        %664 = vmatmul.bf16.gmra.mxu0 %v432
        %v665 = vpop.f32.mrf.mxu0
        %v666 = vadd.f32 %v274, %v665
        %v667 = vpop.f32.mrf.mxu0
        %v668 = vadd.f32 %v274, %v667
        %669 = vmatmul.bf16.gmra.mxu0 %v433
        %v670 = vpop.f32.mrf.mxu0
        %v671 = vadd.f32 %v274, %v670
        %v672 = vpop.f32.mrf.mxu0
        %v673 = vadd.f32 %v274, %v672
        %674 = vmatmul.bf16.gmra.mxu0 %v434
        %v675 = vpop.f32.mrf.mxu0
        %v676 = vadd.f32 %v274, %v675
        %v677 = vpop.f32.mrf.mxu0
        %v678 = vadd.f32 %v274, %v677
        %679 = vmatmul.bf16.gmra.mxu0 %v435
        %v680 = vpop.f32.mrf.mxu0
        %v681 = vadd.f32 %v274, %v680
        %v682 = vpop.f32.mrf.mxu0
        %v683 = vadd.f32 %v274, %v682
        %684 = vdwg.mxu0
        %v685 = vxor.u32 %v526, 2147483648
        %v686 = vxor.u32 %v528, 2147483648
        %v687 = vxor.u32 %v531, 2147483648
        %v688 = vxor.u32 %v533, 2147483648
        %v689 = vxor.u32 %v536, 2147483648
        %v690 = vxor.u32 %v538, 2147483648
        %v691 = vxor.u32 %v541, 2147483648
        %v692 = vxor.u32 %v543, 2147483648
        %v693 = vxor.u32 %v546, 2147483648
        %v694 = vxor.u32 %v548, 2147483648
        %v695 = vxor.u32 %v551, 2147483648
        %v696 = vxor.u32 %v553, 2147483648
        %v697 = vxor.u32 %v556, 2147483648
        %v698 = vxor.u32 %v558, 2147483648
        %v699 = vxor.u32 %v561, 2147483648
        %v700 = vxor.u32 %v563, 2147483648
        %v701 = vxor.u32 %v566, 2147483648
        %v702 = vxor.u32 %v568, 2147483648
        %v703 = vxor.u32 %v571, 2147483648
        %v704 = vxor.u32 %v573, 2147483648
        %v705 = vxor.u32 %v576, 2147483648
        %v706 = vxor.u32 %v578, 2147483648
        %v707 = vxor.u32 %v581, 2147483648
        %v708 = vxor.u32 %v583, 2147483648
        %v709 = vxor.u32 %v586, 2147483648
        %v710 = vxor.u32 %v588, 2147483648
        %v711 = vxor.u32 %v591, 2147483648
        %v712 = vxor.u32 %v593, 2147483648
        %v713 = vxor.u32 %v596, 2147483648
        %v714 = vxor.u32 %v598, 2147483648
        %v715 = vxor.u32 %v601, 2147483648
        %v716 = vxor.u32 %v603, 2147483648
        %v717 = vxor.u32 %v606, 2147483648
        %v718 = vxor.u32 %v608, 2147483648
        %v719 = vxor.u32 %v611, 2147483648
        %v720 = vxor.u32 %v613, 2147483648
        %v721 = vxor.u32 %v616, 2147483648
        %v722 = vxor.u32 %v618, 2147483648
        %v723 = vxor.u32 %v621, 2147483648
        %v724 = vxor.u32 %v623, 2147483648
        %v725 = vxor.u32 %v626, 2147483648
        %v726 = vxor.u32 %v628, 2147483648
        %v727 = vxor.u32 %v631, 2147483648
        %v728 = vxor.u32 %v633, 2147483648
        %v729 = vxor.u32 %v636, 2147483648
        %v730 = vxor.u32 %v638, 2147483648
        %v731 = vxor.u32 %v641, 2147483648
        %v732 = vxor.u32 %v643, 2147483648
        %v733 = vxor.u32 %v646, 2147483648
        %v734 = vxor.u32 %v648, 2147483648
        %v735 = vxor.u32 %v651, 2147483648
        %v736 = vxor.u32 %v653, 2147483648
        %v737 = vxor.u32 %v656, 2147483648
        %v738 = vxor.u32 %v658, 2147483648
        %v739 = vxor.u32 %v661, 2147483648
        %v740 = vxor.u32 %v663, 2147483648
        %v741 = vxor.u32 %v666, 2147483648
        %v742 = vxor.u32 %v668, 2147483648
        %v743 = vxor.u32 %v671, 2147483648
        %v744 = vxor.u32 %v673, 2147483648
        %v745 = vxor.u32 %v676, 2147483648
        %v746 = vxor.u32 %v678, 2147483648
        %v747 = vxor.u32 %v681, 2147483648
        %v748 = vxor.u32 %v683, 2147483648
        %v749 = vmul.f32 %v685, 1.442695
        %v750 = vpow.pop %v749
        %v751 = vmul.f32 %v686, 1.442695
        %v752 = vpow.pop %v751
        %v753 = vmul.f32 %v687, 1.442695
        %v754 = vpow.pop %v753
        %v755 = vmul.f32 %v688, 1.442695
        %v756 = vpow.pop %v755
        %v757 = vmul.f32 %v689, 1.442695
        %v758 = vpow.pop %v757
        %v759 = vmul.f32 %v690, 1.442695
        %v760 = vpow.pop %v759
        %v761 = vmul.f32 %v691, 1.442695
        %v762 = vpow.pop %v761
        %v763 = vmul.f32 %v692, 1.442695
        %v764 = vpow.pop %v763
        %v765 = vmul.f32 %v693, 1.442695
        %v766 = vpow.pop %v765
        %v767 = vmul.f32 %v694, 1.442695
        %v768 = vpow.pop %v767
        %v769 = vmul.f32 %v695, 1.442695
        %v770 = vpow.pop %v769
        %v771 = vmul.f32 %v696, 1.442695
        %v772 = vpow.pop %v771
        %v773 = vmul.f32 %v697, 1.442695
        %v774 = vpow.pop %v773
        %v775 = vmul.f32 %v698, 1.442695
        %v776 = vpow.pop %v775
        %v777 = vmul.f32 %v699, 1.442695
        %v778 = vpow.pop %v777
        %v779 = vmul.f32 %v700, 1.442695
        %v780 = vpow.pop %v779
        %v781 = vmul.f32 %v701, 1.442695
        %v782 = vpow.pop %v781
        %v783 = vmul.f32 %v702, 1.442695
        %v784 = vpow.pop %v783
        %v785 = vmul.f32 %v703, 1.442695
        %v786 = vpow.pop %v785
        %v787 = vmul.f32 %v704, 1.442695
        %v788 = vpow.pop %v787
        %v789 = vmul.f32 %v705, 1.442695
        %v790 = vpow.pop %v789
        %v791 = vmul.f32 %v706, 1.442695
        %v792 = vpow.pop %v791
        %v793 = vmul.f32 %v707, 1.442695
        %v794 = vpow.pop %v793
        %v795 = vmul.f32 %v708, 1.442695
        %v796 = vpow.pop %v795
        %v797 = vmul.f32 %v709, 1.442695
        %v798 = vpow.pop %v797
        %v799 = vmul.f32 %v710, 1.442695
        %v800 = vpow.pop %v799
        %v801 = vmul.f32 %v711, 1.442695
        %v802 = vpow.pop %v801
        %v803 = vmul.f32 %v712, 1.442695
        %v804 = vpow.pop %v803
        %v805 = vmul.f32 %v713, 1.442695
        %v806 = vpow.pop %v805
        %v807 = vmul.f32 %v714, 1.442695
        %v808 = vpow.pop %v807
        %v809 = vmul.f32 %v715, 1.442695
        %v810 = vpow.pop %v809
        %v811 = vmul.f32 %v716, 1.442695
        %v812 = vpow.pop %v811
        %v813 = vmul.f32 %v717, 1.442695
        %v814 = vpow.pop %v813
        %v815 = vmul.f32 %v718, 1.442695
        %v816 = vpow.pop %v815
        %v817 = vmul.f32 %v719, 1.442695
        %v818 = vpow.pop %v817
        %v819 = vmul.f32 %v720, 1.442695
        %v820 = vpow.pop %v819
        %v821 = vmul.f32 %v721, 1.442695
        %v822 = vpow.pop %v821
        %v823 = vmul.f32 %v722, 1.442695
        %v824 = vpow.pop %v823
        %v825 = vmul.f32 %v723, 1.442695
        %v826 = vpow.pop %v825
        %v827 = vmul.f32 %v724, 1.442695
        %v828 = vpow.pop %v827
        %v829 = vmul.f32 %v725, 1.442695
        %v830 = vpow.pop %v829
        %v831 = vmul.f32 %v726, 1.442695
        %v832 = vpow.pop %v831
        %v833 = vmul.f32 %v727, 1.442695
        %v834 = vpow.pop %v833
        %v835 = vmul.f32 %v728, 1.442695
        %v836 = vpow.pop %v835
        %v837 = vmul.f32 %v729, 1.442695
        %v838 = vpow.pop %v837
        %v839 = vmul.f32 %v730, 1.442695
        %v840 = vpow.pop %v839
        %v841 = vmul.f32 %v731, 1.442695
        %v842 = vpow.pop %v841
        %v843 = vmul.f32 %v732, 1.442695
        %v844 = vpow.pop %v843
        %v845 = vmul.f32 %v733, 1.442695
        %v846 = vpow.pop %v845
        %v847 = vmul.f32 %v734, 1.442695
        %v848 = vpow.pop %v847
        %v849 = vmul.f32 %v735, 1.442695
        %v850 = vpow.pop %v849
        %v851 = vmul.f32 %v736, 1.442695
        %v852 = vpow.pop %v851
        %v853 = vmul.f32 %v737, 1.442695
        %v854 = vpow.pop %v853
        %v855 = vmul.f32 %v738, 1.442695
        %v856 = vpow.pop %v855
        %v857 = vmul.f32 %v739, 1.442695
        %v858 = vpow.pop %v857
        %v859 = vmul.f32 %v740, 1.442695
        %v860 = vpow.pop %v859
        %v861 = vmul.f32 %v741, 1.442695
        %v862 = vpow.pop %v861
        %v863 = vmul.f32 %v742, 1.442695
        %v864 = vpow.pop %v863
        %v865 = vmul.f32 %v743, 1.442695
        %v866 = vpow.pop %v865
        %v867 = vmul.f32 %v744, 1.442695
        %v868 = vpow.pop %v867
        %v869 = vmul.f32 %v745, 1.442695
        %v870 = vpow.pop %v869
        %v871 = vmul.f32 %v746, 1.442695
        %v872 = vpow.pop %v871
        %v873 = vmul.f32 %v747, 1.442695
        %v874 = vpow.pop %v873
        %v875 = vmul.f32 %v748, 1.442695
        %v876 = vpow.pop %v875
        %v877 = vadd.f32 %v750, 1.0
        %v878 = vadd.f32 %v752, 1.0
        %v879 = vadd.f32 %v754, 1.0
        %v880 = vadd.f32 %v756, 1.0
        %v881 = vadd.f32 %v758, 1.0
        %v882 = vadd.f32 %v760, 1.0
        %v883 = vadd.f32 %v762, 1.0
        %v884 = vadd.f32 %v764, 1.0
        %v885 = vadd.f32 %v766, 1.0
        %v886 = vadd.f32 %v768, 1.0
        %v887 = vadd.f32 %v770, 1.0
        %v888 = vadd.f32 %v772, 1.0
        %v889 = vadd.f32 %v774, 1.0
        %v890 = vadd.f32 %v776, 1.0
        %v891 = vadd.f32 %v778, 1.0
        %v892 = vadd.f32 %v780, 1.0
        %v893 = vadd.f32 %v782, 1.0
        %v894 = vadd.f32 %v784, 1.0
        %v895 = vadd.f32 %v786, 1.0
        %v896 = vadd.f32 %v788, 1.0
        %v897 = vadd.f32 %v790, 1.0
        %v898 = vadd.f32 %v792, 1.0
        %v899 = vadd.f32 %v794, 1.0
        %v900 = vadd.f32 %v796, 1.0
        %v901 = vadd.f32 %v798, 1.0
        %v902 = vadd.f32 %v800, 1.0
        %v903 = vadd.f32 %v802, 1.0
        %v904 = vadd.f32 %v804, 1.0
        %v905 = vadd.f32 %v806, 1.0
        %v906 = vadd.f32 %v808, 1.0
        %v907 = vadd.f32 %v810, 1.0
        %v908 = vadd.f32 %v812, 1.0
        %v909 = vadd.f32 %v814, 1.0
        %v910 = vadd.f32 %v816, 1.0
        %v911 = vadd.f32 %v818, 1.0
        %v912 = vadd.f32 %v820, 1.0
        %v913 = vadd.f32 %v822, 1.0
        %v914 = vadd.f32 %v824, 1.0
        %v915 = vadd.f32 %v826, 1.0
        %v916 = vadd.f32 %v828, 1.0
        %v917 = vadd.f32 %v830, 1.0
        %v918 = vadd.f32 %v832, 1.0
        %v919 = vadd.f32 %v834, 1.0
        %v920 = vadd.f32 %v836, 1.0
        %v921 = vadd.f32 %v838, 1.0
        %v922 = vadd.f32 %v840, 1.0
        %v923 = vadd.f32 %v842, 1.0
        %v924 = vadd.f32 %v844, 1.0
        %v925 = vadd.f32 %v846, 1.0
        %v926 = vadd.f32 %v848, 1.0
        %v927 = vadd.f32 %v850, 1.0
        %v928 = vadd.f32 %v852, 1.0
        %v929 = vadd.f32 %v854, 1.0
        %v930 = vadd.f32 %v856, 1.0
        %v931 = vadd.f32 %v858, 1.0
        %v932 = vadd.f32 %v860, 1.0
        %v933 = vadd.f32 %v862, 1.0
        %v934 = vadd.f32 %v864, 1.0
        %v935 = vadd.f32 %v866, 1.0
        %v936 = vadd.f32 %v868, 1.0
        %v937 = vadd.f32 %v870, 1.0
        %v938 = vadd.f32 %v872, 1.0
        %v939 = vadd.f32 %v874, 1.0
        %v940 = vadd.f32 %v876, 1.0
        %v941 = vrcp.pop %v877
        %v942 = vmul.f32 %v877, %v941
        %v943 = vsub.f32 1.0, %v942
        %v944 = vmul.f32 %v941, %v943
        %v945 = vadd.f32 %v941, %v944
        %vm946 = vweird.f32 %v877
        %vm947 = vweird.f32 %v941
        %vm948 = vmor %vm946, %vm947
        %v949 = vsel %vm948, %v941, %v945
        %v950 = vand.u32 2147483647, %v877
        %vm951 = vcmp.eq.f32.partialorder %v950, 8.507059e+37
        %v952 = vand.u32 %v877, 2147483648
        %v953 = vor.u32 1.1754944e-38, %v952
        %v954 = vsel %vm951, %v953, %v949
        %v955 = vmul.f32 1.0, %v954
        %v956 = vrcp.pop %v878
        %v957 = vmul.f32 %v878, %v956
        %v958 = vsub.f32 1.0, %v957
        %v959 = vmul.f32 %v956, %v958
        %v960 = vadd.f32 %v956, %v959
        %vm961 = vweird.f32 %v878
        %vm962 = vweird.f32 %v956
        %vm963 = vmor %vm961, %vm962
        %v964 = vsel %vm963, %v956, %v960
        %v965 = vand.u32 2147483647, %v878
        %vm966 = vcmp.eq.f32.partialorder %v965, 8.507059e+37
        %v967 = vand.u32 %v878, 2147483648
        %v968 = vor.u32 1.1754944e-38, %v967
        %v969 = vsel %vm966, %v968, %v964
        %v970 = vmul.f32 1.0, %v969
        %v971 = vrcp.pop %v879
        %v972 = vmul.f32 %v879, %v971
        %v973 = vsub.f32 1.0, %v972
        %v974 = vmul.f32 %v971, %v973
        %v975 = vadd.f32 %v971, %v974
        %vm976 = vweird.f32 %v879
        %vm977 = vweird.f32 %v971
        %vm978 = vmor %vm976, %vm977
        %v979 = vsel %vm978, %v971, %v975
        %v980 = vand.u32 2147483647, %v879
        %vm981 = vcmp.eq.f32.partialorder %v980, 8.507059e+37
        %v982 = vand.u32 %v879, 2147483648
        %v983 = vor.u32 1.1754944e-38, %v982
        %v984 = vsel %vm981, %v983, %v979
        %v985 = vmul.f32 1.0, %v984
        %v986 = vrcp.pop %v880
        %v987 = vmul.f32 %v880, %v986
        %v988 = vsub.f32 1.0, %v987
        %v989 = vmul.f32 %v986, %v988
        %v990 = vadd.f32 %v986, %v989
        %vm991 = vweird.f32 %v880
        %vm992 = vweird.f32 %v986
        %vm993 = vmor %vm991, %vm992
        %v994 = vsel %vm993, %v986, %v990
        %v995 = vand.u32 2147483647, %v880
        %vm996 = vcmp.eq.f32.partialorder %v995, 8.507059e+37
        %v997 = vand.u32 %v880, 2147483648
        %v998 = vor.u32 1.1754944e-38, %v997
        %v999 = vsel %vm996, %v998, %v994
        %v1000 = vmul.f32 1.0, %v999
        %v1001 = vrcp.pop %v881
        %v1002 = vmul.f32 %v881, %v1001
        %v1003 = vsub.f32 1.0, %v1002
        %v1004 = vmul.f32 %v1001, %v1003
        %v1005 = vadd.f32 %v1001, %v1004
        %vm1006 = vweird.f32 %v881
        %vm1007 = vweird.f32 %v1001
        %vm1008 = vmor %vm1006, %vm1007
        %v1009 = vsel %vm1008, %v1001, %v1005
        %v1010 = vand.u32 2147483647, %v881
        %vm1011 = vcmp.eq.f32.partialorder %v1010, 8.507059e+37
        %v1012 = vand.u32 %v881, 2147483648
        %v1013 = vor.u32 1.1754944e-38, %v1012
        %v1014 = vsel %vm1011, %v1013, %v1009
        %v1015 = vmul.f32 1.0, %v1014
        %v1016 = vrcp.pop %v882
        %v1017 = vmul.f32 %v882, %v1016
        %v1018 = vsub.f32 1.0, %v1017
        %v1019 = vmul.f32 %v1016, %v1018
        %v1020 = vadd.f32 %v1016, %v1019
        %vm1021 = vweird.f32 %v882
        %vm1022 = vweird.f32 %v1016
        %vm1023 = vmor %vm1021, %vm1022
        %v1024 = vsel %vm1023, %v1016, %v1020
        %v1025 = vand.u32 2147483647, %v882
        %vm1026 = vcmp.eq.f32.partialorder %v1025, 8.507059e+37
        %v1027 = vand.u32 %v882, 2147483648
        %v1028 = vor.u32 1.1754944e-38, %v1027
        %v1029 = vsel %vm1026, %v1028, %v1024
        %v1030 = vmul.f32 1.0, %v1029
        %v1031 = vrcp.pop %v883
        %v1032 = vmul.f32 %v883, %v1031
        %v1033 = vsub.f32 1.0, %v1032
        %v1034 = vmul.f32 %v1031, %v1033
        %v1035 = vadd.f32 %v1031, %v1034
        %vm1036 = vweird.f32 %v883
        %vm1037 = vweird.f32 %v1031
        %vm1038 = vmor %vm1036, %vm1037
        %v1039 = vsel %vm1038, %v1031, %v1035
        %v1040 = vand.u32 2147483647, %v883
        %vm1041 = vcmp.eq.f32.partialorder %v1040, 8.507059e+37
        %v1042 = vand.u32 %v883, 2147483648
        %v1043 = vor.u32 1.1754944e-38, %v1042
        %v1044 = vsel %vm1041, %v1043, %v1039
        %v1045 = vmul.f32 1.0, %v1044
        %v1046 = vrcp.pop %v884
        %v1047 = vmul.f32 %v884, %v1046
        %v1048 = vsub.f32 1.0, %v1047
        %v1049 = vmul.f32 %v1046, %v1048
        %v1050 = vadd.f32 %v1046, %v1049
        %vm1051 = vweird.f32 %v884
        %vm1052 = vweird.f32 %v1046
        %vm1053 = vmor %vm1051, %vm1052
        %v1054 = vsel %vm1053, %v1046, %v1050
        %v1055 = vand.u32 2147483647, %v884
        %vm1056 = vcmp.eq.f32.partialorder %v1055, 8.507059e+37
        %v1057 = vand.u32 %v884, 2147483648
        %v1058 = vor.u32 1.1754944e-38, %v1057
        %v1059 = vsel %vm1056, %v1058, %v1054
        %v1060 = vmul.f32 1.0, %v1059
        %v1061 = vrcp.pop %v885
        %v1062 = vmul.f32 %v885, %v1061
        %v1063 = vsub.f32 1.0, %v1062
        %v1064 = vmul.f32 %v1061, %v1063
        %v1065 = vadd.f32 %v1061, %v1064
        %vm1066 = vweird.f32 %v885
        %vm1067 = vweird.f32 %v1061
        %vm1068 = vmor %vm1066, %vm1067
        %v1069 = vsel %vm1068, %v1061, %v1065
        %v1070 = vand.u32 2147483647, %v885
        %vm1071 = vcmp.eq.f32.partialorder %v1070, 8.507059e+37
        %v1072 = vand.u32 %v885, 2147483648
        %v1073 = vor.u32 1.1754944e-38, %v1072
        %v1074 = vsel %vm1071, %v1073, %v1069
        %v1075 = vmul.f32 1.0, %v1074
        %v1076 = vrcp.pop %v886
        %v1077 = vmul.f32 %v886, %v1076
        %v1078 = vsub.f32 1.0, %v1077
        %v1079 = vmul.f32 %v1076, %v1078
        %v1080 = vadd.f32 %v1076, %v1079
        %vm1081 = vweird.f32 %v886
        %vm1082 = vweird.f32 %v1076
        %vm1083 = vmor %vm1081, %vm1082
        %v1084 = vsel %vm1083, %v1076, %v1080
        %v1085 = vand.u32 2147483647, %v886
        %vm1086 = vcmp.eq.f32.partialorder %v1085, 8.507059e+37
        %v1087 = vand.u32 %v886, 2147483648
        %v1088 = vor.u32 1.1754944e-38, %v1087
        %v1089 = vsel %vm1086, %v1088, %v1084
        %v1090 = vmul.f32 1.0, %v1089
        %v1091 = vrcp.pop %v887
        %v1092 = vmul.f32 %v887, %v1091
        %v1093 = vsub.f32 1.0, %v1092
        %v1094 = vmul.f32 %v1091, %v1093
        %v1095 = vadd.f32 %v1091, %v1094
        %vm1096 = vweird.f32 %v887
        %vm1097 = vweird.f32 %v1091
        %vm1098 = vmor %vm1096, %vm1097
        %v1099 = vsel %vm1098, %v1091, %v1095
        %v1100 = vand.u32 2147483647, %v887
        %vm1101 = vcmp.eq.f32.partialorder %v1100, 8.507059e+37
        %v1102 = vand.u32 %v887, 2147483648
        %v1103 = vor.u32 1.1754944e-38, %v1102
        %v1104 = vsel %vm1101, %v1103, %v1099
        %v1105 = vmul.f32 1.0, %v1104
        %v1106 = vrcp.pop %v888
        %v1107 = vmul.f32 %v888, %v1106
        %v1108 = vsub.f32 1.0, %v1107
        %v1109 = vmul.f32 %v1106, %v1108
        %v1110 = vadd.f32 %v1106, %v1109
        %vm1111 = vweird.f32 %v888
        %vm1112 = vweird.f32 %v1106
        %vm1113 = vmor %vm1111, %vm1112
        %v1114 = vsel %vm1113, %v1106, %v1110
        %v1115 = vand.u32 2147483647, %v888
        %vm1116 = vcmp.eq.f32.partialorder %v1115, 8.507059e+37
        %v1117 = vand.u32 %v888, 2147483648
        %v1118 = vor.u32 1.1754944e-38, %v1117
        %v1119 = vsel %vm1116, %v1118, %v1114
        %v1120 = vmul.f32 1.0, %v1119
        %v1121 = vrcp.pop %v889
        %v1122 = vmul.f32 %v889, %v1121
        %v1123 = vsub.f32 1.0, %v1122
        %v1124 = vmul.f32 %v1121, %v1123
        %v1125 = vadd.f32 %v1121, %v1124
        %vm1126 = vweird.f32 %v889
        %vm1127 = vweird.f32 %v1121
        %vm1128 = vmor %vm1126, %vm1127
        %v1129 = vsel %vm1128, %v1121, %v1125
        %v1130 = vand.u32 2147483647, %v889
        %vm1131 = vcmp.eq.f32.partialorder %v1130, 8.507059e+37
        %v1132 = vand.u32 %v889, 2147483648
        %v1133 = vor.u32 1.1754944e-38, %v1132
        %v1134 = vsel %vm1131, %v1133, %v1129
        %v1135 = vmul.f32 1.0, %v1134
        %v1136 = vrcp.pop %v890
        %v1137 = vmul.f32 %v890, %v1136
        %v1138 = vsub.f32 1.0, %v1137
        %v1139 = vmul.f32 %v1136, %v1138
        %v1140 = vadd.f32 %v1136, %v1139
        %vm1141 = vweird.f32 %v890
        %vm1142 = vweird.f32 %v1136
        %vm1143 = vmor %vm1141, %vm1142
        %v1144 = vsel %vm1143, %v1136, %v1140
        %v1145 = vand.u32 2147483647, %v890
        %vm1146 = vcmp.eq.f32.partialorder %v1145, 8.507059e+37
        %v1147 = vand.u32 %v890, 2147483648
        %v1148 = vor.u32 1.1754944e-38, %v1147
        %v1149 = vsel %vm1146, %v1148, %v1144
        %v1150 = vmul.f32 1.0, %v1149
        %v1151 = vrcp.pop %v891
        %v1152 = vmul.f32 %v891, %v1151
        %v1153 = vsub.f32 1.0, %v1152
        %v1154 = vmul.f32 %v1151, %v1153
        %v1155 = vadd.f32 %v1151, %v1154
        %vm1156 = vweird.f32 %v891
        %vm1157 = vweird.f32 %v1151
        %vm1158 = vmor %vm1156, %vm1157
        %v1159 = vsel %vm1158, %v1151, %v1155
        %v1160 = vand.u32 2147483647, %v891
        %vm1161 = vcmp.eq.f32.partialorder %v1160, 8.507059e+37
        %v1162 = vand.u32 %v891, 2147483648
        %v1163 = vor.u32 1.1754944e-38, %v1162
        %v1164 = vsel %vm1161, %v1163, %v1159
        %v1165 = vmul.f32 1.0, %v1164
        %v1166 = vrcp.pop %v892
        %v1167 = vmul.f32 %v892, %v1166
        %v1168 = vsub.f32 1.0, %v1167
        %v1169 = vmul.f32 %v1166, %v1168
        %v1170 = vadd.f32 %v1166, %v1169
        %vm1171 = vweird.f32 %v892
        %vm1172 = vweird.f32 %v1166
        %vm1173 = vmor %vm1171, %vm1172
        %v1174 = vsel %vm1173, %v1166, %v1170
        %v1175 = vand.u32 2147483647, %v892
        %vm1176 = vcmp.eq.f32.partialorder %v1175, 8.507059e+37
        %v1177 = vand.u32 %v892, 2147483648
        %v1178 = vor.u32 1.1754944e-38, %v1177
        %v1179 = vsel %vm1176, %v1178, %v1174
        %v1180 = vmul.f32 1.0, %v1179
        %v1181 = vrcp.pop %v893
        %v1182 = vmul.f32 %v893, %v1181
        %v1183 = vsub.f32 1.0, %v1182
        %v1184 = vmul.f32 %v1181, %v1183
        %v1185 = vadd.f32 %v1181, %v1184
        %vm1186 = vweird.f32 %v893
        %vm1187 = vweird.f32 %v1181
        %vm1188 = vmor %vm1186, %vm1187
        %v1189 = vsel %vm1188, %v1181, %v1185
        %v1190 = vand.u32 2147483647, %v893
        %vm1191 = vcmp.eq.f32.partialorder %v1190, 8.507059e+37
        %v1192 = vand.u32 %v893, 2147483648
        %v1193 = vor.u32 1.1754944e-38, %v1192
        %v1194 = vsel %vm1191, %v1193, %v1189
        %v1195 = vmul.f32 1.0, %v1194
        %v1196 = vrcp.pop %v894
        %v1197 = vmul.f32 %v894, %v1196
        %v1198 = vsub.f32 1.0, %v1197
        %v1199 = vmul.f32 %v1196, %v1198
        %v1200 = vadd.f32 %v1196, %v1199
        %vm1201 = vweird.f32 %v894
        %vm1202 = vweird.f32 %v1196
        %vm1203 = vmor %vm1201, %vm1202
        %v1204 = vsel %vm1203, %v1196, %v1200
        %v1205 = vand.u32 2147483647, %v894
        %vm1206 = vcmp.eq.f32.partialorder %v1205, 8.507059e+37
        %v1207 = vand.u32 %v894, 2147483648
        %v1208 = vor.u32 1.1754944e-38, %v1207
        %v1209 = vsel %vm1206, %v1208, %v1204
        %v1210 = vmul.f32 1.0, %v1209
        %v1211 = vrcp.pop %v895
        %v1212 = vmul.f32 %v895, %v1211
        %v1213 = vsub.f32 1.0, %v1212
        %v1214 = vmul.f32 %v1211, %v1213
        %v1215 = vadd.f32 %v1211, %v1214
        %vm1216 = vweird.f32 %v895
        %vm1217 = vweird.f32 %v1211
        %vm1218 = vmor %vm1216, %vm1217
        %v1219 = vsel %vm1218, %v1211, %v1215
        %v1220 = vand.u32 2147483647, %v895
        %vm1221 = vcmp.eq.f32.partialorder %v1220, 8.507059e+37
        %v1222 = vand.u32 %v895, 2147483648
        %v1223 = vor.u32 1.1754944e-38, %v1222
        %v1224 = vsel %vm1221, %v1223, %v1219
        %v1225 = vmul.f32 1.0, %v1224
        %v1226 = vrcp.pop %v896
        %v1227 = vmul.f32 %v896, %v1226
        %v1228 = vsub.f32 1.0, %v1227
        %v1229 = vmul.f32 %v1226, %v1228
        %v1230 = vadd.f32 %v1226, %v1229
        %vm1231 = vweird.f32 %v896
        %vm1232 = vweird.f32 %v1226
        %vm1233 = vmor %vm1231, %vm1232
        %v1234 = vsel %vm1233, %v1226, %v1230
        %v1235 = vand.u32 2147483647, %v896
        %vm1236 = vcmp.eq.f32.partialorder %v1235, 8.507059e+37
        %v1237 = vand.u32 %v896, 2147483648
        %v1238 = vor.u32 1.1754944e-38, %v1237
        %v1239 = vsel %vm1236, %v1238, %v1234
        %v1240 = vmul.f32 1.0, %v1239
        %v1241 = vrcp.pop %v897
        %v1242 = vmul.f32 %v897, %v1241
        %v1243 = vsub.f32 1.0, %v1242
        %v1244 = vmul.f32 %v1241, %v1243
        %v1245 = vadd.f32 %v1241, %v1244
        %vm1246 = vweird.f32 %v897
        %vm1247 = vweird.f32 %v1241
        %vm1248 = vmor %vm1246, %vm1247
        %v1249 = vsel %vm1248, %v1241, %v1245
        %v1250 = vand.u32 2147483647, %v897
        %vm1251 = vcmp.eq.f32.partialorder %v1250, 8.507059e+37
        %v1252 = vand.u32 %v897, 2147483648
        %v1253 = vor.u32 1.1754944e-38, %v1252
        %v1254 = vsel %vm1251, %v1253, %v1249
        %v1255 = vmul.f32 1.0, %v1254
        %v1256 = vrcp.pop %v898
        %v1257 = vmul.f32 %v898, %v1256
        %v1258 = vsub.f32 1.0, %v1257
        %v1259 = vmul.f32 %v1256, %v1258
        %v1260 = vadd.f32 %v1256, %v1259
        %vm1261 = vweird.f32 %v898
        %vm1262 = vweird.f32 %v1256
        %vm1263 = vmor %vm1261, %vm1262
        %v1264 = vsel %vm1263, %v1256, %v1260
        %v1265 = vand.u32 2147483647, %v898
        %vm1266 = vcmp.eq.f32.partialorder %v1265, 8.507059e+37
        %v1267 = vand.u32 %v898, 2147483648
        %v1268 = vor.u32 1.1754944e-38, %v1267
        %v1269 = vsel %vm1266, %v1268, %v1264
        %v1270 = vmul.f32 1.0, %v1269
        %v1271 = vrcp.pop %v899
        %v1272 = vmul.f32 %v899, %v1271
        %v1273 = vsub.f32 1.0, %v1272
        %v1274 = vmul.f32 %v1271, %v1273
        %v1275 = vadd.f32 %v1271, %v1274
        %vm1276 = vweird.f32 %v899
        %vm1277 = vweird.f32 %v1271
        %vm1278 = vmor %vm1276, %vm1277
        %v1279 = vsel %vm1278, %v1271, %v1275
        %v1280 = vand.u32 2147483647, %v899
        %vm1281 = vcmp.eq.f32.partialorder %v1280, 8.507059e+37
        %v1282 = vand.u32 %v899, 2147483648
        %v1283 = vor.u32 1.1754944e-38, %v1282
        %v1284 = vsel %vm1281, %v1283, %v1279
        %v1285 = vmul.f32 1.0, %v1284
        %v1286 = vrcp.pop %v900
        %v1287 = vmul.f32 %v900, %v1286
        %v1288 = vsub.f32 1.0, %v1287
        %v1289 = vmul.f32 %v1286, %v1288
        %v1290 = vadd.f32 %v1286, %v1289
        %vm1291 = vweird.f32 %v900
        %vm1292 = vweird.f32 %v1286
        %vm1293 = vmor %vm1291, %vm1292
        %v1294 = vsel %vm1293, %v1286, %v1290
        %v1295 = vand.u32 2147483647, %v900
        %vm1296 = vcmp.eq.f32.partialorder %v1295, 8.507059e+37
        %v1297 = vand.u32 %v900, 2147483648
        %v1298 = vor.u32 1.1754944e-38, %v1297
        %v1299 = vsel %vm1296, %v1298, %v1294
        %v1300 = vmul.f32 1.0, %v1299
        %v1301 = vrcp.pop %v901
        %v1302 = vmul.f32 %v901, %v1301
        %v1303 = vsub.f32 1.0, %v1302
        %v1304 = vmul.f32 %v1301, %v1303
        %v1305 = vadd.f32 %v1301, %v1304
        %vm1306 = vweird.f32 %v901
        %vm1307 = vweird.f32 %v1301
        %vm1308 = vmor %vm1306, %vm1307
        %v1309 = vsel %vm1308, %v1301, %v1305
        %v1310 = vand.u32 2147483647, %v901
        %vm1311 = vcmp.eq.f32.partialorder %v1310, 8.507059e+37
        %v1312 = vand.u32 %v901, 2147483648
        %v1313 = vor.u32 1.1754944e-38, %v1312
        %v1314 = vsel %vm1311, %v1313, %v1309
        %v1315 = vmul.f32 1.0, %v1314
        %v1316 = vrcp.pop %v902
        %v1317 = vmul.f32 %v902, %v1316
        %v1318 = vsub.f32 1.0, %v1317
        %v1319 = vmul.f32 %v1316, %v1318
        %v1320 = vadd.f32 %v1316, %v1319
        %vm1321 = vweird.f32 %v902
        %vm1322 = vweird.f32 %v1316
        %vm1323 = vmor %vm1321, %vm1322
        %v1324 = vsel %vm1323, %v1316, %v1320
        %v1325 = vand.u32 2147483647, %v902
        %vm1326 = vcmp.eq.f32.partialorder %v1325, 8.507059e+37
        %v1327 = vand.u32 %v902, 2147483648
        %v1328 = vor.u32 1.1754944e-38, %v1327
        %v1329 = vsel %vm1326, %v1328, %v1324
        %v1330 = vmul.f32 1.0, %v1329
        %v1331 = vrcp.pop %v903
        %v1332 = vmul.f32 %v903, %v1331
        %v1333 = vsub.f32 1.0, %v1332
        %v1334 = vmul.f32 %v1331, %v1333
        %v1335 = vadd.f32 %v1331, %v1334
        %vm1336 = vweird.f32 %v903
        %vm1337 = vweird.f32 %v1331
        %vm1338 = vmor %vm1336, %vm1337
        %v1339 = vsel %vm1338, %v1331, %v1335
        %v1340 = vand.u32 2147483647, %v903
        %vm1341 = vcmp.eq.f32.partialorder %v1340, 8.507059e+37
        %v1342 = vand.u32 %v903, 2147483648
        %v1343 = vor.u32 1.1754944e-38, %v1342
        %v1344 = vsel %vm1341, %v1343, %v1339
        %v1345 = vmul.f32 1.0, %v1344
        %v1346 = vrcp.pop %v904
        %v1347 = vmul.f32 %v904, %v1346
        %v1348 = vsub.f32 1.0, %v1347
        %v1349 = vmul.f32 %v1346, %v1348
        %v1350 = vadd.f32 %v1346, %v1349
        %vm1351 = vweird.f32 %v904
        %vm1352 = vweird.f32 %v1346
        %vm1353 = vmor %vm1351, %vm1352
        %v1354 = vsel %vm1353, %v1346, %v1350
        %v1355 = vand.u32 2147483647, %v904
        %vm1356 = vcmp.eq.f32.partialorder %v1355, 8.507059e+37
        %v1357 = vand.u32 %v904, 2147483648
        %v1358 = vor.u32 1.1754944e-38, %v1357
        %v1359 = vsel %vm1356, %v1358, %v1354
        %v1360 = vmul.f32 1.0, %v1359
        %v1361 = vrcp.pop %v905
        %v1362 = vmul.f32 %v905, %v1361
        %v1363 = vsub.f32 1.0, %v1362
        %v1364 = vmul.f32 %v1361, %v1363
        %v1365 = vadd.f32 %v1361, %v1364
        %vm1366 = vweird.f32 %v905
        %vm1367 = vweird.f32 %v1361
        %vm1368 = vmor %vm1366, %vm1367
        %v1369 = vsel %vm1368, %v1361, %v1365
        %v1370 = vand.u32 2147483647, %v905
        %vm1371 = vcmp.eq.f32.partialorder %v1370, 8.507059e+37
        %v1372 = vand.u32 %v905, 2147483648
        %v1373 = vor.u32 1.1754944e-38, %v1372
        %v1374 = vsel %vm1371, %v1373, %v1369
        %v1375 = vmul.f32 1.0, %v1374
        %v1376 = vrcp.pop %v906
        %v1377 = vmul.f32 %v906, %v1376
        %v1378 = vsub.f32 1.0, %v1377
        %v1379 = vmul.f32 %v1376, %v1378
        %v1380 = vadd.f32 %v1376, %v1379
        %vm1381 = vweird.f32 %v906
        %vm1382 = vweird.f32 %v1376
        %vm1383 = vmor %vm1381, %vm1382
        %v1384 = vsel %vm1383, %v1376, %v1380
        %v1385 = vand.u32 2147483647, %v906
        %vm1386 = vcmp.eq.f32.partialorder %v1385, 8.507059e+37
        %v1387 = vand.u32 %v906, 2147483648
        %v1388 = vor.u32 1.1754944e-38, %v1387
        %v1389 = vsel %vm1386, %v1388, %v1384
        %v1390 = vmul.f32 1.0, %v1389
        %v1391 = vrcp.pop %v907
        %v1392 = vmul.f32 %v907, %v1391
        %v1393 = vsub.f32 1.0, %v1392
        %v1394 = vmul.f32 %v1391, %v1393
        %v1395 = vadd.f32 %v1391, %v1394
        %vm1396 = vweird.f32 %v907
        %vm1397 = vweird.f32 %v1391
        %vm1398 = vmor %vm1396, %vm1397
        %v1399 = vsel %vm1398, %v1391, %v1395
        %v1400 = vand.u32 2147483647, %v907
        %vm1401 = vcmp.eq.f32.partialorder %v1400, 8.507059e+37
        %v1402 = vand.u32 %v907, 2147483648
        %v1403 = vor.u32 1.1754944e-38, %v1402
        %v1404 = vsel %vm1401, %v1403, %v1399
        %v1405 = vmul.f32 1.0, %v1404
        %v1406 = vrcp.pop %v908
        %v1407 = vmul.f32 %v908, %v1406
        %v1408 = vsub.f32 1.0, %v1407
        %v1409 = vmul.f32 %v1406, %v1408
        %v1410 = vadd.f32 %v1406, %v1409
        %vm1411 = vweird.f32 %v908
        %vm1412 = vweird.f32 %v1406
        %vm1413 = vmor %vm1411, %vm1412
        %v1414 = vsel %vm1413, %v1406, %v1410
        %v1415 = vand.u32 2147483647, %v908
        %vm1416 = vcmp.eq.f32.partialorder %v1415, 8.507059e+37
        %v1417 = vand.u32 %v908, 2147483648
        %v1418 = vor.u32 1.1754944e-38, %v1417
        %v1419 = vsel %vm1416, %v1418, %v1414
        %v1420 = vmul.f32 1.0, %v1419
        %v1421 = vrcp.pop %v909
        %v1422 = vmul.f32 %v909, %v1421
        %v1423 = vsub.f32 1.0, %v1422
        %v1424 = vmul.f32 %v1421, %v1423
        %v1425 = vadd.f32 %v1421, %v1424
        %vm1426 = vweird.f32 %v909
        %vm1427 = vweird.f32 %v1421
        %vm1428 = vmor %vm1426, %vm1427
        %v1429 = vsel %vm1428, %v1421, %v1425
        %v1430 = vand.u32 2147483647, %v909
        %vm1431 = vcmp.eq.f32.partialorder %v1430, 8.507059e+37
        %v1432 = vand.u32 %v909, 2147483648
        %v1433 = vor.u32 1.1754944e-38, %v1432
        %v1434 = vsel %vm1431, %v1433, %v1429
        %v1435 = vmul.f32 1.0, %v1434
        %v1436 = vrcp.pop %v910
        %v1437 = vmul.f32 %v910, %v1436
        %v1438 = vsub.f32 1.0, %v1437
        %v1439 = vmul.f32 %v1436, %v1438
        %v1440 = vadd.f32 %v1436, %v1439
        %vm1441 = vweird.f32 %v910
        %vm1442 = vweird.f32 %v1436
        %vm1443 = vmor %vm1441, %vm1442
        %v1444 = vsel %vm1443, %v1436, %v1440
        %v1445 = vand.u32 2147483647, %v910
        %vm1446 = vcmp.eq.f32.partialorder %v1445, 8.507059e+37
        %v1447 = vand.u32 %v910, 2147483648
        %v1448 = vor.u32 1.1754944e-38, %v1447
        %v1449 = vsel %vm1446, %v1448, %v1444
        %v1450 = vmul.f32 1.0, %v1449
        %v1451 = vrcp.pop %v911
        %v1452 = vmul.f32 %v911, %v1451
        %v1453 = vsub.f32 1.0, %v1452
        %v1454 = vmul.f32 %v1451, %v1453
        %v1455 = vadd.f32 %v1451, %v1454
        %vm1456 = vweird.f32 %v911
        %vm1457 = vweird.f32 %v1451
        %vm1458 = vmor %vm1456, %vm1457
        %v1459 = vsel %vm1458, %v1451, %v1455
        %v1460 = vand.u32 2147483647, %v911
        %vm1461 = vcmp.eq.f32.partialorder %v1460, 8.507059e+37
        %v1462 = vand.u32 %v911, 2147483648
        %v1463 = vor.u32 1.1754944e-38, %v1462
        %v1464 = vsel %vm1461, %v1463, %v1459
        %v1465 = vmul.f32 1.0, %v1464
        %v1466 = vrcp.pop %v912
        %v1467 = vmul.f32 %v912, %v1466
        %v1468 = vsub.f32 1.0, %v1467
        %v1469 = vmul.f32 %v1466, %v1468
        %v1470 = vadd.f32 %v1466, %v1469
        %vm1471 = vweird.f32 %v912
        %vm1472 = vweird.f32 %v1466
        %vm1473 = vmor %vm1471, %vm1472
        %v1474 = vsel %vm1473, %v1466, %v1470
        %v1475 = vand.u32 2147483647, %v912
        %vm1476 = vcmp.eq.f32.partialorder %v1475, 8.507059e+37
        %v1477 = vand.u32 %v912, 2147483648
        %v1478 = vor.u32 1.1754944e-38, %v1477
        %v1479 = vsel %vm1476, %v1478, %v1474
        %v1480 = vmul.f32 1.0, %v1479
        %v1481 = vrcp.pop %v913
        %v1482 = vmul.f32 %v913, %v1481
        %v1483 = vsub.f32 1.0, %v1482
        %v1484 = vmul.f32 %v1481, %v1483
        %v1485 = vadd.f32 %v1481, %v1484
        %vm1486 = vweird.f32 %v913
        %vm1487 = vweird.f32 %v1481
        %vm1488 = vmor %vm1486, %vm1487
        %v1489 = vsel %vm1488, %v1481, %v1485
        %v1490 = vand.u32 2147483647, %v913
        %vm1491 = vcmp.eq.f32.partialorder %v1490, 8.507059e+37
        %v1492 = vand.u32 %v913, 2147483648
        %v1493 = vor.u32 1.1754944e-38, %v1492
        %v1494 = vsel %vm1491, %v1493, %v1489
        %v1495 = vmul.f32 1.0, %v1494
        %v1496 = vrcp.pop %v914
        %v1497 = vmul.f32 %v914, %v1496
        %v1498 = vsub.f32 1.0, %v1497
        %v1499 = vmul.f32 %v1496, %v1498
        %v1500 = vadd.f32 %v1496, %v1499
        %vm1501 = vweird.f32 %v914
        %vm1502 = vweird.f32 %v1496
        %vm1503 = vmor %vm1501, %vm1502
        %v1504 = vsel %vm1503, %v1496, %v1500
        %v1505 = vand.u32 2147483647, %v914
        %vm1506 = vcmp.eq.f32.partialorder %v1505, 8.507059e+37
        %v1507 = vand.u32 %v914, 2147483648
        %v1508 = vor.u32 1.1754944e-38, %v1507
        %v1509 = vsel %vm1506, %v1508, %v1504
        %v1510 = vmul.f32 1.0, %v1509
        %v1511 = vrcp.pop %v915
        %v1512 = vmul.f32 %v915, %v1511
        %v1513 = vsub.f32 1.0, %v1512
        %v1514 = vmul.f32 %v1511, %v1513
        %v1515 = vadd.f32 %v1511, %v1514
        %vm1516 = vweird.f32 %v915
        %vm1517 = vweird.f32 %v1511
        %vm1518 = vmor %vm1516, %vm1517
        %v1519 = vsel %vm1518, %v1511, %v1515
        %v1520 = vand.u32 2147483647, %v915
        %vm1521 = vcmp.eq.f32.partialorder %v1520, 8.507059e+37
        %v1522 = vand.u32 %v915, 2147483648
        %v1523 = vor.u32 1.1754944e-38, %v1522
        %v1524 = vsel %vm1521, %v1523, %v1519
        %v1525 = vmul.f32 1.0, %v1524
        %v1526 = vrcp.pop %v916
        %v1527 = vmul.f32 %v916, %v1526
        %v1528 = vsub.f32 1.0, %v1527
        %v1529 = vmul.f32 %v1526, %v1528
        %v1530 = vadd.f32 %v1526, %v1529
        %vm1531 = vweird.f32 %v916
        %vm1532 = vweird.f32 %v1526
        %vm1533 = vmor %vm1531, %vm1532
        %v1534 = vsel %vm1533, %v1526, %v1530
        %v1535 = vand.u32 2147483647, %v916
        %vm1536 = vcmp.eq.f32.partialorder %v1535, 8.507059e+37
        %v1537 = vand.u32 %v916, 2147483648
        %v1538 = vor.u32 1.1754944e-38, %v1537
        %v1539 = vsel %vm1536, %v1538, %v1534
        %v1540 = vmul.f32 1.0, %v1539
        %v1541 = vrcp.pop %v917
        %v1542 = vmul.f32 %v917, %v1541
        %v1543 = vsub.f32 1.0, %v1542
        %v1544 = vmul.f32 %v1541, %v1543
        %v1545 = vadd.f32 %v1541, %v1544
        %vm1546 = vweird.f32 %v917
        %vm1547 = vweird.f32 %v1541
        %vm1548 = vmor %vm1546, %vm1547
        %v1549 = vsel %vm1548, %v1541, %v1545
        %v1550 = vand.u32 2147483647, %v917
        %vm1551 = vcmp.eq.f32.partialorder %v1550, 8.507059e+37
        %v1552 = vand.u32 %v917, 2147483648
        %v1553 = vor.u32 1.1754944e-38, %v1552
        %v1554 = vsel %vm1551, %v1553, %v1549
        %v1555 = vmul.f32 1.0, %v1554
        %v1556 = vrcp.pop %v918
        %v1557 = vmul.f32 %v918, %v1556
        %v1558 = vsub.f32 1.0, %v1557
        %v1559 = vmul.f32 %v1556, %v1558
        %v1560 = vadd.f32 %v1556, %v1559
        %vm1561 = vweird.f32 %v918
        %vm1562 = vweird.f32 %v1556
        %vm1563 = vmor %vm1561, %vm1562
        %v1564 = vsel %vm1563, %v1556, %v1560
        %v1565 = vand.u32 2147483647, %v918
        %vm1566 = vcmp.eq.f32.partialorder %v1565, 8.507059e+37
        %v1567 = vand.u32 %v918, 2147483648
        %v1568 = vor.u32 1.1754944e-38, %v1567
        %v1569 = vsel %vm1566, %v1568, %v1564
        %v1570 = vmul.f32 1.0, %v1569
        %v1571 = vrcp.pop %v919
        %v1572 = vmul.f32 %v919, %v1571
        %v1573 = vsub.f32 1.0, %v1572
        %v1574 = vmul.f32 %v1571, %v1573
        %v1575 = vadd.f32 %v1571, %v1574
        %vm1576 = vweird.f32 %v919
        %vm1577 = vweird.f32 %v1571
        %vm1578 = vmor %vm1576, %vm1577
        %v1579 = vsel %vm1578, %v1571, %v1575
        %v1580 = vand.u32 2147483647, %v919
        %vm1581 = vcmp.eq.f32.partialorder %v1580, 8.507059e+37
        %v1582 = vand.u32 %v919, 2147483648
        %v1583 = vor.u32 1.1754944e-38, %v1582
        %v1584 = vsel %vm1581, %v1583, %v1579
        %v1585 = vmul.f32 1.0, %v1584
        %v1586 = vrcp.pop %v920
        %v1587 = vmul.f32 %v920, %v1586
        %v1588 = vsub.f32 1.0, %v1587
        %v1589 = vmul.f32 %v1586, %v1588
        %v1590 = vadd.f32 %v1586, %v1589
        %vm1591 = vweird.f32 %v920
        %vm1592 = vweird.f32 %v1586
        %vm1593 = vmor %vm1591, %vm1592
        %v1594 = vsel %vm1593, %v1586, %v1590
        %v1595 = vand.u32 2147483647, %v920
        %vm1596 = vcmp.eq.f32.partialorder %v1595, 8.507059e+37
        %v1597 = vand.u32 %v920, 2147483648
        %v1598 = vor.u32 1.1754944e-38, %v1597
        %v1599 = vsel %vm1596, %v1598, %v1594
        %v1600 = vmul.f32 1.0, %v1599
        %v1601 = vrcp.pop %v921
        %v1602 = vmul.f32 %v921, %v1601
        %v1603 = vsub.f32 1.0, %v1602
        %v1604 = vmul.f32 %v1601, %v1603
        %v1605 = vadd.f32 %v1601, %v1604
        %vm1606 = vweird.f32 %v921
        %vm1607 = vweird.f32 %v1601
        %vm1608 = vmor %vm1606, %vm1607
        %v1609 = vsel %vm1608, %v1601, %v1605
        %v1610 = vand.u32 2147483647, %v921
        %vm1611 = vcmp.eq.f32.partialorder %v1610, 8.507059e+37
        %v1612 = vand.u32 %v921, 2147483648
        %v1613 = vor.u32 1.1754944e-38, %v1612
        %v1614 = vsel %vm1611, %v1613, %v1609
        %v1615 = vmul.f32 1.0, %v1614
        %v1616 = vrcp.pop %v922
        %v1617 = vmul.f32 %v922, %v1616
        %v1618 = vsub.f32 1.0, %v1617
        %v1619 = vmul.f32 %v1616, %v1618
        %v1620 = vadd.f32 %v1616, %v1619
        %vm1621 = vweird.f32 %v922
        %vm1622 = vweird.f32 %v1616
        %vm1623 = vmor %vm1621, %vm1622
        %v1624 = vsel %vm1623, %v1616, %v1620
        %v1625 = vand.u32 2147483647, %v922
        %vm1626 = vcmp.eq.f32.partialorder %v1625, 8.507059e+37
        %v1627 = vand.u32 %v922, 2147483648
        %v1628 = vor.u32 1.1754944e-38, %v1627
        %v1629 = vsel %vm1626, %v1628, %v1624
        %v1630 = vmul.f32 1.0, %v1629
        %v1631 = vrcp.pop %v923
        %v1632 = vmul.f32 %v923, %v1631
        %v1633 = vsub.f32 1.0, %v1632
        %v1634 = vmul.f32 %v1631, %v1633
        %v1635 = vadd.f32 %v1631, %v1634
        %vm1636 = vweird.f32 %v923
        %vm1637 = vweird.f32 %v1631
        %vm1638 = vmor %vm1636, %vm1637
        %v1639 = vsel %vm1638, %v1631, %v1635
        %v1640 = vand.u32 2147483647, %v923
        %vm1641 = vcmp.eq.f32.partialorder %v1640, 8.507059e+37
        %v1642 = vand.u32 %v923, 2147483648
        %v1643 = vor.u32 1.1754944e-38, %v1642
        %v1644 = vsel %vm1641, %v1643, %v1639
        %v1645 = vmul.f32 1.0, %v1644
        %v1646 = vrcp.pop %v924
        %v1647 = vmul.f32 %v924, %v1646
        %v1648 = vsub.f32 1.0, %v1647
        %v1649 = vmul.f32 %v1646, %v1648
        %v1650 = vadd.f32 %v1646, %v1649
        %vm1651 = vweird.f32 %v924
        %vm1652 = vweird.f32 %v1646
        %vm1653 = vmor %vm1651, %vm1652
        %v1654 = vsel %vm1653, %v1646, %v1650
        %v1655 = vand.u32 2147483647, %v924
        %vm1656 = vcmp.eq.f32.partialorder %v1655, 8.507059e+37
        %v1657 = vand.u32 %v924, 2147483648
        %v1658 = vor.u32 1.1754944e-38, %v1657
        %v1659 = vsel %vm1656, %v1658, %v1654
        %v1660 = vmul.f32 1.0, %v1659
        %v1661 = vrcp.pop %v925
        %v1662 = vmul.f32 %v925, %v1661
        %v1663 = vsub.f32 1.0, %v1662
        %v1664 = vmul.f32 %v1661, %v1663
        %v1665 = vadd.f32 %v1661, %v1664
        %vm1666 = vweird.f32 %v925
        %vm1667 = vweird.f32 %v1661
        %vm1668 = vmor %vm1666, %vm1667
        %v1669 = vsel %vm1668, %v1661, %v1665
        %v1670 = vand.u32 2147483647, %v925
        %vm1671 = vcmp.eq.f32.partialorder %v1670, 8.507059e+37
        %v1672 = vand.u32 %v925, 2147483648
        %v1673 = vor.u32 1.1754944e-38, %v1672
        %v1674 = vsel %vm1671, %v1673, %v1669
        %v1675 = vmul.f32 1.0, %v1674
        %v1676 = vrcp.pop %v926
        %v1677 = vmul.f32 %v926, %v1676
        %v1678 = vsub.f32 1.0, %v1677
        %v1679 = vmul.f32 %v1676, %v1678
        %v1680 = vadd.f32 %v1676, %v1679
        %vm1681 = vweird.f32 %v926
        %vm1682 = vweird.f32 %v1676
        %vm1683 = vmor %vm1681, %vm1682
        %v1684 = vsel %vm1683, %v1676, %v1680
        %v1685 = vand.u32 2147483647, %v926
        %vm1686 = vcmp.eq.f32.partialorder %v1685, 8.507059e+37
        %v1687 = vand.u32 %v926, 2147483648
        %v1688 = vor.u32 1.1754944e-38, %v1687
        %v1689 = vsel %vm1686, %v1688, %v1684
        %v1690 = vmul.f32 1.0, %v1689
        %v1691 = vrcp.pop %v927
        %v1692 = vmul.f32 %v927, %v1691
        %v1693 = vsub.f32 1.0, %v1692
        %v1694 = vmul.f32 %v1691, %v1693
        %v1695 = vadd.f32 %v1691, %v1694
        %vm1696 = vweird.f32 %v927
        %vm1697 = vweird.f32 %v1691
        %vm1698 = vmor %vm1696, %vm1697
        %v1699 = vsel %vm1698, %v1691, %v1695
        %v1700 = vand.u32 2147483647, %v927
        %vm1701 = vcmp.eq.f32.partialorder %v1700, 8.507059e+37
        %v1702 = vand.u32 %v927, 2147483648
        %v1703 = vor.u32 1.1754944e-38, %v1702
        %v1704 = vsel %vm1701, %v1703, %v1699
        %v1705 = vmul.f32 1.0, %v1704
        %v1706 = vrcp.pop %v928
        %v1707 = vmul.f32 %v928, %v1706
        %v1708 = vsub.f32 1.0, %v1707
        %v1709 = vmul.f32 %v1706, %v1708
        %v1710 = vadd.f32 %v1706, %v1709
        %vm1711 = vweird.f32 %v928
        %vm1712 = vweird.f32 %v1706
        %vm1713 = vmor %vm1711, %vm1712
        %v1714 = vsel %vm1713, %v1706, %v1710
        %v1715 = vand.u32 2147483647, %v928
        %vm1716 = vcmp.eq.f32.partialorder %v1715, 8.507059e+37
        %v1717 = vand.u32 %v928, 2147483648
        %v1718 = vor.u32 1.1754944e-38, %v1717
        %v1719 = vsel %vm1716, %v1718, %v1714
        %v1720 = vmul.f32 1.0, %v1719
        %v1721 = vrcp.pop %v929
        %v1722 = vmul.f32 %v929, %v1721
        %v1723 = vsub.f32 1.0, %v1722
        %v1724 = vmul.f32 %v1721, %v1723
        %v1725 = vadd.f32 %v1721, %v1724
        %vm1726 = vweird.f32 %v929
        %vm1727 = vweird.f32 %v1721
        %vm1728 = vmor %vm1726, %vm1727
        %v1729 = vsel %vm1728, %v1721, %v1725
        %v1730 = vand.u32 2147483647, %v929
        %vm1731 = vcmp.eq.f32.partialorder %v1730, 8.507059e+37
        %v1732 = vand.u32 %v929, 2147483648
        %v1733 = vor.u32 1.1754944e-38, %v1732
        %v1734 = vsel %vm1731, %v1733, %v1729
        %v1735 = vmul.f32 1.0, %v1734
        %v1736 = vrcp.pop %v930
        %v1737 = vmul.f32 %v930, %v1736
        %v1738 = vsub.f32 1.0, %v1737
        %v1739 = vmul.f32 %v1736, %v1738
        %v1740 = vadd.f32 %v1736, %v1739
        %vm1741 = vweird.f32 %v930
        %vm1742 = vweird.f32 %v1736
        %vm1743 = vmor %vm1741, %vm1742
        %v1744 = vsel %vm1743, %v1736, %v1740
        %v1745 = vand.u32 2147483647, %v930
        %vm1746 = vcmp.eq.f32.partialorder %v1745, 8.507059e+37
        %v1747 = vand.u32 %v930, 2147483648
        %v1748 = vor.u32 1.1754944e-38, %v1747
        %v1749 = vsel %vm1746, %v1748, %v1744
        %v1750 = vmul.f32 1.0, %v1749
        %v1751 = vrcp.pop %v931
        %v1752 = vmul.f32 %v931, %v1751
        %v1753 = vsub.f32 1.0, %v1752
        %v1754 = vmul.f32 %v1751, %v1753
        %v1755 = vadd.f32 %v1751, %v1754
        %vm1756 = vweird.f32 %v931
        %vm1757 = vweird.f32 %v1751
        %vm1758 = vmor %vm1756, %vm1757
        %v1759 = vsel %vm1758, %v1751, %v1755
        %v1760 = vand.u32 2147483647, %v931
        %vm1761 = vcmp.eq.f32.partialorder %v1760, 8.507059e+37
        %v1762 = vand.u32 %v931, 2147483648
        %v1763 = vor.u32 1.1754944e-38, %v1762
        %v1764 = vsel %vm1761, %v1763, %v1759
        %v1765 = vmul.f32 1.0, %v1764
        %v1766 = vrcp.pop %v932
        %v1767 = vmul.f32 %v932, %v1766
        %v1768 = vsub.f32 1.0, %v1767
        %v1769 = vmul.f32 %v1766, %v1768
        %v1770 = vadd.f32 %v1766, %v1769
        %vm1771 = vweird.f32 %v932
        %vm1772 = vweird.f32 %v1766
        %vm1773 = vmor %vm1771, %vm1772
        %v1774 = vsel %vm1773, %v1766, %v1770
        %v1775 = vand.u32 2147483647, %v932
        %vm1776 = vcmp.eq.f32.partialorder %v1775, 8.507059e+37
        %v1777 = vand.u32 %v932, 2147483648
        %v1778 = vor.u32 1.1754944e-38, %v1777
        %v1779 = vsel %vm1776, %v1778, %v1774
        %v1780 = vmul.f32 1.0, %v1779
        %v1781 = vrcp.pop %v933
        %v1782 = vmul.f32 %v933, %v1781
        %v1783 = vsub.f32 1.0, %v1782
        %v1784 = vmul.f32 %v1781, %v1783
        %v1785 = vadd.f32 %v1781, %v1784
        %vm1786 = vweird.f32 %v933
        %vm1787 = vweird.f32 %v1781
        %vm1788 = vmor %vm1786, %vm1787
        %v1789 = vsel %vm1788, %v1781, %v1785
        %v1790 = vand.u32 2147483647, %v933
        %vm1791 = vcmp.eq.f32.partialorder %v1790, 8.507059e+37
        %v1792 = vand.u32 %v933, 2147483648
        %v1793 = vor.u32 1.1754944e-38, %v1792
        %v1794 = vsel %vm1791, %v1793, %v1789
        %v1795 = vmul.f32 1.0, %v1794
        %v1796 = vrcp.pop %v934
        %v1797 = vmul.f32 %v934, %v1796
        %v1798 = vsub.f32 1.0, %v1797
        %v1799 = vmul.f32 %v1796, %v1798
        %v1800 = vadd.f32 %v1796, %v1799
        %vm1801 = vweird.f32 %v934
        %vm1802 = vweird.f32 %v1796
        %vm1803 = vmor %vm1801, %vm1802
        %v1804 = vsel %vm1803, %v1796, %v1800
        %v1805 = vand.u32 2147483647, %v934
        %vm1806 = vcmp.eq.f32.partialorder %v1805, 8.507059e+37
        %v1807 = vand.u32 %v934, 2147483648
        %v1808 = vor.u32 1.1754944e-38, %v1807
        %v1809 = vsel %vm1806, %v1808, %v1804
        %v1810 = vmul.f32 1.0, %v1809
        %v1811 = vrcp.pop %v935
        %v1812 = vmul.f32 %v935, %v1811
        %v1813 = vsub.f32 1.0, %v1812
        %v1814 = vmul.f32 %v1811, %v1813
        %v1815 = vadd.f32 %v1811, %v1814
        %vm1816 = vweird.f32 %v935
        %vm1817 = vweird.f32 %v1811
        %vm1818 = vmor %vm1816, %vm1817
        %v1819 = vsel %vm1818, %v1811, %v1815
        %v1820 = vand.u32 2147483647, %v935
        %vm1821 = vcmp.eq.f32.partialorder %v1820, 8.507059e+37
        %v1822 = vand.u32 %v935, 2147483648
        %v1823 = vor.u32 1.1754944e-38, %v1822
        %v1824 = vsel %vm1821, %v1823, %v1819
        %v1825 = vmul.f32 1.0, %v1824
        %v1826 = vrcp.pop %v936
        %v1827 = vmul.f32 %v936, %v1826
        %v1828 = vsub.f32 1.0, %v1827
        %v1829 = vmul.f32 %v1826, %v1828
        %v1830 = vadd.f32 %v1826, %v1829
        %vm1831 = vweird.f32 %v936
        %vm1832 = vweird.f32 %v1826
        %vm1833 = vmor %vm1831, %vm1832
        %v1834 = vsel %vm1833, %v1826, %v1830
        %v1835 = vand.u32 2147483647, %v936
        %vm1836 = vcmp.eq.f32.partialorder %v1835, 8.507059e+37
        %v1837 = vand.u32 %v936, 2147483648
        %v1838 = vor.u32 1.1754944e-38, %v1837
        %v1839 = vsel %vm1836, %v1838, %v1834
        %v1840 = vmul.f32 1.0, %v1839
        %v1841 = vrcp.pop %v937
        %v1842 = vmul.f32 %v937, %v1841
        %v1843 = vsub.f32 1.0, %v1842
        %v1844 = vmul.f32 %v1841, %v1843
        %v1845 = vadd.f32 %v1841, %v1844
        %vm1846 = vweird.f32 %v937
        %vm1847 = vweird.f32 %v1841
        %vm1848 = vmor %vm1846, %vm1847
        %v1849 = vsel %vm1848, %v1841, %v1845
        %v1850 = vand.u32 2147483647, %v937
        %vm1851 = vcmp.eq.f32.partialorder %v1850, 8.507059e+37
        %v1852 = vand.u32 %v937, 2147483648
        %v1853 = vor.u32 1.1754944e-38, %v1852
        %v1854 = vsel %vm1851, %v1853, %v1849
        %v1855 = vmul.f32 1.0, %v1854
        %v1856 = vrcp.pop %v938
        %v1857 = vmul.f32 %v938, %v1856
        %v1858 = vsub.f32 1.0, %v1857
        %v1859 = vmul.f32 %v1856, %v1858
        %v1860 = vadd.f32 %v1856, %v1859
        %vm1861 = vweird.f32 %v938
        %vm1862 = vweird.f32 %v1856
        %vm1863 = vmor %vm1861, %vm1862
        %v1864 = vsel %vm1863, %v1856, %v1860
        %v1865 = vand.u32 2147483647, %v938
        %vm1866 = vcmp.eq.f32.partialorder %v1865, 8.507059e+37
        %v1867 = vand.u32 %v938, 2147483648
        %v1868 = vor.u32 1.1754944e-38, %v1867
        %v1869 = vsel %vm1866, %v1868, %v1864
        %v1870 = vmul.f32 1.0, %v1869
        %v1871 = vrcp.pop %v939
        %v1872 = vmul.f32 %v939, %v1871
        %v1873 = vsub.f32 1.0, %v1872
        %v1874 = vmul.f32 %v1871, %v1873
        %v1875 = vadd.f32 %v1871, %v1874
        %vm1876 = vweird.f32 %v939
        %vm1877 = vweird.f32 %v1871
        %vm1878 = vmor %vm1876, %vm1877
        %v1879 = vsel %vm1878, %v1871, %v1875
        %v1880 = vand.u32 2147483647, %v939
        %vm1881 = vcmp.eq.f32.partialorder %v1880, 8.507059e+37
        %v1882 = vand.u32 %v939, 2147483648
        %v1883 = vor.u32 1.1754944e-38, %v1882
        %v1884 = vsel %vm1881, %v1883, %v1879
        %v1885 = vmul.f32 1.0, %v1884
        %v1886 = vrcp.pop %v940
        %v1887 = vmul.f32 %v940, %v1886
        %v1888 = vsub.f32 1.0, %v1887
        %v1889 = vmul.f32 %v1886, %v1888
        %v1890 = vadd.f32 %v1886, %v1889
        %vm1891 = vweird.f32 %v940
        %vm1892 = vweird.f32 %v1886
        %vm1893 = vmor %vm1891, %vm1892
        %v1894 = vsel %vm1893, %v1886, %v1890
        %v1895 = vand.u32 2147483647, %v940
        %vm1896 = vcmp.eq.f32.partialorder %v1895, 8.507059e+37
        %v1897 = vand.u32 %v940, 2147483648
        %v1898 = vor.u32 1.1754944e-38, %v1897
        %v1899 = vsel %vm1896, %v1898, %v1894
        %v1900 = vmul.f32 1.0, %v1899
        %vm1901 = vcmask 130048
        %1902 = vst.msk [vmem:[%s172] sm:$0xff] %vm1901, %v955
        %1903 = vst.msk [vmem:[%s172 + $0x8] sm:$0xff] %vm1901, %v970
        %1904 = vst.msk [vmem:[%s172 + $0x10] sm:$0xff] %vm1901, %v985
        %1905 = vst.msk [vmem:[%s172 + $0x18] sm:$0xff] %vm1901, %v1000
        %1906 = vst.msk [vmem:[%s172 + $0x20] sm:$0xff] %vm1901, %v1015
        %1907 = vst.msk [vmem:[%s172 + $0x28] sm:$0xff] %vm1901, %v1030
        %1908 = vst.msk [vmem:[%s172 + $0x30] sm:$0xff] %vm1901, %v1045
        %1909 = vst.msk [vmem:[%s172 + $0x38] sm:$0xff] %vm1901, %v1060
        %1910 = vst.msk [vmem:[%s172 + $0x40] sm:$0xff] %vm1901, %v1075
        %1911 = vst.msk [vmem:[%s172 + $0x48] sm:$0xff] %vm1901, %v1090
        %1912 = vst.msk [vmem:[%s172 + $0x50] sm:$0xff] %vm1901, %v1105
        %1913 = vst.msk [vmem:[%s172 + $0x58] sm:$0xff] %vm1901, %v1120
        %1914 = vst.msk [vmem:[%s172 + $0x60] sm:$0xff] %vm1901, %v1135
        %1915 = vst.msk [vmem:[%s172 + $0x68] sm:$0xff] %vm1901, %v1150
        %1916 = vst.msk [vmem:[%s172 + $0x70] sm:$0xff] %vm1901, %v1165
        %1917 = vst.msk [vmem:[%s172 + $0x78] sm:$0xff] %vm1901, %v1180
        %1918 = vst.msk [vmem:[%s172 + $0x80] sm:$0xff] %vm1901, %v1195
        %1919 = vst.msk [vmem:[%s172 + $0x88] sm:$0xff] %vm1901, %v1210
        %1920 = vst.msk [vmem:[%s172 + $0x90] sm:$0xff] %vm1901, %v1225
        %1921 = vst.msk [vmem:[%s172 + $0x98] sm:$0xff] %vm1901, %v1240
        %1922 = vst.msk [vmem:[%s172 + $0xa0] sm:$0xff] %vm1901, %v1255
        %1923 = vst.msk [vmem:[%s172 + $0xa8] sm:$0xff] %vm1901, %v1270
        %1924 = vst.msk [vmem:[%s172 + $0xb0] sm:$0xff] %vm1901, %v1285
        %1925 = vst.msk [vmem:[%s172 + $0xb8] sm:$0xff] %vm1901, %v1300
        %1926 = vst.msk [vmem:[%s172 + $0xc0] sm:$0xff] %vm1901, %v1315
        %1927 = vst.msk [vmem:[%s172 + $0xc8] sm:$0xff] %vm1901, %v1330
        %1928 = vst.msk [vmem:[%s172 + $0xd0] sm:$0xff] %vm1901, %v1345
        %1929 = vst.msk [vmem:[%s172 + $0xd8] sm:$0xff] %vm1901, %v1360
        %1930 = vst.msk [vmem:[%s172 + $0xe0] sm:$0xff] %vm1901, %v1375
        %1931 = vst.msk [vmem:[%s172 + $0xe8] sm:$0xff] %vm1901, %v1390
        %1932 = vst.msk [vmem:[%s172 + $0xf0] sm:$0xff] %vm1901, %v1405
        %1933 = vst.msk [vmem:[%s172 + $0xf8] sm:$0xff] %vm1901, %v1420
        %1934 = vst.msk [vmem:[%s172 + $0x100] sm:$0xff] %vm1901, %v1435
        %1935 = vst.msk [vmem:[%s172 + $0x108] sm:$0xff] %vm1901, %v1450
        %1936 = vst.msk [vmem:[%s172 + $0x110] sm:$0xff] %vm1901, %v1465
        %1937 = vst.msk [vmem:[%s172 + $0x118] sm:$0xff] %vm1901, %v1480
        %1938 = vst.msk [vmem:[%s172 + $0x120] sm:$0xff] %vm1901, %v1495
        %1939 = vst.msk [vmem:[%s172 + $0x128] sm:$0xff] %vm1901, %v1510
        %1940 = vst.msk [vmem:[%s172 + $0x130] sm:$0xff] %vm1901, %v1525
        %1941 = vst.msk [vmem:[%s172 + $0x138] sm:$0xff] %vm1901, %v1540
        %1942 = vst.msk [vmem:[%s172 + $0x140] sm:$0xff] %vm1901, %v1555
        %1943 = vst.msk [vmem:[%s172 + $0x148] sm:$0xff] %vm1901, %v1570
        %1944 = vst.msk [vmem:[%s172 + $0x150] sm:$0xff] %vm1901, %v1585
        %1945 = vst.msk [vmem:[%s172 + $0x158] sm:$0xff] %vm1901, %v1600
        %1946 = vst.msk [vmem:[%s172 + $0x160] sm:$0xff] %vm1901, %v1615
        %1947 = vst.msk [vmem:[%s172 + $0x168] sm:$0xff] %vm1901, %v1630
        %1948 = vst.msk [vmem:[%s172 + $0x170] sm:$0xff] %vm1901, %v1645
        %1949 = vst.msk [vmem:[%s172 + $0x178] sm:$0xff] %vm1901, %v1660
        %1950 = vst.msk [vmem:[%s172 + $0x180] sm:$0xff] %vm1901, %v1675
        %1951 = vst.msk [vmem:[%s172 + $0x188] sm:$0xff] %vm1901, %v1690
        %1952 = vst.msk [vmem:[%s172 + $0x190] sm:$0xff] %vm1901, %v1705
        %1953 = vst.msk [vmem:[%s172 + $0x198] sm:$0xff] %vm1901, %v1720
        %1954 = vst.msk [vmem:[%s172 + $0x1a0] sm:$0xff] %vm1901, %v1735
        %1955 = vst.msk [vmem:[%s172 + $0x1a8] sm:$0xff] %vm1901, %v1750
        %1956 = vst.msk [vmem:[%s172 + $0x1b0] sm:$0xff] %vm1901, %v1765
        %1957 = vst.msk [vmem:[%s172 + $0x1b8] sm:$0xff] %vm1901, %v1780
        %1958 = vst.msk [vmem:[%s172 + $0x1c0] sm:$0xff] %vm1901, %v1795
        %1959 = vst.msk [vmem:[%s172 + $0x1c8] sm:$0xff] %vm1901, %v1810
        %1960 = vst.msk [vmem:[%s172 + $0x1d0] sm:$0xff] %vm1901, %v1825
        %1961 = vst.msk [vmem:[%s172 + $0x1d8] sm:$0xff] %vm1901, %v1840
        %1962 = vst.msk [vmem:[%s172 + $0x1e0] sm:$0xff] %vm1901, %v1855
        %1963 = vst.msk [vmem:[%s172 + $0x1e8] sm:$0xff] %vm1901, %v1870
        %1964 = vst.msk [vmem:[%s172 + $0x1f0] sm:$0xff] %vm1901, %v1885
        %1965 = vst.msk [vmem:[%s172 + $0x1f8] sm:$0xff] %vm1901, %v1900
        %s1966 = sand.u32 %s90, 1
        %s1967 = sand.u32 %s90, 1
        %s1968 = smul.addr %s1967, 512
        %s1969 = scalar_lea.vmem [#allocation2], %s1968
        // Predicated region
        $region33: #{decoder_forward.9} parent=31 // pred_check
          %p1970 = pneg %p100
        $region34: #{decoder_forward.9} parent=31 // pred_check_branch
          %1972 = sbr.rel (%p1970) target = $region36
        $region35: #{decoder_forward.9} parent=31 // pred_region
          %s1973 = smul.u32 64, %s14
          %s1974 = ssub.s32 203, %s1973
          %p1975 = scmp.lt.s32.totalorder %s1974, 64
          %s1976 = scalar_select %p1975, %s1974, 64
          %s1977 = smul.u32 8, %s1976
          %p1978 = scmp.ne.s32.totalorder 0, %s1977
          %s1979 = smul.addr %s1973, 8
          %s1980 = scalar_lea.vmem %s3, %s1979
          // Predicated region
          $region37: #{decoder_forward.9} parent=35 // pred_check
            %p1981 = pneg %p1978
          $region38: #{decoder_forward.9} parent=35 // pred_check_branch
            %1983 = sbr.rel (%p1981) target = $region40
          $region39: #{decoder_forward.9} parent=35 // pred_region
            // Predicated region
            $region41: #{decoder_forward.9} parent=39 // pred_check
              _
            $region42: #{decoder_forward.9} parent=39 // pred_check_branch
              %1985 = sbr.rel (0) target = $region44
            $region43: #{decoder_forward.9} parent=39 // pred_region
              // Predicated region
              $region63: #{decoder_forward.9} parent=43 // pred_check
                _
              $region64: #{decoder_forward.9} parent=43 // pred_check_branch
                %2097 = sbr.rel (0) target = $region66
              $region65: #{decoder_forward.9} parent=43 // pred_region
                %s2098 = sshrl.u32 %s1976, 5
                // While loop
                $region67: #{decoder_forward.9} parent=65 // loop_pre_header
                  _
                $region68: #{decoder_forward.9} parent=65 // loop_header
                  %s2100 = sphi 0, %s2102
                  %p2101 = scmp.ge.s32.totalorder %s2100, %s2098
                  %s2105 = sphi 0, %s2174
                  %s2106 = sphi %s1969, %s2177
                  %s2107 = sphi %s1980, %s2178
                $region69: #{decoder_forward.9} parent=65 // loop_header_branch
                  %2104 = sbr.rel (%p2101) target = $region73
                $region70: #{decoder_forward.9} parent=65 // loop_body
                  %v2108 = vld [vmem:[%s2106] sm:$0xff]
                  %2109 = vst [vmem:[%s2107] sm:$0xff] %v2108
                  %v2110 = vld [vmem:[%s2106 + $0x8] sm:$0xff]
                  %2111 = vst [vmem:[%s2107 + $0x8] sm:$0xff] %v2110
                  %v2112 = vld [vmem:[%s2106 + $0x10] sm:$0xff]
                  %2113 = vst [vmem:[%s2107 + $0x10] sm:$0xff] %v2112
                  %v2114 = vld [vmem:[%s2106 + $0x18] sm:$0xff]
                  %2115 = vst [vmem:[%s2107 + $0x18] sm:$0xff] %v2114
                  %v2116 = vld [vmem:[%s2106 + $0x20] sm:$0xff]
                  %2117 = vst [vmem:[%s2107 + $0x20] sm:$0xff] %v2116
                  %v2118 = vld [vmem:[%s2106 + $0x28] sm:$0xff]
                  %2119 = vst [vmem:[%s2107 + $0x28] sm:$0xff] %v2118
                  %v2120 = vld [vmem:[%s2106 + $0x30] sm:$0xff]
                  %2121 = vst [vmem:[%s2107 + $0x30] sm:$0xff] %v2120
                  %v2122 = vld [vmem:[%s2106 + $0x38] sm:$0xff]
                  %2123 = vst [vmem:[%s2107 + $0x38] sm:$0xff] %v2122
                  %v2124 = vld [vmem:[%s2106 + $0x40] sm:$0xff]
                  %2125 = vst [vmem:[%s2107 + $0x40] sm:$0xff] %v2124
                  %v2126 = vld [vmem:[%s2106 + $0x48] sm:$0xff]
                  %2127 = vst [vmem:[%s2107 + $0x48] sm:$0xff] %v2126
                  %v2128 = vld [vmem:[%s2106 + $0x50] sm:$0xff]
                  %2129 = vst [vmem:[%s2107 + $0x50] sm:$0xff] %v2128
                  %v2130 = vld [vmem:[%s2106 + $0x58] sm:$0xff]
                  %2131 = vst [vmem:[%s2107 + $0x58] sm:$0xff] %v2130
                  %v2132 = vld [vmem:[%s2106 + $0x60] sm:$0xff]
                  %2133 = vst [vmem:[%s2107 + $0x60] sm:$0xff] %v2132
                  %v2134 = vld [vmem:[%s2106 + $0x68] sm:$0xff]
                  %2135 = vst [vmem:[%s2107 + $0x68] sm:$0xff] %v2134
                  %v2136 = vld [vmem:[%s2106 + $0x70] sm:$0xff]
                  %2137 = vst [vmem:[%s2107 + $0x70] sm:$0xff] %v2136
                  %v2138 = vld [vmem:[%s2106 + $0x78] sm:$0xff]
                  %2139 = vst [vmem:[%s2107 + $0x78] sm:$0xff] %v2138
                  %v2140 = vld [vmem:[%s2106 + $0x80] sm:$0xff]
                  %2141 = vst [vmem:[%s2107 + $0x80] sm:$0xff] %v2140
                  %v2142 = vld [vmem:[%s2106 + $0x88] sm:$0xff]
                  %2143 = vst [vmem:[%s2107 + $0x88] sm:$0xff] %v2142
                  %v2144 = vld [vmem:[%s2106 + $0x90] sm:$0xff]
                  %2145 = vst [vmem:[%s2107 + $0x90] sm:$0xff] %v2144
                  %v2146 = vld [vmem:[%s2106 + $0x98] sm:$0xff]
                  %2147 = vst [vmem:[%s2107 + $0x98] sm:$0xff] %v2146
                  %v2148 = vld [vmem:[%s2106 + $0xa0] sm:$0xff]
                  %2149 = vst [vmem:[%s2107 + $0xa0] sm:$0xff] %v2148
                  %v2150 = vld [vmem:[%s2106 + $0xa8] sm:$0xff]
                  %2151 = vst [vmem:[%s2107 + $0xa8] sm:$0xff] %v2150
                  %v2152 = vld [vmem:[%s2106 + $0xb0] sm:$0xff]
                  %2153 = vst [vmem:[%s2107 + $0xb0] sm:$0xff] %v2152
                  %v2154 = vld [vmem:[%s2106 + $0xb8] sm:$0xff]
                  %2155 = vst [vmem:[%s2107 + $0xb8] sm:$0xff] %v2154
                  %v2156 = vld [vmem:[%s2106 + $0xc0] sm:$0xff]
                  %2157 = vst [vmem:[%s2107 + $0xc0] sm:$0xff] %v2156
                  %v2158 = vld [vmem:[%s2106 + $0xc8] sm:$0xff]
                  %2159 = vst [vmem:[%s2107 + $0xc8] sm:$0xff] %v2158
                  %v2160 = vld [vmem:[%s2106 + $0xd0] sm:$0xff]
                  %2161 = vst [vmem:[%s2107 + $0xd0] sm:$0xff] %v2160
                  %v2162 = vld [vmem:[%s2106 + $0xd8] sm:$0xff]
                  %2163 = vst [vmem:[%s2107 + $0xd8] sm:$0xff] %v2162
                  %v2164 = vld [vmem:[%s2106 + $0xe0] sm:$0xff]
                  %2165 = vst [vmem:[%s2107 + $0xe0] sm:$0xff] %v2164
                  %v2166 = vld [vmem:[%s2106 + $0xe8] sm:$0xff]
                  %2167 = vst [vmem:[%s2107 + $0xe8] sm:$0xff] %v2166
                  %v2168 = vld [vmem:[%s2106 + $0xf0] sm:$0xff]
                  %2169 = vst [vmem:[%s2107 + $0xf0] sm:$0xff] %v2168
                  %v2170 = vld [vmem:[%s2106 + $0xf8] sm:$0xff]
                  %2171 = vst [vmem:[%s2107 + $0xf8] sm:$0xff] %v2170
                  %s2172 = sadd.s32 1, %s2105
                  %p2173 = scmp.ge.s32.totalorder %s2172, %s2098
                  %s2174 = scalar_select %p2173, 0, %s2172
                  %s2175 = smul.u32 %s2174, 256
                  %s2176 = smul.u32 %s2174, 256
                  %s2177 = scalar_lea.vmem %s1969, %s2175 [#allocation2]
                  %s2178 = scalar_lea.vmem %s1980, %s2176
                $region71: #{decoder_forward.9} parent=65 // loop_footer
                  %s2102 = sadd.s32 %s2100, 1
                $region72: #{decoder_forward.9} parent=65 // loop_footer_branch
                  %2099 = sbr.rel target = $region68
                $region73: #{decoder_forward.9} parent=65 // loop_exit
                  _
                %s2179 = sshrl.u32 %s1976, 5
                %s2180 = sand.u32 %s1976, 31
                %s2181 = smul.u32 %s2179, 32
                %s2182 = smul.u32 8, %s2181
                %s2183 = scalar_lea.vmem %s1969, %s2182 [#allocation2]
                %s2184 = smul.u32 8, %s2181
                %s2185 = scalar_lea.vmem %s1980, %s2184
                // While loop
                $region74: #{decoder_forward.9} parent=65 // loop_pre_header
                  _
                $region75: #{decoder_forward.9} parent=65 // loop_header
                  %s2187 = sphi 0, %s2189
                  %p2188 = scmp.ge.s32.totalorder %s2187, %s2180
                  %s2192 = sphi 0, %s2199
                  %s2193 = sphi %s2183, %s2202
                  %s2194 = sphi %s2185, %s2203
                $region76: #{decoder_forward.9} parent=65 // loop_header_branch
                  %2191 = sbr.rel (%p2188) target = $region80
                $region77: #{decoder_forward.9} parent=65 // loop_body
                  %v2195 = vld [vmem:[%s2193] sm:$0xff]
                  %2196 = vst [vmem:[%s2194] sm:$0xff] %v2195
                  %s2197 = sadd.s32 1, %s2192
                  %p2198 = scmp.ge.s32.totalorder %s2197, %s2180
                  %s2199 = scalar_select %p2198, 0, %s2197
                  %s2200 = smul.u32 %s2199, 8
                  %s2201 = smul.u32 %s2199, 8
                  %s2202 = scalar_lea.vmem %s2183, %s2200 [#allocation2]
                  %s2203 = scalar_lea.vmem %s2185, %s2201
                $region78: #{decoder_forward.9} parent=65 // loop_footer
                  %s2189 = sadd.s32 %s2187, 1
                $region79: #{decoder_forward.9} parent=65 // loop_footer_branch
                  %2186 = sbr.rel target = $region75
                $region80: #{decoder_forward.9} parent=65 // loop_exit
                  _
              $region66: #{decoder_forward.9} parent=43 // pred_fallthru
                _
              // Predicated region
              $region81: #{decoder_forward.9} parent=43 // pred_check
                _
              $region82: #{decoder_forward.9} parent=43 // pred_check_branch
                %2205 = sbr.rel target = $region84
              $region83: #{decoder_forward.9} parent=43 // pred_region
                _
              $region84: #{decoder_forward.9} parent=43 // pred_fallthru
                _
            $region44: #{decoder_forward.9} parent=39 // pred_fallthru
              _
            // Predicated region
            $region45: #{decoder_forward.9} parent=39 // pred_check
              _
            $region46: #{decoder_forward.9} parent=39 // pred_check_branch
              %1987 = sbr.rel target = $region48
            $region47: #{decoder_forward.9} parent=39 // pred_region
              %s1989 = ssub.s32 256, 1
              %s1990 = sshrl.u32 %s1976, 5
              // While loop
              $region49: #{decoder_forward.9} parent=47 // loop_pre_header
                _
              $region50: #{decoder_forward.9} parent=47 // loop_header
                %s1992 = sphi 0, %s1994
                %p1993 = scmp.ge.s32.totalorder %s1992, %s1990
                %s1997 = sphi 0, %s2066
                %s1998 = sphi %s1969, %s2069
                %s1999 = sphi %s1980, %s2070
              $region51: #{decoder_forward.9} parent=47 // loop_header_branch
                %1996 = sbr.rel (%p1993) target = $region55
              $region52: #{decoder_forward.9} parent=47 // loop_body
                %v2000 = vld [vmem:[%s1998] sm:%s1989]
                %2001 = vst [vmem:[%s1999] sm:%s1989] %v2000
                %v2002 = vld [vmem:[%s1998 + $0x8] sm:%s1989]
                %2003 = vst [vmem:[%s1999 + $0x8] sm:%s1989] %v2002
                %v2004 = vld [vmem:[%s1998 + $0x10] sm:%s1989]
                %2005 = vst [vmem:[%s1999 + $0x10] sm:%s1989] %v2004
                %v2006 = vld [vmem:[%s1998 + $0x18] sm:%s1989]
                %2007 = vst [vmem:[%s1999 + $0x18] sm:%s1989] %v2006
                %v2008 = vld [vmem:[%s1998 + $0x20] sm:%s1989]
                %2009 = vst [vmem:[%s1999 + $0x20] sm:%s1989] %v2008
                %v2010 = vld [vmem:[%s1998 + $0x28] sm:%s1989]
                %2011 = vst [vmem:[%s1999 + $0x28] sm:%s1989] %v2010
                %v2012 = vld [vmem:[%s1998 + $0x30] sm:%s1989]
                %2013 = vst [vmem:[%s1999 + $0x30] sm:%s1989] %v2012
                %v2014 = vld [vmem:[%s1998 + $0x38] sm:%s1989]
                %2015 = vst [vmem:[%s1999 + $0x38] sm:%s1989] %v2014
                %v2016 = vld [vmem:[%s1998 + $0x40] sm:%s1989]
                %2017 = vst [vmem:[%s1999 + $0x40] sm:%s1989] %v2016
                %v2018 = vld [vmem:[%s1998 + $0x48] sm:%s1989]
                %2019 = vst [vmem:[%s1999 + $0x48] sm:%s1989] %v2018
                %v2020 = vld [vmem:[%s1998 + $0x50] sm:%s1989]
                %2021 = vst [vmem:[%s1999 + $0x50] sm:%s1989] %v2020
                %v2022 = vld [vmem:[%s1998 + $0x58] sm:%s1989]
                %2023 = vst [vmem:[%s1999 + $0x58] sm:%s1989] %v2022
                %v2024 = vld [vmem:[%s1998 + $0x60] sm:%s1989]
                %2025 = vst [vmem:[%s1999 + $0x60] sm:%s1989] %v2024
                %v2026 = vld [vmem:[%s1998 + $0x68] sm:%s1989]
                %2027 = vst [vmem:[%s1999 + $0x68] sm:%s1989] %v2026
                %v2028 = vld [vmem:[%s1998 + $0x70] sm:%s1989]
                %2029 = vst [vmem:[%s1999 + $0x70] sm:%s1989] %v2028
                %v2030 = vld [vmem:[%s1998 + $0x78] sm:%s1989]
                %2031 = vst [vmem:[%s1999 + $0x78] sm:%s1989] %v2030
                %v2032 = vld [vmem:[%s1998 + $0x80] sm:%s1989]
                %2033 = vst [vmem:[%s1999 + $0x80] sm:%s1989] %v2032
                %v2034 = vld [vmem:[%s1998 + $0x88] sm:%s1989]
                %2035 = vst [vmem:[%s1999 + $0x88] sm:%s1989] %v2034
                %v2036 = vld [vmem:[%s1998 + $0x90] sm:%s1989]
                %2037 = vst [vmem:[%s1999 + $0x90] sm:%s1989] %v2036
                %v2038 = vld [vmem:[%s1998 + $0x98] sm:%s1989]
                %2039 = vst [vmem:[%s1999 + $0x98] sm:%s1989] %v2038
                %v2040 = vld [vmem:[%s1998 + $0xa0] sm:%s1989]
                %2041 = vst [vmem:[%s1999 + $0xa0] sm:%s1989] %v2040
                %v2042 = vld [vmem:[%s1998 + $0xa8] sm:%s1989]
                %2043 = vst [vmem:[%s1999 + $0xa8] sm:%s1989] %v2042
                %v2044 = vld [vmem:[%s1998 + $0xb0] sm:%s1989]
                %2045 = vst [vmem:[%s1999 + $0xb0] sm:%s1989] %v2044
                %v2046 = vld [vmem:[%s1998 + $0xb8] sm:%s1989]
                %2047 = vst [vmem:[%s1999 + $0xb8] sm:%s1989] %v2046
                %v2048 = vld [vmem:[%s1998 + $0xc0] sm:%s1989]
                %2049 = vst [vmem:[%s1999 + $0xc0] sm:%s1989] %v2048
                %v2050 = vld [vmem:[%s1998 + $0xc8] sm:%s1989]
                %2051 = vst [vmem:[%s1999 + $0xc8] sm:%s1989] %v2050
                %v2052 = vld [vmem:[%s1998 + $0xd0] sm:%s1989]
                %2053 = vst [vmem:[%s1999 + $0xd0] sm:%s1989] %v2052
                %v2054 = vld [vmem:[%s1998 + $0xd8] sm:%s1989]
                %2055 = vst [vmem:[%s1999 + $0xd8] sm:%s1989] %v2054
                %v2056 = vld [vmem:[%s1998 + $0xe0] sm:%s1989]
                %2057 = vst [vmem:[%s1999 + $0xe0] sm:%s1989] %v2056
                %v2058 = vld [vmem:[%s1998 + $0xe8] sm:%s1989]
                %2059 = vst [vmem:[%s1999 + $0xe8] sm:%s1989] %v2058
                %v2060 = vld [vmem:[%s1998 + $0xf0] sm:%s1989]
                %2061 = vst [vmem:[%s1999 + $0xf0] sm:%s1989] %v2060
                %v2062 = vld [vmem:[%s1998 + $0xf8] sm:%s1989]
                %2063 = vst [vmem:[%s1999 + $0xf8] sm:%s1989] %v2062
                %s2064 = sadd.s32 1, %s1997
                %p2065 = scmp.ge.s32.totalorder %s2064, %s1990
                %s2066 = scalar_select %p2065, 0, %s2064
                %s2067 = smul.u32 %s2066, 256
                %s2068 = smul.u32 %s2066, 256
                %s2069 = scalar_lea.vmem %s1969, %s2067 [#allocation2]
                %s2070 = scalar_lea.vmem %s1980, %s2068
              $region53: #{decoder_forward.9} parent=47 // loop_footer
                %s1994 = sadd.s32 %s1992, 1
              $region54: #{decoder_forward.9} parent=47 // loop_footer_branch
                %1991 = sbr.rel target = $region50
              $region55: #{decoder_forward.9} parent=47 // loop_exit
                _
              %s2071 = sshrl.u32 %s1976, 5
              %s2072 = sand.u32 %s1976, 31
              %s2073 = smul.u32 %s2071, 32
              %s2074 = smul.u32 8, %s2073
              %s2075 = scalar_lea.vmem %s1969, %s2074 [#allocation2]
              %s2076 = smul.u32 8, %s2073
              %s2077 = scalar_lea.vmem %s1980, %s2076
              // While loop
              $region56: #{decoder_forward.9} parent=47 // loop_pre_header
                _
              $region57: #{decoder_forward.9} parent=47 // loop_header
                %s2079 = sphi 0, %s2081
                %p2080 = scmp.ge.s32.totalorder %s2079, %s2072
                %s2084 = sphi 0, %s2091
                %s2085 = sphi %s2075, %s2094
                %s2086 = sphi %s2077, %s2095
              $region58: #{decoder_forward.9} parent=47 // loop_header_branch
                %2083 = sbr.rel (%p2080) target = $region62
              $region59: #{decoder_forward.9} parent=47 // loop_body
                %v2087 = vld [vmem:[%s2085] sm:%s1989]
                %2088 = vst [vmem:[%s2086] sm:%s1989] %v2087
                %s2089 = sadd.s32 1, %s2084
                %p2090 = scmp.ge.s32.totalorder %s2089, %s2072
                %s2091 = scalar_select %p2090, 0, %s2089
                %s2092 = smul.u32 %s2091, 8
                %s2093 = smul.u32 %s2091, 8
                %s2094 = scalar_lea.vmem %s2075, %s2092 [#allocation2]
                %s2095 = scalar_lea.vmem %s2077, %s2093
              $region60: #{decoder_forward.9} parent=47 // loop_footer
                %s2081 = sadd.s32 %s2079, 1
              $region61: #{decoder_forward.9} parent=47 // loop_footer_branch
                %2078 = sbr.rel target = $region57
              $region62: #{decoder_forward.9} parent=47 // loop_exit
                _
            $region48: #{decoder_forward.9} parent=39 // pred_fallthru
              _
          $region40: #{decoder_forward.9} parent=35 // pred_fallthru
            _
          %2206 = vnop
        $region36: #{decoder_forward.9} parent=31 // pred_fallthru
          _
      $region32: #{decoder_forward.9} parent=5 // pred_fallthru
        _
      %p2207 = scmp.le.s32.totalorder 2, %s9
      // Predicated region
      $region85: #{decoder_forward.9} parent=5 // pred_check
        %p2208 = pneg %p2207
      $region86: #{decoder_forward.9} parent=5 // pred_check_branch
        %2210 = sbr.rel (%p2208) target = $region88
      $region87: #{decoder_forward.9} parent=5 // pred_region
        %s2211 = ssub.s32 %s9, 2
        // Predicated region
        $region89: #{decoder_forward.9} parent=87 // pred_check
          %p2212 = pneg %p106
        $region90: #{decoder_forward.9} parent=87 // pred_check_branch
          %2214 = sbr.rel (%p2212) target = $region92
        $region91: #{decoder_forward.9} parent=87 // pred_region
          %s2215 = sand.u32 %s91, 1
          %s2216 = sand.u32 %s91, 1
          %s2217 = smul.addr %s2216, 512
          %s2218 = scalar_lea.vmem [#allocation2], %s2217
        $region92: #{decoder_forward.9} parent=87 // pred_fallthru
          _
      $region88: #{decoder_forward.9} parent=5 // pred_fallthru
        _
    $region6: #{decoder_forward.9} parent=1 // loop_footer
      %s13 = sadd.s32 1, %s9
    $region7: #{decoder_forward.9} parent=1 // loop_footer_branch
      %8 = sbr.rel target = $region3
    $region8: #{decoder_forward.9} parent=1 // loop_exit
      _

</llo_original>
